<compile_context>
chip_gen: v7x
topology: tpu7x:2x2x1
jax: 0.10.0
libtpu: 0.0.40
codegen_flags: <defaults>
</compile_context>

<pallas_src>
import functools

import jax
import jax.numpy as jnp
from jax.experimental import pallas as pl
from jax.experimental.pallas import tpu as pltpu


def _conv_bn_mish_kernel(x_ref, w_ref, b_ref, o_ref, acc_ref, *,
                         TH, W_out, KH, KW, C_in, C_out):
    """One (batch, output-row-tile) per grid step.

    x_ref:   (1, Hp, Wp, C_in)     zero-padded NHWC image (bf16), VMEM-resident across row tiles
    w_ref:   (KH*KW, C_out, C_in)  per-tap conv weights with the BN scale folded in (bf16)
    b_ref:   (C_out, 1)            folded BN bias (f32)
    o_ref:   (1, C_out, TH*W_out)  output tile: channels-major, lane-dense spatial dim (bf16)
    acc_ref: (C_out, TH*W_out)     f32 VMEM accumulator scratch
    """
    t = pl.program_id(1)
    row0 = pl.multiple_of(t * TH, TH)
    M = TH * W_out

    # Start the accumulator from the folded BatchNorm bias (broadcast over output positions).
    acc_ref[...] = jnp.broadcast_to(b_ref[...], (C_out, M))

    # KH*KW tap matmuls: acc[o, m] += sum_c W'[o, c, kh, kw] * x[row+kh, col+kw, c]
    # TODO(synk): for large C_in a fused big-K im2col matmul would fill the MXU better; with
    # small channel counts the per-tap form avoids the lane-interleaving relayouts that made
    # the fused path fragile.
    for kh in range(KH):
        for kw in range(KW):
            tap = x_ref[0, pl.ds(row0 + kh, TH), kw:kw + W_out, :]   # (TH, W_out, C_in) bf16
            tap2d = tap.reshape(M, C_in)                             # leading-dim collapse
            acc_ref[...] += jax.lax.dot_general(                     # MXU: bf16 in, f32 acc
                w_ref[kh * KW + kw], tap2d,
                dimension_numbers=(((1,), (1,)), ((), ())),
                preferred_element_type=jnp.float32)                  # (C_out, M)

    # Mish epilogue, f32 math + bf16 store:
    #   tanh(softplus(y)) = n / (n + 2),  n = e * (e + 2),  e = exp(y)
    y = acc_ref[...]
    e = jnp.exp(jnp.minimum(y, 20.0))      # clamp: ratio is 1.0 to f32 precision beyond this
    n = e * (e + 2.0)
    o_ref[0] = (y * n * pl.reciprocal(n + 2.0, approx=True)).astype(o_ref.dtype)


def _pick_row_tile(h_out, w_out, max_m=2048):
    """Largest TH that divides H_out, keeps the matmul N dim TH*W_out <= max_m (VMEM),
    and keeps the flattened output block 128-lane aligned (or full)."""
    best = h_out
    for th in range(1, h_out + 1):
        if h_out % th:
            continue
        m = th * w_out
        if m > max_m:
            continue
        if th != h_out and m % 128 != 0:
            continue
        best = th
    return best


def basic_conv2_forward(x_nchw, weight_oihw, gamma, beta, running_mean, running_var,
                        *, stride=1, padding=1, eps=1e-5):
    """Conv2d(bias=False) + BatchNorm2d(eval, running stats) + Mish.
    x_nchw: (N, C_in, H, W)  ->  (N, C_out, H_out, W_out), bf16."""
    assert stride == 1, "kernel implemented for stride=1 (module default)"
    N, C_in, H, W = x_nchw.shape
    C_out, _, KH, KW = weight_oihw.shape
    H_out = H + 2 * padding - KH + 1
    W_out = W + 2 * padding - KW + 1
    Hp, Wp = H + 2 * padding, W + 2 * padding

    TH = _pick_row_tile(H_out, W_out)
    n_row_tiles = H_out // TH
    M = TH * W_out

    # ---- glue (plain JAX): layout, spatial zero-pad, BN folding into the weights ----
    # TODO(synk): the NCHW->NHWC transpose + pad is one extra HBM pass over the activation;
    # removable if the surrounding model stays NHWC and the border is masked in-kernel.
    x_nhwc = jnp.transpose(x_nchw, (0, 2, 3, 1)).astype(jnp.bfloat16)
    x_pad = jnp.pad(x_nhwc, ((0, 0), (padding, padding), (padding, padding), (0, 0)))

    # Eval-mode BatchNorm folded into the conv: w' = w * scale[o], bias' = beta - mean * scale.
    # TODO(synk): training-mode batch statistics would need an extra cross-batch reduction pass.
    scale = gamma.astype(jnp.float32) / jnp.sqrt(running_var.astype(jnp.float32) + eps)
    bias = beta.astype(jnp.float32) - running_mean.astype(jnp.float32) * scale
    w_scaled = weight_oihw.astype(jnp.float32) * scale[:, None, None, None]
    # (KH*KW, C_out, C_in): each tap slice is a whole, aligned 2-D tile inside the kernel.
    w_taps = jnp.transpose(w_scaled, (2, 3, 0, 1)).reshape(KH * KW, C_out, C_in)
    w_taps = w_taps.astype(jnp.bfloat16)
    bias_col = bias.reshape(C_out, 1)

    cost = pl.CostEstimate(
        flops=2 * N * H_out * W_out * KH * KW * C_in * C_out,
        transcendentals=N * C_out * H_out * W_out,
        bytes_accessed=(N * Hp * Wp * C_in * 2 + KH * KW * C_out * C_in * 2
                        + C_out * 4 + N * C_out * H_out * W_out * 2),
    )

    # VMEM budget: double-buffered image + weights/bias + output tile + f32 accumulator.
    need = (2 * Hp * Wp * C_in * 2 + 2 * KH * KW * C_out * C_in * 2 + 2 * C_out * 4
            + 2 * C_out * M * 2 + C_out * M * 4)
    vmem_limit = int(min(max(32 << 20, 2 * need), 100 << 20))
    # TODO(synk): for very large images on v7x (64 MiB VMEM) switch the image BlockSpec to a
    # halo row-window instead of keeping the whole padded image VMEM-resident.

    kernel = functools.partial(_conv_bn_mish_kernel, TH=TH, W_out=W_out, KH=KH, KW=KW,
                               C_in=C_in, C_out=C_out)
    out_flat = pl.pallas_call(
        kernel,
        out_shape=jax.ShapeDtypeStruct((N, C_out, H_out * W_out), jnp.bfloat16),
        grid_spec=pltpu.PrefetchScalarGridSpec(
            num_scalar_prefetch=0,
            grid=(N, n_row_tiles),
            in_specs=[
                # Full padded image per batch: block index depends only on n, so it stays
                # VMEM-resident across the row-tile axis (no redundant DMA).
                pl.BlockSpec((1, Hp, Wp, C_in), lambda n, t: (n, 0, 0, 0)),
                pl.BlockSpec((KH * KW, C_out, C_in), lambda n, t: (0, 0, 0)),
                pl.BlockSpec((C_out, 1), lambda n, t: (0, 0)),
            ],
            out_specs=pl.BlockSpec((1, C_out, M), lambda n, t: (n, 0, t)),
            scratch_shapes=[pltpu.VMEM((C_out, M), jnp.float32)],
        ),
        compiler_params=pltpu.CompilerParams(
            dimension_semantics=("parallel", "parallel"),
            vmem_limit_bytes=vmem_limit,
        ),
        cost_estimate=cost,
    )(x_pad, w_taps, bias_col)

    # Free reshape back to NCHW (contiguous); no transpose or channel-padding slice needed.
    return out_flat.reshape(N, C_out, H_out, W_out)


def _reference(x_nchw, weight_oihw, gamma, beta, mean, var, eps=1e-5):
    # Same bf16 rounding of the conv inputs (with BN scale folded) as the kernel; f32 epilogue.
    xb = x_nchw.astype(jnp.bfloat16).astype(jnp.float32)
    scale = gamma / jnp.sqrt(var + eps)
    wb = (weight_oihw * scale[:, None, None, None]).astype(jnp.bfloat16).astype(jnp.float32)
    y = jax.lax.conv_general_dilated(
        xb, wb, window_strides=(1, 1), padding=((1, 1), (1, 1)),
        dimension_numbers=("NCHW", "OIHW", "NCHW"))
    y = y + (beta - mean * scale)[None, :, None, None]
    return y * jnp.tanh(jnp.logaddexp(y, 0.0))


if __name__ == "__main__":
    key = jax.random.PRNGKey(0)
    k_x, k_w, k_g, k_b, k_m, k_v = jax.random.split(key, 6)

    N, C_in, C_out, H, W, K = 2, 4, 8, 16, 16, 3

    x = jax.random.normal(k_x, (N, C_in, H, W), jnp.float32)
    weight = jax.random.normal(k_w, (C_out, C_in, K, K), jnp.float32) * 0.1
    gamma = 1.0 + 0.1 * jax.random.normal(k_g, (C_out,), jnp.float32)
    beta = 0.1 * jax.random.normal(k_b, (C_out,), jnp.float32)
    running_mean = 0.05 * jax.random.normal(k_m, (C_out,), jnp.float32)
    running_var = 1.0 + 0.1 * jax.random.uniform(k_v, (C_out,), jnp.float32)

    fwd = jax.jit(functools.partial(basic_conv2_forward, stride=1, padding=1))
    out = jax.block_until_ready(fwd(x, weight, gamma, beta, running_mean, running_var))

    ref = _reference(x, weight, gamma, beta, running_mean, running_var)
    assert out.shape == (N, C_out, H, W)
    # bf16 MXU inputs + bf16 output store + approx reciprocal in Mish -> loosened tolerance.
    err = float(jnp.max(jnp.abs(out.astype(jnp.float32) - ref)))
    assert err < 2e-2, err

    print("KERNEL_OK")
</pallas_src>

<mosaic_0001>
module attributes {stable_mosaic.version = 11 : i64} {
  func.func @_conv_bn_mish_kernel(%arg0: i32, %arg1: i32, %arg2: memref<1x18x18x4xbf16, #tpu.memory_space<vmem>>, %arg3: memref<9x8x4xbf16, #tpu.memory_space<vmem>>, %arg4: memref<8x1xf32, #tpu.memory_space<vmem>>, %arg5: memref<1x8x256xbf16, #tpu.memory_space<vmem>>, %arg6: memref<8x256xf32, #tpu.memory_space<vmem>>) attributes {dimension_semantics = [#tpu.dimension_semantics<parallel>, #tpu.dimension_semantics<parallel>], iteration_bounds = array<i64: 2, 1>, scalar_prefetch = 0 : i64, scratch_operands = 1 : i64, tpu.core_type = #tpu.core_type<tc>, window_params = [{transform_indices = @transform_0, window_bounds = array<i64: 1, 18, 18, 4>}, {pipeline_mode = #tpu.pipeline_mode<synchronous>, transform_indices = @transform_1, window_bounds = array<i64: 9, 8, 4>}, {pipeline_mode = #tpu.pipeline_mode<synchronous>, transform_indices = @transform_2, window_bounds = array<i64: 8, 1>}, {transform_indices = @transform_3, window_bounds = array<i64: 1, 8, 256>}]} {
    %c16_i32 = arith.constant 16 : i32
    %0 = arith.muli %arg1, %c16_i32 : i32
    %1 = tpu.assume_multiple %0, 16 : i32
    %c0 = arith.constant 0 : index
    %c0_0 = arith.constant 0 : index
    %2 = vector.load %arg4[%c0, %c0_0] : memref<8x1xf32, #tpu.memory_space<vmem>>, vector<8x1xf32>
    %3 = vector.shape_cast %2 : vector<8x1xf32> to vector<8x1xf32>
    %4 = vector.broadcast %3 : vector<8x1xf32> to vector<8x256xf32>
    %c0_1 = arith.constant 0 : index
    %c0_2 = arith.constant 0 : index
    %5 = vector.load %arg6[%c0_1, %c0_2] : memref<8x256xf32, #tpu.memory_space<vmem>>, vector<8x256xf32>
    tpu.vector_store %arg6[%c0_1, %c0_2], %4 {strides = array<i32>} : memref<8x256xf32, #tpu.memory_space<vmem>>, vector<8x256xf32>,
    %c0_i32 = arith.constant 0 : i32
    %6 = arith.addi %1, %c0_i32 : i32
    %c0_3 = arith.constant 0 : index
    %7 = arith.index_cast %6 : i32 to index
    %c0_4 = arith.constant 0 : index
    %c0_5 = arith.constant 0 : index
    %8 = vector.load %arg2[%c0_3, %7, %c0_4, %c0_5] : memref<1x18x18x4xbf16, #tpu.memory_space<vmem>>, vector<1x16x16x4xbf16>
    %9 = vector.shape_cast %8 : vector<1x16x16x4xbf16> to vector<16x16x4xbf16>
    %10 = vector.shape_cast %9 : vector<16x16x4xbf16> to vector<256x4xbf16>
    %c0_6 = arith.constant 0 : index
    %c0_7 = arith.constant 0 : index
    %11 = vector.load %arg6[%c0_6, %c0_7] : memref<8x256xf32, #tpu.memory_space<vmem>>, vector<8x256xf32>
    %c0_8 = arith.constant 0 : index
    %c0_9 = arith.constant 0 : index
    %c0_10 = arith.constant 0 : index
    %12 = vector.load %arg3[%c0_8, %c0_9, %c0_10] : memref<9x8x4xbf16, #tpu.memory_space<vmem>>, vector<1x8x4xbf16>
    %13 = vector.shape_cast %12 : vector<1x8x4xbf16> to vector<8x4xbf16>
    %cst = arith.constant dense<0.000000e+00> : vector<8x256xf32>
    %14 = tpu.matmul %13, %10, %cst {dimension_numbers = #tpu.dot_dimension_numbers<[1], [1], [0], [0], [0, 0, 1, 0], [], []>} : vector<8x4xbf16>, vector<256x4xbf16>, vector<8x256xf32> -> vector<8x256xf32>
    %15 = arith.addf %11, %14 : vector<8x256xf32>
    %c0_11 = arith.constant 0 : index
    %c0_12 = arith.constant 0 : index
    %16 = vector.load %arg6[%c0_11, %c0_12] : memref<8x256xf32, #tpu.memory_space<vmem>>, vector<8x256xf32>
    tpu.vector_store %arg6[%c0_11, %c0_12], %15 {strides = array<i32>} : memref<8x256xf32, #tpu.memory_space<vmem>>, vector<8x256xf32>,
    %c0_i32_13 = arith.constant 0 : i32
    %17 = arith.addi %1, %c0_i32_13 : i32
    %c0_14 = arith.constant 0 : index
    %18 = arith.index_cast %17 : i32 to index
    %c1 = arith.constant 1 : index
    %c0_15 = arith.constant 0 : index
    %19 = vector.load %arg2[%c0_14, %18, %c1, %c0_15] : memref<1x18x18x4xbf16, #tpu.memory_space<vmem>>, vector<1x16x16x4xbf16>
    %20 = vector.shape_cast %19 : vector<1x16x16x4xbf16> to vector<16x16x4xbf16>
    %21 = vector.shape_cast %20 : vector<16x16x4xbf16> to vector<256x4xbf16>
    %c0_16 = arith.constant 0 : index
    %c0_17 = arith.constant 0 : index
    %22 = vector.load %arg6[%c0_16, %c0_17] : memref<8x256xf32, #tpu.memory_space<vmem>>, vector<8x256xf32>
    %c1_18 = arith.constant 1 : index
    %c0_19 = arith.constant 0 : index
    %c0_20 = arith.constant 0 : index
    %23 = vector.load %arg3[%c1_18, %c0_19, %c0_20] : memref<9x8x4xbf16, #tpu.memory_space<vmem>>, vector<1x8x4xbf16>
    %24 = vector.shape_cast %23 : vector<1x8x4xbf16> to vector<8x4xbf16>
    %cst_21 = arith.constant dense<0.000000e+00> : vector<8x256xf32>
    %25 = tpu.matmul %24, %21, %cst_21 {dimension_numbers = #tpu.dot_dimension_numbers<[1], [1], [0], [0], [0, 0, 1, 0], [], []>} : vector<8x4xbf16>, vector<256x4xbf16>, vector<8x256xf32> -> vector<8x256xf32>
    %26 = arith.addf %22, %25 : vector<8x256xf32>
    %c0_22 = arith.constant 0 : index
    %c0_23 = arith.constant 0 : index
    %27 = vector.load %arg6[%c0_22, %c0_23] : memref<8x256xf32, #tpu.memory_space<vmem>>, vector<8x256xf32>
    tpu.vector_store %arg6[%c0_22, %c0_23], %26 {strides = array<i32>} : memref<8x256xf32, #tpu.memory_space<vmem>>, vector<8x256xf32>,
    %c0_i32_24 = arith.constant 0 : i32
    %28 = arith.addi %1, %c0_i32_24 : i32
    %c0_25 = arith.constant 0 : index
    %29 = arith.index_cast %28 : i32 to index
    %c2 = arith.constant 2 : index
    %c0_26 = arith.constant 0 : index
    %30 = vector.load %arg2[%c0_25, %29, %c2, %c0_26] : memref<1x18x18x4xbf16, #tpu.memory_space<vmem>>, vector<1x16x16x4xbf16>
    %31 = vector.shape_cast %30 : vector<1x16x16x4xbf16> to vector<16x16x4xbf16>
    %32 = vector.shape_cast %31 : vector<16x16x4xbf16> to vector<256x4xbf16>
    %c0_27 = arith.constant 0 : index
    %c0_28 = arith.constant 0 : index
    %33 = vector.load %arg6[%c0_27, %c0_28] : memref<8x256xf32, #tpu.memory_space<vmem>>, vector<8x256xf32>
    %c2_29 = arith.constant 2 : index
    %c0_30 = arith.constant 0 : index
    %c0_31 = arith.constant 0 : index
    %34 = vector.load %arg3[%c2_29, %c0_30, %c0_31] : memref<9x8x4xbf16, #tpu.memory_space<vmem>>, vector<1x8x4xbf16>
    %35 = vector.shape_cast %34 : vector<1x8x4xbf16> to vector<8x4xbf16>
    %cst_32 = arith.constant dense<0.000000e+00> : vector<8x256xf32>
    %36 = tpu.matmul %35, %32, %cst_32 {dimension_numbers = #tpu.dot_dimension_numbers<[1], [1], [0], [0], [0, 0, 1, 0], [], []>} : vector<8x4xbf16>, vector<256x4xbf16>, vector<8x256xf32> -> vector<8x256xf32>
    %37 = arith.addf %33, %36 : vector<8x256xf32>
    %c0_33 = arith.constant 0 : index
    %c0_34 = arith.constant 0 : index
    %38 = vector.load %arg6[%c0_33, %c0_34] : memref<8x256xf32, #tpu.memory_space<vmem>>, vector<8x256xf32>
    tpu.vector_store %arg6[%c0_33, %c0_34], %37 {strides = array<i32>} : memref<8x256xf32, #tpu.memory_space<vmem>>, vector<8x256xf32>,
    %c1_i32 = arith.constant 1 : i32
    %39 = arith.addi %1, %c1_i32 : i32
    %c0_35 = arith.constant 0 : index
    %40 = arith.index_cast %39 : i32 to index
    %c0_36 = arith.constant 0 : index
    %c0_37 = arith.constant 0 : index
    %41 = vector.load %arg2[%c0_35, %40, %c0_36, %c0_37] : memref<1x18x18x4xbf16, #tpu.memory_space<vmem>>, vector<1x16x16x4xbf16>
    %42 = vector.shape_cast %41 : vector<1x16x16x4xbf16> to vector<16x16x4xbf16>
    %43 = vector.shape_cast %42 : vector<16x16x4xbf16> to vector<256x4xbf16>
    %c0_38 = arith.constant 0 : index
    %c0_39 = arith.constant 0 : index
    %44 = vector.load %arg6[%c0_38, %c0_39] : memref<8x256xf32, #tpu.memory_space<vmem>>, vector<8x256xf32>
    %c3 = arith.constant 3 : index
    %c0_40 = arith.constant 0 : index
    %c0_41 = arith.constant 0 : index
    %45 = vector.load %arg3[%c3, %c0_40, %c0_41] : memref<9x8x4xbf16, #tpu.memory_space<vmem>>, vector<1x8x4xbf16>
    %46 = vector.shape_cast %45 : vector<1x8x4xbf16> to vector<8x4xbf16>
    %cst_42 = arith.constant dense<0.000000e+00> : vector<8x256xf32>
    %47 = tpu.matmul %46, %43, %cst_42 {dimension_numbers = #tpu.dot_dimension_numbers<[1], [1], [0], [0], [0, 0, 1, 0], [], []>} : vector<8x4xbf16>, vector<256x4xbf16>, vector<8x256xf32> -> vector<8x256xf32>
    %48 = arith.addf %44, %47 : vector<8x256xf32>
    %c0_43 = arith.constant 0 : index
    %c0_44 = arith.constant 0 : index
    %49 = vector.load %arg6[%c0_43, %c0_44] : memref<8x256xf32, #tpu.memory_space<vmem>>, vector<8x256xf32>
    tpu.vector_store %arg6[%c0_43, %c0_44], %48 {strides = array<i32>} : memref<8x256xf32, #tpu.memory_space<vmem>>, vector<8x256xf32>,
    %c1_i32_45 = arith.constant 1 : i32
    %50 = arith.addi %1, %c1_i32_45 : i32
    %c0_46 = arith.constant 0 : index
    %51 = arith.index_cast %50 : i32 to index
    %c1_47 = arith.constant 1 : index
    %c0_48 = arith.constant 0 : index
    %52 = vector.load %arg2[%c0_46, %51, %c1_47, %c0_48] : memref<1x18x18x4xbf16, #tpu.memory_space<vmem>>, vector<1x16x16x4xbf16>
    %53 = vector.shape_cast %52 : vector<1x16x16x4xbf16> to vector<16x16x4xbf16>
    %54 = vector.shape_cast %53 : vector<16x16x4xbf16> to vector<256x4xbf16>
    %c0_49 = arith.constant 0 : index
    %c0_50 = arith.constant 0 : index
    %55 = vector.load %arg6[%c0_49, %c0_50] : memref<8x256xf32, #tpu.memory_space<vmem>>, vector<8x256xf32>
    %c4 = arith.constant 4 : index
    %c0_51 = arith.constant 0 : index
    %c0_52 = arith.constant 0 : index
    %56 = vector.load %arg3[%c4, %c0_51, %c0_52] : memref<9x8x4xbf16, #tpu.memory_space<vmem>>, vector<1x8x4xbf16>
    %57 = vector.shape_cast %56 : vector<1x8x4xbf16> to vector<8x4xbf16>
    %cst_53 = arith.constant dense<0.000000e+00> : vector<8x256xf32>
    %58 = tpu.matmul %57, %54, %cst_53 {dimension_numbers = #tpu.dot_dimension_numbers<[1], [1], [0], [0], [0, 0, 1, 0], [], []>} : vector<8x4xbf16>, vector<256x4xbf16>, vector<8x256xf32> -> vector<8x256xf32>
    %59 = arith.addf %55, %58 : vector<8x256xf32>
    %c0_54 = arith.constant 0 : index
    %c0_55 = arith.constant 0 : index
    %60 = vector.load %arg6[%c0_54, %c0_55] : memref<8x256xf32, #tpu.memory_space<vmem>>, vector<8x256xf32>
    tpu.vector_store %arg6[%c0_54, %c0_55], %59 {strides = array<i32>} : memref<8x256xf32, #tpu.memory_space<vmem>>, vector<8x256xf32>,
    %c1_i32_56 = arith.constant 1 : i32
    %61 = arith.addi %1, %c1_i32_56 : i32
    %c0_57 = arith.constant 0 : index
    %62 = arith.index_cast %61 : i32 to index
    %c2_58 = arith.constant 2 : index
    %c0_59 = arith.constant 0 : index
    %63 = vector.load %arg2[%c0_57, %62, %c2_58, %c0_59] : memref<1x18x18x4xbf16, #tpu.memory_space<vmem>>, vector<1x16x16x4xbf16>
    %64 = vector.shape_cast %63 : vector<1x16x16x4xbf16> to vector<16x16x4xbf16>
    %65 = vector.shape_cast %64 : vector<16x16x4xbf16> to vector<256x4xbf16>
    %c0_60 = arith.constant 0 : index
    %c0_61 = arith.constant 0 : index
    %66 = vector.load %arg6[%c0_60, %c0_61] : memref<8x256xf32, #tpu.memory_space<vmem>>, vector<8x256xf32>
    %c5 = arith.constant 5 : index
    %c0_62 = arith.constant 0 : index
    %c0_63 = arith.constant 0 : index
    %67 = vector.load %arg3[%c5, %c0_62, %c0_63] : memref<9x8x4xbf16, #tpu.memory_space<vmem>>, vector<1x8x4xbf16>
    %68 = vector.shape_cast %67 : vector<1x8x4xbf16> to vector<8x4xbf16>
    %cst_64 = arith.constant dense<0.000000e+00> : vector<8x256xf32>
    %69 = tpu.matmul %68, %65, %cst_64 {dimension_numbers = #tpu.dot_dimension_numbers<[1], [1], [0], [0], [0, 0, 1, 0], [], []>} : vector<8x4xbf16>, vector<256x4xbf16>, vector<8x256xf32> -> vector<8x256xf32>
    %70 = arith.addf %66, %69 : vector<8x256xf32>
    %c0_65 = arith.constant 0 : index
    %c0_66 = arith.constant 0 : index
    %71 = vector.load %arg6[%c0_65, %c0_66] : memref<8x256xf32, #tpu.memory_space<vmem>>, vector<8x256xf32>
    tpu.vector_store %arg6[%c0_65, %c0_66], %70 {strides = array<i32>} : memref<8x256xf32, #tpu.memory_space<vmem>>, vector<8x256xf32>,
    %c2_i32 = arith.constant 2 : i32
    %72 = arith.addi %1, %c2_i32 : i32
    %c0_67 = arith.constant 0 : index
    %73 = arith.index_cast %72 : i32 to index
    %c0_68 = arith.constant 0 : index
    %c0_69 = arith.constant 0 : index
    %74 = vector.load %arg2[%c0_67, %73, %c0_68, %c0_69] : memref<1x18x18x4xbf16, #tpu.memory_space<vmem>>, vector<1x16x16x4xbf16>
    %75 = vector.shape_cast %74 : vector<1x16x16x4xbf16> to vector<16x16x4xbf16>
    %76 = vector.shape_cast %75 : vector<16x16x4xbf16> to vector<256x4xbf16>
    %c0_70 = arith.constant 0 : index
    %c0_71 = arith.constant 0 : index
    %77 = vector.load %arg6[%c0_70, %c0_71] : memref<8x256xf32, #tpu.memory_space<vmem>>, vector<8x256xf32>
    %c6 = arith.constant 6 : index
    %c0_72 = arith.constant 0 : index
    %c0_73 = arith.constant 0 : index
    %78 = vector.load %arg3[%c6, %c0_72, %c0_73] : memref<9x8x4xbf16, #tpu.memory_space<vmem>>, vector<1x8x4xbf16>
    %79 = vector.shape_cast %78 : vector<1x8x4xbf16> to vector<8x4xbf16>
    %cst_74 = arith.constant dense<0.000000e+00> : vector<8x256xf32>
    %80 = tpu.matmul %79, %76, %cst_74 {dimension_numbers = #tpu.dot_dimension_numbers<[1], [1], [0], [0], [0, 0, 1, 0], [], []>} : vector<8x4xbf16>, vector<256x4xbf16>, vector<8x256xf32> -> vector<8x256xf32>
    %81 = arith.addf %77, %80 : vector<8x256xf32>
    %c0_75 = arith.constant 0 : index
    %c0_76 = arith.constant 0 : index
    %82 = vector.load %arg6[%c0_75, %c0_76] : memref<8x256xf32, #tpu.memory_space<vmem>>, vector<8x256xf32>
    tpu.vector_store %arg6[%c0_75, %c0_76], %81 {strides = array<i32>} : memref<8x256xf32, #tpu.memory_space<vmem>>, vector<8x256xf32>,
    %c2_i32_77 = arith.constant 2 : i32
    %83 = arith.addi %1, %c2_i32_77 : i32
    %c0_78 = arith.constant 0 : index
    %84 = arith.index_cast %83 : i32 to index
    %c1_79 = arith.constant 1 : index
    %c0_80 = arith.constant 0 : index
    %85 = vector.load %arg2[%c0_78, %84, %c1_79, %c0_80] : memref<1x18x18x4xbf16, #tpu.memory_space<vmem>>, vector<1x16x16x4xbf16>
    %86 = vector.shape_cast %85 : vector<1x16x16x4xbf16> to vector<16x16x4xbf16>
    %87 = vector.shape_cast %86 : vector<16x16x4xbf16> to vector<256x4xbf16>
    %c0_81 = arith.constant 0 : index
    %c0_82 = arith.constant 0 : index
    %88 = vector.load %arg6[%c0_81, %c0_82] : memref<8x256xf32, #tpu.memory_space<vmem>>, vector<8x256xf32>
    %c7 = arith.constant 7 : index
    %c0_83 = arith.constant 0 : index
    %c0_84 = arith.constant 0 : index
    %89 = vector.load %arg3[%c7, %c0_83, %c0_84] : memref<9x8x4xbf16, #tpu.memory_space<vmem>>, vector<1x8x4xbf16>
    %90 = vector.shape_cast %89 : vector<1x8x4xbf16> to vector<8x4xbf16>
    %cst_85 = arith.constant dense<0.000000e+00> : vector<8x256xf32>
    %91 = tpu.matmul %90, %87, %cst_85 {dimension_numbers = #tpu.dot_dimension_numbers<[1], [1], [0], [0], [0, 0, 1, 0], [], []>} : vector<8x4xbf16>, vector<256x4xbf16>, vector<8x256xf32> -> vector<8x256xf32>
    %92 = arith.addf %88, %91 : vector<8x256xf32>
    %c0_86 = arith.constant 0 : index
    %c0_87 = arith.constant 0 : index
    %93 = vector.load %arg6[%c0_86, %c0_87] : memref<8x256xf32, #tpu.memory_space<vmem>>, vector<8x256xf32>
    tpu.vector_store %arg6[%c0_86, %c0_87], %92 {strides = array<i32>} : memref<8x256xf32, #tpu.memory_space<vmem>>, vector<8x256xf32>,
    %c2_i32_88 = arith.constant 2 : i32
    %94 = arith.addi %1, %c2_i32_88 : i32
    %c0_89 = arith.constant 0 : index
    %95 = arith.index_cast %94 : i32 to index
    %c2_90 = arith.constant 2 : index
    %c0_91 = arith.constant 0 : index
    %96 = vector.load %arg2[%c0_89, %95, %c2_90, %c0_91] : memref<1x18x18x4xbf16, #tpu.memory_space<vmem>>, vector<1x16x16x4xbf16>
    %97 = vector.shape_cast %96 : vector<1x16x16x4xbf16> to vector<16x16x4xbf16>
    %98 = vector.shape_cast %97 : vector<16x16x4xbf16> to vector<256x4xbf16>
    %c0_92 = arith.constant 0 : index
    %c0_93 = arith.constant 0 : index
    %99 = vector.load %arg6[%c0_92, %c0_93] : memref<8x256xf32, #tpu.memory_space<vmem>>, vector<8x256xf32>
    %c8 = arith.constant 8 : index
    %c0_94 = arith.constant 0 : index
    %c0_95 = arith.constant 0 : index
    %100 = vector.load %arg3[%c8, %c0_94, %c0_95] : memref<9x8x4xbf16, #tpu.memory_space<vmem>>, vector<1x8x4xbf16>
    %101 = vector.shape_cast %100 : vector<1x8x4xbf16> to vector<8x4xbf16>
    %cst_96 = arith.constant dense<0.000000e+00> : vector<8x256xf32>
    %102 = tpu.matmul %101, %98, %cst_96 {dimension_numbers = #tpu.dot_dimension_numbers<[1], [1], [0], [0], [0, 0, 1, 0], [], []>} : vector<8x4xbf16>, vector<256x4xbf16>, vector<8x256xf32> -> vector<8x256xf32>
    %103 = arith.addf %99, %102 : vector<8x256xf32>
    %c0_97 = arith.constant 0 : index
    %c0_98 = arith.constant 0 : index
    %104 = vector.load %arg6[%c0_97, %c0_98] : memref<8x256xf32, #tpu.memory_space<vmem>>, vector<8x256xf32>
    tpu.vector_store %arg6[%c0_97, %c0_98], %103 {strides = array<i32>} : memref<8x256xf32, #tpu.memory_space<vmem>>, vector<8x256xf32>,
    %c0_99 = arith.constant 0 : index
    %c0_100 = arith.constant 0 : index
    %105 = vector.load %arg6[%c0_99, %c0_100] : memref<8x256xf32, #tpu.memory_space<vmem>>, vector<8x256xf32>
    %cst_101 = arith.constant 2.000000e+01 : f32
    %106 = vector.broadcast %cst_101 : f32 to vector<8x256xf32>
    %107 = arith.minimumf %105, %106 : vector<8x256xf32>
    %108 = math.exp %107 : vector<8x256xf32>
    %cst_102 = arith.constant 2.000000e+00 : f32
    %109 = vector.broadcast %cst_102 : f32 to vector<8x256xf32>
    %110 = arith.addf %108, %109 : vector<8x256xf32>
    %111 = arith.mulf %108, %110 : vector<8x256xf32>
    %112 = arith.mulf %105, %111 : vector<8x256xf32>
    %cst_103 = arith.constant 2.000000e+00 : f32
    %113 = vector.broadcast %cst_103 : f32 to vector<8x256xf32>
    %114 = arith.addf %111, %113 : vector<8x256xf32>
    %115 = tpu.reciprocal %114 {approx = true} : vector<8x256xf32> -> vector<8x256xf32>
    %116 = arith.mulf %112, %115 : vector<8x256xf32>
    %117 = arith.truncf %116 : vector<8x256xf32> to vector<8x256xbf16>
    %c0_104 = arith.constant 0 : index
    %c0_105 = arith.constant 0 : index
    %c0_106 = arith.constant 0 : index
    %118 = vector.load %arg5[%c0_104, %c0_105, %c0_106] : memref<1x8x256xbf16, #tpu.memory_space<vmem>>, vector<1x8x256xbf16>
    %119 = vector.shape_cast %118 : vector<1x8x256xbf16> to vector<8x256xbf16>
    %120 = vector.shape_cast %117 : vector<8x256xbf16> to vector<1x8x256xbf16>
    tpu.vector_store %arg5[%c0_104, %c0_105, %c0_106], %120 {strides = array<i32>} : memref<1x8x256xbf16, #tpu.memory_space<vmem>>, vector<1x8x256xbf16>,
    return
  }
  func.func @transform_0(%arg0: i32, %arg1: i32) -> (i32, i32, i32, i32) {
    %c0_i32 = arith.constant 0 : i32
    %c0_i32_0 = arith.constant 0 : i32
    %c0_i32_1 = arith.constant 0 : i32
    %c0_i32_2 = arith.constant 0 : i32
    return %arg0, %c0_i32, %c0_i32_0, %c0_i32_1 : i32, i32, i32, i32
  }
  func.func @transform_1(%arg0: i32, %arg1: i32) -> (i32, i32, i32) {
    %c0_i32 = arith.constant 0 : i32
    %c0_i32_0 = arith.constant 0 : i32
    %c0_i32_1 = arith.constant 0 : i32
    %c0_i32_2 = arith.constant 0 : i32
    return %c0_i32, %c0_i32_0, %c0_i32_1 : i32, i32, i32
  }
  func.func @transform_2(%arg0: i32, %arg1: i32) -> (i32, i32) {
    %c0_i32 = arith.constant 0 : i32
    %c0_i32_0 = arith.constant 0 : i32
    %c0_i32_1 = arith.constant 0 : i32
    return %c0_i32, %c0_i32_0 : i32, i32
  }
  func.func @transform_3(%arg0: i32, %arg1: i32) -> (i32, i32, i32) {
    %c0_i32 = arith.constant 0 : i32
    %c0_i32_0 = arith.constant 0 : i32
    return %arg0, %c0_i32, %arg1 : i32, i32, i32
  }
}

</mosaic_0001>

<llo_original>
// kernel: basic_conv2_forward.1
$region0: #{basic_conv2_forward.1}
  #allocation0 [shape = 'u32[]', space=smem, size = 0x4, offset = 0x4, fixed_abs, tag = 'smem constant byte address 0x4 - core index']
  #allocation1 [shape = 'u32[144,128]{1,0:T(1,128)}', space=vmem, size = 0x12000, scoped, tag = 'internal scratch']
  #allocation2 [shape = 'f32[8,256]{1,0:T(8,128)}', space=vmem, size = 0x2000, scoped, tag = 'scratch operand']
  %s0 = inlined_call_operand.vmem [shape: bf16[2,18,18,4], index: 0, kind: input, shape index: {}]
  %s1 = inlined_call_operand.vmem [shape: bf16[9,8,4], index: 1, kind: input, shape index: {}]
  %s2 = inlined_call_operand.vmem [shape: f32[8,1], index: 2, kind: input, shape index: {}]
  %s3 = inlined_call_operand.vmem [shape: bf16[2,8,256], index: 3, kind: output, shape index: {}]
  %s4 = sld [smem:[#allocation0]]
  $region45: #{basic_conv2_forward.1} parent=0
    _
  %s6 = ssub.s32 1, %s4
  %s7 = scalar_select 0, %s6, %s4
  loop: start=0, step=1, limit=4
  $region2: #{basic_conv2_forward.1} parent=0 // loop_pre_header
    _
  $region3: #{basic_conv2_forward.1} parent=0 // loop_header
    %s9 = sphi 0, %s13
    %p10 = scmp.ge.s32.totalorder %s9, 4
    %s16 = sphi 0, %s28
    %s17 = sphi 0, %s24
    %s18 = sphi 0, %s16
    %s19 = sphi 0, %s17
    %s20 = sphi 0, %s18
    %s21 = sphi 0, %s19
    %s31 = sphi 0, %s33
    %s34 = sphi 0, %s31
    %s35 = sphi 0, %s34
    %s51 = sphi 0, %s35
    %s55 = sphi 0, %s55
    %s57 = sphi 0, %s55
    %s58 = sphi 0, %s57
    %s72 = sphi 0, %s58
    %s76 = sphi 0, %s76
    %s78 = sphi 0, %s76
    %s79 = sphi 0, %s78
    %s93 = sphi 0, %s79
    %s101 = sphi 0, %s103
    %s104 = sphi 0, %s101
    %s105 = sphi 0, %s104
    %s121 = sphi 0, %s105
  $region4: #{basic_conv2_forward.1} parent=0 // loop_header_branch
    %12 = sbr.rel (%p10) target = $region8
  $region5: #{basic_conv2_forward.1} parent=0 // loop_body
    %s14 = ssub.s32 %s9, 1
    %s15 = ssub.s32 %s9, 2
    %s22 = sadd.s32 1, %s17
    %p23 = scmp.ge.s32.totalorder %s22, 1
    %s24 = scalar_select %p23, 0, %s22
    %s25 = sadd.s32 1, %s16
    %s26 = scalar_select %p23, %s25, %s16
    %p27 = scmp.ge.s32.totalorder %s26, 2
    %s28 = scalar_select %p27, 0, %s26
    %s29 = ssub.s32 %s16, %s28
    %p30 = scmp.eq.s32.totalorder %s29, 0
    %s32 = sadd.s32 %s31, 1
    %s33 = scalar_select %p30, %s31, %s32
    %p36 = pneg %p30
    %p37 = scmp.eq.s32.totalorder %s9, 1
    %p38 = por %p36, %p37
    %p39 = scmp.ne.s32.totalorder %s31, %s34
    %p40 = scmp.eq.s32.totalorder %s9, 0
    %p41 = por %p39, %p40
    %p42 = scmp.ne.s32.totalorder %s31, %s34
    %p43 = scmp.eq.s32.totalorder %s14, 1
    %p44 = por %p42, %p43
    %p45 = scmp.ne.s32.totalorder %s34, %s35
    %p46 = scmp.eq.s32.totalorder %s14, 0
    %p47 = por %p45, %p46
    %p48 = scmp.ne.s32.totalorder %s34, %s35
    %p49 = scmp.eq.s32.totalorder %s15, 1
    %p50 = por %p48, %p49
    %p52 = scmp.ne.s32.totalorder %s35, %s51
    %p53 = scmp.eq.s32.totalorder %s15, 0
    %p54 = por %p52, %p53
    %s56 = sadd.s32 %s55, 1
    %p59 = scmp.eq.s32.totalorder %s9, 1
    %p60 = scmp.ne.s32.totalorder %s55, %s57
    %p61 = scmp.eq.s32.totalorder %s9, 0
    %p62 = por %p60, %p61
    %p63 = scmp.ne.s32.totalorder %s55, %s57
    %p64 = scmp.eq.s32.totalorder %s14, 1
    %p65 = por %p63, %p64
    %p66 = scmp.ne.s32.totalorder %s57, %s58
    %p67 = scmp.eq.s32.totalorder %s14, 0
    %p68 = por %p66, %p67
    %p69 = scmp.ne.s32.totalorder %s57, %s58
    %p70 = scmp.eq.s32.totalorder %s15, 1
    %p71 = por %p69, %p70
    %p73 = scmp.ne.s32.totalorder %s58, %s72
    %p74 = scmp.eq.s32.totalorder %s15, 0
    %p75 = por %p73, %p74
    %s77 = sadd.s32 %s76, 1
    %p80 = scmp.eq.s32.totalorder %s9, 1
    %p81 = scmp.ne.s32.totalorder %s76, %s78
    %p82 = scmp.eq.s32.totalorder %s9, 0
    %p83 = por %p81, %p82
    %p84 = scmp.ne.s32.totalorder %s76, %s78
    %p85 = scmp.eq.s32.totalorder %s14, 1
    %p86 = por %p84, %p85
    %p87 = scmp.ne.s32.totalorder %s78, %s79
    %p88 = scmp.eq.s32.totalorder %s14, 0
    %p89 = por %p87, %p88
    %p90 = scmp.ne.s32.totalorder %s78, %s79
    %p91 = scmp.eq.s32.totalorder %s15, 1
    %p92 = por %p90, %p91
    %p94 = scmp.ne.s32.totalorder %s79, %s93
    %p95 = scmp.eq.s32.totalorder %s15, 0
    %p96 = por %p94, %p95
    %s97 = ssub.s32 %s16, %s28
    %s98 = ssub.s32 %s17, %s24
    %s99 = sor.u32 %s97, %s98
    %p100 = scmp.eq.s32.totalorder %s99, 0
    %s102 = sadd.s32 %s101, 1
    %s103 = scalar_select %p100, %s101, %s102
    %p106 = pneg %p100
    %p107 = scmp.eq.s32.totalorder %s9, 1
    %p108 = por %p106, %p107
    %p109 = scmp.ne.s32.totalorder %s101, %s104
    %p110 = scmp.eq.s32.totalorder %s9, 0
    %p111 = por %p109, %p110
    %p112 = scmp.ne.s32.totalorder %s101, %s104
    %p113 = scmp.eq.s32.totalorder %s14, 1
    %p114 = por %p112, %p113
    %p115 = scmp.ne.s32.totalorder %s104, %s105
    %p116 = scmp.eq.s32.totalorder %s14, 0
    %p117 = por %p115, %p116
    %p118 = scmp.ne.s32.totalorder %s104, %s105
    %p119 = scmp.eq.s32.totalorder %s15, 1
    %p120 = por %p118, %p119
    %p122 = scmp.ne.s32.totalorder %s105, %s121
    %p123 = scmp.eq.s32.totalorder %s15, 0
    %p124 = por %p122, %p123
    %p125 = scmp.le.s32.totalorder 1, %s9
    %p126 = scmp.lt.s32.totalorder %s9, 3
    %p127 = pnand %p125, %p126
    %p128 = pneg %p127
    // Predicated region
    $region9: #{basic_conv2_forward.1} parent=5 // pred_check
      _
    $region10: #{basic_conv2_forward.1} parent=5 // pred_check_branch
      %130 = sbr.rel (%p127) target = $region12
    $region11: #{basic_conv2_forward.1} parent=5 // pred_region
      %s131 = ssub.s32 %s9, 1
      // Predicated region
      $region13: #{basic_conv2_forward.1} parent=11 // pred_check
        %p132 = pneg %p68
      $region14: #{basic_conv2_forward.1} parent=11 // pred_check_branch
        %134 = sbr.rel (%p132) target = $region16
      $region15: #{basic_conv2_forward.1} parent=11 // pred_region
        _
      $region16: #{basic_conv2_forward.1} parent=11 // pred_fallthru
        _
      // Predicated region
      $region17: #{basic_conv2_forward.1} parent=11 // pred_check
        %p135 = pneg %p89
      $region18: #{basic_conv2_forward.1} parent=11 // pred_check_branch
        %137 = sbr.rel (%p135) target = $region20
      $region19: #{basic_conv2_forward.1} parent=11 // pred_region
        _
      $region20: #{basic_conv2_forward.1} parent=11 // pred_fallthru
        _
    $region12: #{basic_conv2_forward.1} parent=5 // pred_fallthru
      _
    %p138 = scmp.lt.s32.totalorder %s9, 2
    // Predicated region
    $region21: #{basic_conv2_forward.1} parent=5 // pred_check
      %p139 = pneg %p138
    $region22: #{basic_conv2_forward.1} parent=5 // pred_check_branch
      %141 = sbr.rel (%p139) target = $region24
    $region23: #{basic_conv2_forward.1} parent=5 // pred_region
      // Predicated region
      $region25: #{basic_conv2_forward.1} parent=23 // pred_check
        %p142 = pneg %p41
      $region26: #{basic_conv2_forward.1} parent=23 // pred_check_branch
        %144 = sbr.rel (%p142) target = $region28
      $region27: #{basic_conv2_forward.1} parent=23 // pred_region
        %p145 = scmp.lt.s32.totalorder %s16, 1
        %s146 = scalar_select %p145, %s16, 1
        %s147 = smul.addr %s146, 54
        %s148 = smul.addr %s147, 4
        %s149 = scalar_lea.vmem %s0, %s148
      $region28: #{basic_conv2_forward.1} parent=23 // pred_fallthru
        _
    $region24: #{basic_conv2_forward.1} parent=5 // pred_fallthru
      _
    %p150 = scmp.le.s32.totalorder 1, %s9
    %p151 = scmp.lt.s32.totalorder %s9, 3
    %p152 = pnand %p150, %p151
    %p153 = pneg %p152
    // Predicated region
    $region29: #{basic_conv2_forward.1} parent=5 // pred_check
      _
    $region30: #{basic_conv2_forward.1} parent=5 // pred_check_branch
      %155 = sbr.rel (%p152) target = $region32
    $region31: #{basic_conv2_forward.1} parent=5 // pred_region
      %s156 = ssub.s32 %s9, 1
      %p157 = scmp.lt.s32.totalorder %s18, 1
      %s158 = scalar_select %p157, %s18, 1
      %s159 = smul.addr %s158, 54
      %s160 = smul.addr %s159, 4
      %s161 = scalar_lea.vmem %s0, %s160
      %p162 = pneg %p47
      %p163 = pneg %p44
      %p164 = pneg %p68
      %p165 = pneg %p65
      %p166 = pneg %p89
      %p167 = pneg %p86
      %p168 = pneg %p117
      %p169 = pneg %p114
      %s170 = smul.u32 2, %s19
      %p171 = scmp.lt.s32.totalorder %s18, 1
      %s172 = scalar_select %p171, %s18, 1
      %p173 = scmp.lt.s32.totalorder %s170, 1
      %s174 = scalar_select %p173, %s170, 1
      %s175 = smul.addr %s172, 2
      %s176 = sadd.s32 %s174, %s175
      %s177 = smul.addr %s176, 4
      %s178 = scalar_lea.vmem %s3, %s177
      %p179 = scmp.lt.s32.totalorder %s18, 1
      %s180 = scalar_select %p179, %s18, 1
      %s181 = smul.addr %s180, 54
      %s182 = smul.addr %s181, 4
      %s183 = scalar_lea.vmem %s0, %s182
      %s184 = smul.u32 2, %s19
      %p185 = scmp.lt.s32.totalorder %s18, 1
      %s186 = scalar_select %p185, %s18, 1
      %p187 = scmp.lt.s32.totalorder %s184, 1
      %s188 = scalar_select %p187, %s184, 1
      %s189 = smul.addr %s186, 2
      %s190 = sadd.s32 %s188, %s189
      %s191 = smul.addr %s190, 4
      %s192 = scalar_lea.vmem %s3, %s191
      %s193 = smul.u32 2, %s19
      %s195 = smul.u32 %s19, 16
      %v196 = vld [vmem:[%s2] sm:$0xff]
      %198 = vset.pattern.permute.xlu0 0
      %199 = vperm.xlu0 %198, %v196
      %v200 = vpop.permute.xlu0 %199
      %202 = vst [vmem:[#allocation2] sm:$0xff] %v200
      %203 = vst [vmem:[#allocation2 + $0x8] sm:$0xff] %v200
      %s204 = smul.u32 %s195, 3
      %s205 = smul.addr %s204, 4
      %s206 = scalar_lea.vmem %s183, %s205
      %v207 = vld [vmem:[%s206] sm:$0xf]
      %v208 = vld [vmem:[%s206 + $0x4] sm:$0xf]
      %v209 = vld [vmem:[%s206 + $0xc] sm:$0xf]
      %v210 = vld [vmem:[%s206 + $0x10] sm:$0xf]
      %v211 = vld [vmem:[%s206 + $0x18] sm:$0xf]
      %v212 = vld [vmem:[%s206 + $0x1c] sm:$0xf]
      %v213 = vld [vmem:[%s206 + $0x24] sm:$0xf]
      %v214 = vld [vmem:[%s206 + $0x28] sm:$0xf]
      %v215 = vld [vmem:[%s206 + $0x30] sm:$0xf]
      %v216 = vld [vmem:[%s206 + $0x34] sm:$0xf]
      %v217 = vld [vmem:[%s206 + $0x3c] sm:$0xf]
      %v218 = vld [vmem:[%s206 + $0x40] sm:$0xf]
      %v219 = vld [vmem:[%s206 + $0x48] sm:$0xf]
      %v220 = vld [vmem:[%s206 + $0x4c] sm:$0xf]
      %v221 = vld [vmem:[%s206 + $0x54] sm:$0xf]
      %v222 = vld [vmem:[%s206 + $0x58] sm:$0xf]
      %v223 = vld [vmem:[%s206 + $0x60] sm:$0xf]
      %v224 = vld [vmem:[%s206 + $0x64] sm:$0xf]
      %v225 = vld [vmem:[%s206 + $0x6c] sm:$0xf]
      %v226 = vld [vmem:[%s206 + $0x70] sm:$0xf]
      %v227 = vld [vmem:[%s206 + $0x78] sm:$0xf]
      %v228 = vld [vmem:[%s206 + $0x7c] sm:$0xf]
      %v229 = vld [vmem:[%s206 + $0x84] sm:$0xf]
      %v230 = vld [vmem:[%s206 + $0x88] sm:$0xf]
      %v231 = vld [vmem:[%s206 + $0x90] sm:$0xf]
      %v232 = vld [vmem:[%s206 + $0x94] sm:$0xf]
      %v233 = vld [vmem:[%s206 + $0x9c] sm:$0xf]
      %v234 = vld [vmem:[%s206 + $0xa0] sm:$0xf]
      %v235 = vld [vmem:[%s206 + $0xa8] sm:$0xf]
      %v236 = vld [vmem:[%s206 + $0xac] sm:$0xf]
      %v237 = vld [vmem:[%s206 + $0xb4] sm:$0xf]
      %v238 = vld [vmem:[%s206 + $0xb8] sm:$0xf]
      %v239 = vld [vmem:[#allocation2] sm:$0xff]
      %v240 = vld [vmem:[#allocation2 + $0x8] sm:$0xff]
      %v241 = vld [vmem:[%s1] sm:$0xf]
      %v274 = vunpack.c.l.b16 %v207
      %v275 = vunpack.c.l.b16 %v208
      %v276 = vunpack.c.l.b16 %v209
      %v277 = vunpack.c.l.b16 %v210
      %v278 = vunpack.c.l.b16 %v211
      %v279 = vunpack.c.l.b16 %v212
      %v280 = vunpack.c.l.b16 %v213
      %v281 = vunpack.c.l.b16 %v214
      %v282 = vunpack.c.l.b16 %v215
      %v283 = vunpack.c.l.b16 %v216
      %v284 = vunpack.c.l.b16 %v217
      %v285 = vunpack.c.l.b16 %v218
      %v286 = vunpack.c.l.b16 %v219
      %v287 = vunpack.c.l.b16 %v220
      %v288 = vunpack.c.l.b16 %v221
      %v289 = vunpack.c.l.b16 %v222
      %v290 = vunpack.c.l.b16 %v223
      %v291 = vunpack.c.l.b16 %v224
      %v292 = vunpack.c.l.b16 %v225
      %v293 = vunpack.c.l.b16 %v226
      %v294 = vunpack.c.l.b16 %v227
      %v295 = vunpack.c.l.b16 %v228
      %v296 = vunpack.c.l.b16 %v229
      %v297 = vunpack.c.l.b16 %v230
      %v298 = vunpack.c.l.b16 %v231
      %v299 = vunpack.c.l.b16 %v232
      %v300 = vunpack.c.l.b16 %v233
      %v301 = vunpack.c.l.b16 %v234
      %v302 = vunpack.c.l.b16 %v235
      %v303 = vunpack.c.l.b16 %v236
      %v304 = vunpack.c.l.b16 %v237
      %v305 = vunpack.c.l.b16 %v238
      %v306 = vpack.c.b16 %v275, %v274
      %v307 = vpack.c.b16 %v277, %v276
      %v308 = vpack.c.b16 %v279, %v278
      %v309 = vpack.c.b16 %v281, %v280
      %v310 = vpack.c.b16 %v283, %v282
      %v311 = vpack.c.b16 %v285, %v284
      %v312 = vpack.c.b16 %v287, %v286
      %v313 = vpack.c.b16 %v289, %v288
      %v314 = vpack.c.b16 %v291, %v290
      %v315 = vpack.c.b16 %v293, %v292
      %v316 = vpack.c.b16 %v295, %v294
      %v317 = vpack.c.b16 %v297, %v296
      %v318 = vpack.c.b16 %v299, %v298
      %v319 = vpack.c.b16 %v301, %v300
      %v320 = vpack.c.b16 %v303, %v302
      %v321 = vpack.c.b16 %v305, %v304
      %vm322 = vcmask 31744
      %v324 = vsel %vm322, %v241, 0
      %v327 = vsel %vm322, %v306, 0
      %v330 = vsel %vm322, %v307, 0
      %v333 = vsel %vm322, %v308, 0
      %v336 = vsel %vm322, %v309, 0
      %v339 = vsel %vm322, %v310, 0
      %v342 = vsel %vm322, %v311, 0
      %v345 = vsel %vm322, %v312, 0
      %v348 = vsel %vm322, %v313, 0
      %v351 = vsel %vm322, %v314, 0
      %v354 = vsel %vm322, %v315, 0
      %v357 = vsel %vm322, %v316, 0
      %v360 = vsel %vm322, %v317, 0
      %v363 = vsel %vm322, %v318, 0
      %v366 = vsel %vm322, %v319, 0
      %v369 = vsel %vm322, %v320, 0
      %v372 = vsel %vm322, %v321, 0
      %374 = vmatprep.subr.bf16.mxu0 0
      %375 = vmatpush1.bf16.xpose.msra.mxu0 %v327
      %376 = vmatprep.subr.bf16.mxu0 0
      %377 = vmatpush1.bf16.xpose.msra.mxu0 %v330
      %378 = vmatprep.subr.bf16.mxu0 0
      %379 = vmatpush1.bf16.xpose.msra.mxu0 %v333
      %380 = vmatprep.subr.bf16.mxu0 0
      %381 = vmatpush1.bf16.xpose.msra.mxu0 %v336
      %382 = vmatprep.subr.bf16.mxu0 0
      %383 = vmatpush1.bf16.xpose.msra.mxu0 %v339
      %384 = vmatprep.subr.bf16.mxu0 0
      %385 = vmatpush1.bf16.xpose.msra.mxu0 %v342
      %386 = vmatprep.subr.bf16.mxu0 0
      %387 = vmatpush1.bf16.xpose.msra.mxu0 %v345
      %388 = vmatprep.subr.bf16.mxu0 0
      %389 = vmatpush1.bf16.xpose.msra.mxu0 %v348
      %390 = vmatprep.subr.bf16.mxu0 0
      %391 = vmatpush1.bf16.xpose.msra.mxu0 %v351
      %392 = vmatprep.subr.bf16.mxu0 0
      %393 = vmatpush1.bf16.xpose.msra.mxu0 %v354
      %394 = vmatprep.subr.bf16.mxu0 0
      %395 = vmatpush1.bf16.xpose.msra.mxu0 %v357
      %396 = vmatprep.subr.bf16.mxu0 0
      %397 = vmatpush1.bf16.xpose.msra.mxu0 %v360
      %398 = vmatprep.subr.bf16.mxu0 0
      %399 = vmatpush1.bf16.xpose.msra.mxu0 %v363
      %400 = vmatprep.subr.bf16.mxu0 0
      %401 = vmatpush1.bf16.xpose.msra.mxu0 %v366
      %402 = vmatprep.subr.bf16.mxu0 0
      %403 = vmatpush1.bf16.xpose.msra.mxu0 %v369
      %404 = vmatprep.subr.bf16.mxu0 0
      %405 = vmatpush1.bf16.xpose.msra.mxu0 %v372
      %406 = vmatprep.mubr.bf16.mxu0 0
      %407 = vmatmul.mubr.bf16.gmra.mrb[0].mxu0 %v324
      %v408 = vpop.f32.mrb[0].mxu0
      %v409 = vadd.f32 0.0, %v408
      %v410 = vpop.f32.mrb[0].mxu0
      %v411 = vadd.f32 0.0, %v410
      %v412 = vpop.f32.mrb[0].mxu0
      %v413 = vpop.f32.mrb[0].mxu0
      %414 = vdwg.mxu0
      %v415 = vadd.f32 %v239, %v409
      %v416 = vadd.f32 %v240, %v411
      %417 = vst [vmem:[#allocation2] sm:$0xff] %v415
      %418 = vst [vmem:[#allocation2 + $0x8] sm:$0xff] %v416
      %v419 = vld [vmem:[%s206] sm:$0xf]
      %v420 = vld [vmem:[%s206 + $0x4] sm:$0xf]
      %v421 = vld [vmem:[%s206 + $0x8] sm:$0x1]
      %v422 = vld [vmem:[%s206 + $0xc] sm:$0xf]
      %v423 = vld [vmem:[%s206 + $0x10] sm:$0xf]
      %v424 = vld [vmem:[%s206 + $0x14] sm:$0x1]
      %v425 = vld [vmem:[%s206 + $0x18] sm:$0xf]
      %v426 = vld [vmem:[%s206 + $0x1c] sm:$0xf]
      %v427 = vld [vmem:[%s206 + $0x20] sm:$0x1]
      %v428 = vld [vmem:[%s206 + $0x24] sm:$0xf]
      %v429 = vld [vmem:[%s206 + $0x28] sm:$0xf]
      %v430 = vld [vmem:[%s206 + $0x2c] sm:$0x1]
      %v431 = vld [vmem:[%s206 + $0x30] sm:$0xf]
      %v432 = vld [vmem:[%s206 + $0x34] sm:$0xf]
      %v433 = vld [vmem:[%s206 + $0x38] sm:$0x1]
      %v434 = vld [vmem:[%s206 + $0x3c] sm:$0xf]
      %v435 = vld [vmem:[%s206 + $0x40] sm:$0xf]
      %v436 = vld [vmem:[%s206 + $0x44] sm:$0x1]
      %v437 = vld [vmem:[%s206 + $0x48] sm:$0xf]
      %v438 = vld [vmem:[%s206 + $0x4c] sm:$0xf]
      %v439 = vld [vmem:[%s206 + $0x50] sm:$0x1]
      %v440 = vld [vmem:[%s206 + $0x54] sm:$0xf]
      %v441 = vld [vmem:[%s206 + $0x58] sm:$0xf]
      %v442 = vld [vmem:[%s206 + $0x5c] sm:$0x1]
      %v443 = vld [vmem:[%s206 + $0x60] sm:$0xf]
      %v444 = vld [vmem:[%s206 + $0x64] sm:$0xf]
      %v445 = vld [vmem:[%s206 + $0x68] sm:$0x1]
      %v446 = vld [vmem:[%s206 + $0x6c] sm:$0xf]
      %v447 = vld [vmem:[%s206 + $0x70] sm:$0xf]
      %v448 = vld [vmem:[%s206 + $0x74] sm:$0x1]
      %v449 = vld [vmem:[%s206 + $0x78] sm:$0xf]
      %v450 = vld [vmem:[%s206 + $0x7c] sm:$0xf]
      %v451 = vld [vmem:[%s206 + $0x80] sm:$0x1]
      %v452 = vld [vmem:[%s206 + $0x84] sm:$0xf]
      %v453 = vld [vmem:[%s206 + $0x88] sm:$0xf]
      %v454 = vld [vmem:[%s206 + $0x8c] sm:$0x1]
      %v455 = vld [vmem:[%s206 + $0x90] sm:$0xf]
      %v456 = vld [vmem:[%s206 + $0x94] sm:$0xf]
      %v457 = vld [vmem:[%s206 + $0x98] sm:$0x1]
      %v458 = vld [vmem:[%s206 + $0x9c] sm:$0xf]
      %v459 = vld [vmem:[%s206 + $0xa0] sm:$0xf]
      %v460 = vld [vmem:[%s206 + $0xa4] sm:$0x1]
      %v461 = vld [vmem:[%s206 + $0xa8] sm:$0xf]
      %v462 = vld [vmem:[%s206 + $0xac] sm:$0xf]
      %v463 = vld [vmem:[%s206 + $0xb0] sm:$0x1]
      %v464 = vld [vmem:[%s206 + $0xb4] sm:$0xf]
      %v465 = vld [vmem:[%s206 + $0xb8] sm:$0xf]
      %v466 = vld [vmem:[%s206 + $0xbc] sm:$0x1]
      %vm467 = vsmask.f32 3328
      %vm468 = vsmask.f32 7440
      %vm469 = vmor %vm467, %vm468
      %v471 = vshrl.u32 %v419, 16
      %v473 = vrot.slane %v471, 4
      %v474 = vshll.u32 %v419, 16
      %v476 = vrot.slane %v474, 5
      %v477 = vor.u32 %v473, %v476
      %v478 = vrot.slane %v477, 4
      %v480 = vshll.u32 %v420, 16
      %v482 = vrot.slane %v480, 5
      %v483 = vsel %vm469, %v478, %v482
      %v484 = vshrl.u32 %v420, 16
      %v486 = vrot.slane %v484, 4
      %v487 = vor.u32 %v486, %v482
      %v488 = vrot.slane %v487, 4
      %v490 = vshll.u32 %v421, 16
      %v492 = vrot.slane %v490, 5
      %v493 = vsel %vm469, %v488, %v492
      %v495 = vshrl.u32 %v422, 16
      %v497 = vrot.slane %v495, 4
      %v498 = vshll.u32 %v422, 16
      %v500 = vrot.slane %v498, 5
      %v501 = vor.u32 %v497, %v500
      %v502 = vrot.slane %v501, 4
      %v504 = vshll.u32 %v423, 16
      %v506 = vrot.slane %v504, 5
      %v507 = vsel %vm469, %v502, %v506
      %v508 = vshrl.u32 %v423, 16
      %v510 = vrot.slane %v508, 4
      %v511 = vor.u32 %v510, %v506
      %v512 = vrot.slane %v511, 4
      %v514 = vshll.u32 %v424, 16
      %v516 = vrot.slane %v514, 5
      %v517 = vsel %vm469, %v512, %v516
      %v519 = vshrl.u32 %v425, 16
      %v521 = vrot.slane %v519, 4
      %v522 = vshll.u32 %v425, 16
      %v524 = vrot.slane %v522, 5
      %v525 = vor.u32 %v521, %v524
      %v526 = vrot.slane %v525, 4
      %v528 = vshll.u32 %v426, 16
      %v530 = vrot.slane %v528, 5
      %v531 = vsel %vm469, %v526, %v530
      %v532 = vshrl.u32 %v426, 16
      %v534 = vrot.slane %v532, 4
      %v535 = vor.u32 %v534, %v530
      %v536 = vrot.slane %v535, 4
      %v538 = vshll.u32 %v427, 16
      %v540 = vrot.slane %v538, 5
      %v541 = vsel %vm469, %v536, %v540
      %v543 = vshrl.u32 %v428, 16
      %v545 = vrot.slane %v543, 4
      %v546 = vshll.u32 %v428, 16
      %v548 = vrot.slane %v546, 5
      %v549 = vor.u32 %v545, %v548
      %v550 = vrot.slane %v549, 4
      %v552 = vshll.u32 %v429, 16
      %v554 = vrot.slane %v552, 5
      %v555 = vsel %vm469, %v550, %v554
      %v556 = vshrl.u32 %v429, 16
      %v558 = vrot.slane %v556, 4
      %v559 = vor.u32 %v558, %v554
      %v560 = vrot.slane %v559, 4
      %v562 = vshll.u32 %v430, 16
      %v564 = vrot.slane %v562, 5
      %v565 = vsel %vm469, %v560, %v564
      %v567 = vshrl.u32 %v431, 16
      %v569 = vrot.slane %v567, 4
      %v570 = vshll.u32 %v431, 16
      %v572 = vrot.slane %v570, 5
      %v573 = vor.u32 %v569, %v572
      %v574 = vrot.slane %v573, 4
      %v576 = vshll.u32 %v432, 16
      %v578 = vrot.slane %v576, 5
      %v579 = vsel %vm469, %v574, %v578
      %v580 = vshrl.u32 %v432, 16
      %v582 = vrot.slane %v580, 4
      %v583 = vor.u32 %v582, %v578
      %v584 = vrot.slane %v583, 4
      %v586 = vshll.u32 %v433, 16
      %v588 = vrot.slane %v586, 5
      %v589 = vsel %vm469, %v584, %v588
      %v591 = vshrl.u32 %v434, 16
      %v593 = vrot.slane %v591, 4
      %v594 = vshll.u32 %v434, 16
      %v596 = vrot.slane %v594, 5
      %v597 = vor.u32 %v593, %v596
      %v598 = vrot.slane %v597, 4
      %v600 = vshll.u32 %v435, 16
      %v602 = vrot.slane %v600, 5
      %v603 = vsel %vm469, %v598, %v602
      %v604 = vshrl.u32 %v435, 16
      %v606 = vrot.slane %v604, 4
      %v607 = vor.u32 %v606, %v602
      %v608 = vrot.slane %v607, 4
      %v610 = vshll.u32 %v436, 16
      %v612 = vrot.slane %v610, 5
      %v613 = vsel %vm469, %v608, %v612
      %v615 = vshrl.u32 %v437, 16
      %v617 = vrot.slane %v615, 4
      %v618 = vshll.u32 %v437, 16
      %v620 = vrot.slane %v618, 5
      %v621 = vor.u32 %v617, %v620
      %v622 = vrot.slane %v621, 4
      %v624 = vshll.u32 %v438, 16
      %v626 = vrot.slane %v624, 5
      %v627 = vsel %vm469, %v622, %v626
      %v628 = vshrl.u32 %v438, 16
      %v630 = vrot.slane %v628, 4
      %v631 = vor.u32 %v630, %v626
      %v632 = vrot.slane %v631, 4
      %v634 = vshll.u32 %v439, 16
      %v636 = vrot.slane %v634, 5
      %v637 = vsel %vm469, %v632, %v636
      %v639 = vshrl.u32 %v440, 16
      %v641 = vrot.slane %v639, 4
      %v642 = vshll.u32 %v440, 16
      %v644 = vrot.slane %v642, 5
      %v645 = vor.u32 %v641, %v644
      %v646 = vrot.slane %v645, 4
      %v648 = vshll.u32 %v441, 16
      %v650 = vrot.slane %v648, 5
      %v651 = vsel %vm469, %v646, %v650
      %v652 = vshrl.u32 %v441, 16
      %v654 = vrot.slane %v652, 4
      %v655 = vor.u32 %v654, %v650
      %v656 = vrot.slane %v655, 4
      %v658 = vshll.u32 %v442, 16
      %v660 = vrot.slane %v658, 5
      %v661 = vsel %vm469, %v656, %v660
      %v663 = vshrl.u32 %v443, 16
      %v665 = vrot.slane %v663, 4
      %v666 = vshll.u32 %v443, 16
      %v668 = vrot.slane %v666, 5
      %v669 = vor.u32 %v665, %v668
      %v670 = vrot.slane %v669, 4
      %v672 = vshll.u32 %v444, 16
      %v674 = vrot.slane %v672, 5
      %v675 = vsel %vm469, %v670, %v674
      %v676 = vshrl.u32 %v444, 16
      %v678 = vrot.slane %v676, 4
      %v679 = vor.u32 %v678, %v674
      %v680 = vrot.slane %v679, 4
      %v682 = vshll.u32 %v445, 16
      %v684 = vrot.slane %v682, 5
      %v685 = vsel %vm469, %v680, %v684
      %v687 = vshrl.u32 %v446, 16
      %v689 = vrot.slane %v687, 4
      %v690 = vshll.u32 %v446, 16
      %v692 = vrot.slane %v690, 5
      %v693 = vor.u32 %v689, %v692
      %v694 = vrot.slane %v693, 4
      %v696 = vshll.u32 %v447, 16
      %v698 = vrot.slane %v696, 5
      %v699 = vsel %vm469, %v694, %v698
      %v700 = vshrl.u32 %v447, 16
      %v702 = vrot.slane %v700, 4
      %v703 = vor.u32 %v702, %v698
      %v704 = vrot.slane %v703, 4
      %v706 = vshll.u32 %v448, 16
      %v708 = vrot.slane %v706, 5
      %v709 = vsel %vm469, %v704, %v708
      %v711 = vshrl.u32 %v449, 16
      %v713 = vrot.slane %v711, 4
      %v714 = vshll.u32 %v449, 16
      %v716 = vrot.slane %v714, 5
      %v717 = vor.u32 %v713, %v716
      %v718 = vrot.slane %v717, 4
      %v720 = vshll.u32 %v450, 16
      %v722 = vrot.slane %v720, 5
      %v723 = vsel %vm469, %v718, %v722
      %v724 = vshrl.u32 %v450, 16
      %v726 = vrot.slane %v724, 4
      %v727 = vor.u32 %v726, %v722
      %v728 = vrot.slane %v727, 4
      %v730 = vshll.u32 %v451, 16
      %v732 = vrot.slane %v730, 5
      %v733 = vsel %vm469, %v728, %v732
      %v735 = vshrl.u32 %v452, 16
      %v737 = vrot.slane %v735, 4
      %v738 = vshll.u32 %v452, 16
      %v740 = vrot.slane %v738, 5
      %v741 = vor.u32 %v737, %v740
      %v742 = vrot.slane %v741, 4
      %v744 = vshll.u32 %v453, 16
      %v746 = vrot.slane %v744, 5
      %v747 = vsel %vm469, %v742, %v746
      %v748 = vshrl.u32 %v453, 16
      %v750 = vrot.slane %v748, 4
      %v751 = vor.u32 %v750, %v746
      %v752 = vrot.slane %v751, 4
      %v754 = vshll.u32 %v454, 16
      %v756 = vrot.slane %v754, 5
      %v757 = vsel %vm469, %v752, %v756
      %v759 = vshrl.u32 %v455, 16
      %v761 = vrot.slane %v759, 4
      %v762 = vshll.u32 %v455, 16
      %v764 = vrot.slane %v762, 5
      %v765 = vor.u32 %v761, %v764
      %v766 = vrot.slane %v765, 4
      %v768 = vshll.u32 %v456, 16
      %v770 = vrot.slane %v768, 5
      %v771 = vsel %vm469, %v766, %v770
      %v772 = vshrl.u32 %v456, 16
      %v774 = vrot.slane %v772, 4
      %v775 = vor.u32 %v774, %v770
      %v776 = vrot.slane %v775, 4
      %v778 = vshll.u32 %v457, 16
      %v780 = vrot.slane %v778, 5
      %v781 = vsel %vm469, %v776, %v780
      %v783 = vshrl.u32 %v458, 16
      %v785 = vrot.slane %v783, 4
      %v786 = vshll.u32 %v458, 16
      %v788 = vrot.slane %v786, 5
      %v789 = vor.u32 %v785, %v788
      %v790 = vrot.slane %v789, 4
      %v792 = vshll.u32 %v459, 16
      %v794 = vrot.slane %v792, 5
      %v795 = vsel %vm469, %v790, %v794
      %v796 = vshrl.u32 %v459, 16
      %v798 = vrot.slane %v796, 4
      %v799 = vor.u32 %v798, %v794
      %v800 = vrot.slane %v799, 4
      %v802 = vshll.u32 %v460, 16
      %v804 = vrot.slane %v802, 5
      %v805 = vsel %vm469, %v800, %v804
      %v807 = vshrl.u32 %v461, 16
      %v809 = vrot.slane %v807, 4
      %v810 = vshll.u32 %v461, 16
      %v812 = vrot.slane %v810, 5
      %v813 = vor.u32 %v809, %v812
      %v814 = vrot.slane %v813, 4
      %v816 = vshll.u32 %v462, 16
      %v818 = vrot.slane %v816, 5
      %v819 = vsel %vm469, %v814, %v818
      %v820 = vshrl.u32 %v462, 16
      %v822 = vrot.slane %v820, 4
      %v823 = vor.u32 %v822, %v818
      %v824 = vrot.slane %v823, 4
      %v826 = vshll.u32 %v463, 16
      %v828 = vrot.slane %v826, 5
      %v829 = vsel %vm469, %v824, %v828
      %v831 = vshrl.u32 %v464, 16
      %v833 = vrot.slane %v831, 4
      %v834 = vshll.u32 %v464, 16
      %v836 = vrot.slane %v834, 5
      %v837 = vor.u32 %v833, %v836
      %v838 = vrot.slane %v837, 4
      %v840 = vshll.u32 %v465, 16
      %v842 = vrot.slane %v840, 5
      %v843 = vsel %vm469, %v838, %v842
      %v844 = vshrl.u32 %v465, 16
      %v846 = vrot.slane %v844, 4
      %v847 = vor.u32 %v846, %v842
      %v848 = vrot.slane %v847, 4
      %v850 = vshll.u32 %v466, 16
      %v852 = vrot.slane %v850, 5
      %v853 = vsel %vm469, %v848, %v852
      %v854 = vld [vmem:[#allocation2] sm:$0xff]
      %v855 = vld [vmem:[#allocation2 + $0x8] sm:$0xff]
      %s856 = scalar_lea.vmem %s1, 4
      %v857 = vld [vmem:[%s856] sm:$0xf]
      %v858 = vunpack.c.l.b16 %v483
      %v859 = vunpack.c.l.b16 %v493
      %v860 = vunpack.c.l.b16 %v507
      %v861 = vunpack.c.l.b16 %v517
      %v862 = vunpack.c.l.b16 %v531
      %v863 = vunpack.c.l.b16 %v541
      %v864 = vunpack.c.l.b16 %v555
      %v865 = vunpack.c.l.b16 %v565
      %v866 = vunpack.c.l.b16 %v579
      %v867 = vunpack.c.l.b16 %v589
      %v868 = vunpack.c.l.b16 %v603
      %v869 = vunpack.c.l.b16 %v613
      %v870 = vunpack.c.l.b16 %v627
      %v871 = vunpack.c.l.b16 %v637
      %v872 = vunpack.c.l.b16 %v651
      %v873 = vunpack.c.l.b16 %v661
      %v874 = vunpack.c.l.b16 %v675
      %v875 = vunpack.c.l.b16 %v685
      %v876 = vunpack.c.l.b16 %v699
      %v877 = vunpack.c.l.b16 %v709
      %v878 = vunpack.c.l.b16 %v723
      %v879 = vunpack.c.l.b16 %v733
      %v880 = vunpack.c.l.b16 %v747
      %v881 = vunpack.c.l.b16 %v757
      %v882 = vunpack.c.l.b16 %v771
      %v883 = vunpack.c.l.b16 %v781
      %v884 = vunpack.c.l.b16 %v795
      %v885 = vunpack.c.l.b16 %v805
      %v886 = vunpack.c.l.b16 %v819
      %v887 = vunpack.c.l.b16 %v829
      %v888 = vunpack.c.l.b16 %v843
      %v889 = vunpack.c.l.b16 %v853
      %v890 = vpack.c.b16 %v859, %v858
      %v891 = vpack.c.b16 %v861, %v860
      %v892 = vpack.c.b16 %v863, %v862
      %v893 = vpack.c.b16 %v865, %v864
      %v894 = vpack.c.b16 %v867, %v866
      %v895 = vpack.c.b16 %v869, %v868
      %v896 = vpack.c.b16 %v871, %v870
      %v897 = vpack.c.b16 %v873, %v872
      %v898 = vpack.c.b16 %v875, %v874
      %v899 = vpack.c.b16 %v877, %v876
      %v900 = vpack.c.b16 %v879, %v878
      %v901 = vpack.c.b16 %v881, %v880
      %v902 = vpack.c.b16 %v883, %v882
      %v903 = vpack.c.b16 %v885, %v884
      %v904 = vpack.c.b16 %v887, %v886
      %v905 = vpack.c.b16 %v889, %v888
      %v907 = vsel %vm322, %v857, 0
      %v910 = vsel %vm322, %v890, 0
      %v913 = vsel %vm322, %v891, 0
      %v916 = vsel %vm322, %v892, 0
      %v919 = vsel %vm322, %v893, 0
      %v922 = vsel %vm322, %v894, 0
      %v925 = vsel %vm322, %v895, 0
      %v928 = vsel %vm322, %v896, 0
      %v931 = vsel %vm322, %v897, 0
      %v934 = vsel %vm322, %v898, 0
      %v937 = vsel %vm322, %v899, 0
      %v940 = vsel %vm322, %v900, 0
      %v943 = vsel %vm322, %v901, 0
      %v946 = vsel %vm322, %v902, 0
      %v949 = vsel %vm322, %v903, 0
      %v952 = vsel %vm322, %v904, 0
      %v955 = vsel %vm322, %v905, 0
      %957 = vmatprep.subr.bf16.mxu0 0
      %958 = vmatpush1.bf16.xpose.msra.mxu0 %v910
      %959 = vmatprep.subr.bf16.mxu0 0
      %960 = vmatpush1.bf16.xpose.msra.mxu0 %v913
      %961 = vmatprep.subr.bf16.mxu0 0
      %962 = vmatpush1.bf16.xpose.msra.mxu0 %v916
      %963 = vmatprep.subr.bf16.mxu0 0
      %964 = vmatpush1.bf16.xpose.msra.mxu0 %v919
      %965 = vmatprep.subr.bf16.mxu0 0
      %966 = vmatpush1.bf16.xpose.msra.mxu0 %v922
      %967 = vmatprep.subr.bf16.mxu0 0
      %968 = vmatpush1.bf16.xpose.msra.mxu0 %v925
      %969 = vmatprep.subr.bf16.mxu0 0
      %970 = vmatpush1.bf16.xpose.msra.mxu0 %v928
      %971 = vmatprep.subr.bf16.mxu0 0
      %972 = vmatpush1.bf16.xpose.msra.mxu0 %v931
      %973 = vmatprep.subr.bf16.mxu0 0
      %974 = vmatpush1.bf16.xpose.msra.mxu0 %v934
      %975 = vmatprep.subr.bf16.mxu0 0
      %976 = vmatpush1.bf16.xpose.msra.mxu0 %v937
      %977 = vmatprep.subr.bf16.mxu0 0
      %978 = vmatpush1.bf16.xpose.msra.mxu0 %v940
      %979 = vmatprep.subr.bf16.mxu0 0
      %980 = vmatpush1.bf16.xpose.msra.mxu0 %v943
      %981 = vmatprep.subr.bf16.mxu0 0
      %982 = vmatpush1.bf16.xpose.msra.mxu0 %v946
      %983 = vmatprep.subr.bf16.mxu0 0
      %984 = vmatpush1.bf16.xpose.msra.mxu0 %v949
      %985 = vmatprep.subr.bf16.mxu0 0
      %986 = vmatpush1.bf16.xpose.msra.mxu0 %v952
      %987 = vmatprep.subr.bf16.mxu0 0
      %988 = vmatpush1.bf16.xpose.msra.mxu0 %v955
      %989 = vmatprep.mubr.bf16.mxu0 0
      %990 = vmatmul.mubr.bf16.gmra.mrb[0].mxu0 %v907
      %v991 = vpop.f32.mrb[0].mxu0
      %v992 = vadd.f32 0.0, %v991
      %v993 = vpop.f32.mrb[0].mxu0
      %v994 = vadd.f32 0.0, %v993
      %v995 = vpop.f32.mrb[0].mxu0
      %v996 = vpop.f32.mrb[0].mxu0
      %997 = vdwg.mxu0
      %v998 = vadd.f32 %v854, %v992
      %v999 = vadd.f32 %v855, %v994
      %1000 = vst [vmem:[#allocation2] sm:$0xff] %v998
      %1001 = vst [vmem:[#allocation2 + $0x8] sm:$0xff] %v999
      %v1002 = vld [vmem:[%s206] sm:$0xe]
      %v1003 = vld [vmem:[%s206 + $0x4] sm:$0xf]
      %v1004 = vld [vmem:[%s206 + $0x8] sm:$0x1]
      %v1005 = vld [vmem:[%s206 + $0xc] sm:$0xe]
      %v1006 = vld [vmem:[%s206 + $0x10] sm:$0xf]
      %v1007 = vld [vmem:[%s206 + $0x14] sm:$0x1]
      %v1008 = vld [vmem:[%s206 + $0x18] sm:$0xe]
      %v1009 = vld [vmem:[%s206 + $0x1c] sm:$0xf]
      %v1010 = vld [vmem:[%s206 + $0x20] sm:$0x1]
      %v1011 = vld [vmem:[%s206 + $0x24] sm:$0xe]
      %v1012 = vld [vmem:[%s206 + $0x28] sm:$0xf]
      %v1013 = vld [vmem:[%s206 + $0x2c] sm:$0x1]
      %v1014 = vld [vmem:[%s206 + $0x30] sm:$0xe]
      %v1015 = vld [vmem:[%s206 + $0x34] sm:$0xf]
      %v1016 = vld [vmem:[%s206 + $0x38] sm:$0x1]
      %v1017 = vld [vmem:[%s206 + $0x3c] sm:$0xe]
      %v1018 = vld [vmem:[%s206 + $0x40] sm:$0xf]
      %v1019 = vld [vmem:[%s206 + $0x44] sm:$0x1]
      %v1020 = vld [vmem:[%s206 + $0x48] sm:$0xe]
      %v1021 = vld [vmem:[%s206 + $0x4c] sm:$0xf]
      %v1022 = vld [vmem:[%s206 + $0x50] sm:$0x1]
      %v1023 = vld [vmem:[%s206 + $0x54] sm:$0xe]
      %v1024 = vld [vmem:[%s206 + $0x58] sm:$0xf]
      %v1025 = vld [vmem:[%s206 + $0x5c] sm:$0x1]
      %v1026 = vld [vmem:[%s206 + $0x60] sm:$0xe]
      %v1027 = vld [vmem:[%s206 + $0x64] sm:$0xf]
      %v1028 = vld [vmem:[%s206 + $0x68] sm:$0x1]
      %v1029 = vld [vmem:[%s206 + $0x6c] sm:$0xe]
      %v1030 = vld [vmem:[%s206 + $0x70] sm:$0xf]
      %v1031 = vld [vmem:[%s206 + $0x74] sm:$0x1]
      %v1032 = vld [vmem:[%s206 + $0x78] sm:$0xe]
      %v1033 = vld [vmem:[%s206 + $0x7c] sm:$0xf]
      %v1034 = vld [vmem:[%s206 + $0x80] sm:$0x1]
      %v1035 = vld [vmem:[%s206 + $0x84] sm:$0xe]
      %v1036 = vld [vmem:[%s206 + $0x88] sm:$0xf]
      %v1037 = vld [vmem:[%s206 + $0x8c] sm:$0x1]
      %v1038 = vld [vmem:[%s206 + $0x90] sm:$0xe]
      %v1039 = vld [vmem:[%s206 + $0x94] sm:$0xf]
      %v1040 = vld [vmem:[%s206 + $0x98] sm:$0x1]
      %v1041 = vld [vmem:[%s206 + $0x9c] sm:$0xe]
      %v1042 = vld [vmem:[%s206 + $0xa0] sm:$0xf]
      %v1043 = vld [vmem:[%s206 + $0xa4] sm:$0x1]
      %v1044 = vld [vmem:[%s206 + $0xa8] sm:$0xe]
      %v1045 = vld [vmem:[%s206 + $0xac] sm:$0xf]
      %v1046 = vld [vmem:[%s206 + $0xb0] sm:$0x1]
      %v1047 = vld [vmem:[%s206 + $0xb4] sm:$0xe]
      %v1048 = vld [vmem:[%s206 + $0xb8] sm:$0xf]
      %v1049 = vld [vmem:[%s206 + $0xbc] sm:$0x1]
      %vm1098 = vcmask 1042432
      %vm1099 = vcmask 1046532
      %vm1100 = vmor %vm1098, %vm1099
      %v1101 = vrot.slane %v1002, 5
      %v1102 = vrot.slane %v1101, 4
      %v1103 = vrot.slane %v1003, 5
      %v1104 = vsel %vm1100, %v1102, %v1103
      %v1105 = vrot.slane %v1103, 4
      %v1106 = vrot.slane %v1004, 5
      %v1107 = vsel %vm1100, %v1105, %v1106
      %v1108 = vrot.slane %v1005, 5
      %v1109 = vrot.slane %v1108, 4
      %v1110 = vrot.slane %v1006, 5
      %v1111 = vsel %vm1100, %v1109, %v1110
      %v1112 = vrot.slane %v1110, 4
      %v1113 = vrot.slane %v1007, 5
      %v1114 = vsel %vm1100, %v1112, %v1113
      %v1115 = vrot.slane %v1008, 5
      %v1116 = vrot.slane %v1115, 4
      %v1117 = vrot.slane %v1009, 5
      %v1118 = vsel %vm1100, %v1116, %v1117
      %v1119 = vrot.slane %v1117, 4
      %v1120 = vrot.slane %v1010, 5
      %v1121 = vsel %vm1100, %v1119, %v1120
      %v1122 = vrot.slane %v1011, 5
      %v1123 = vrot.slane %v1122, 4
      %v1124 = vrot.slane %v1012, 5
      %v1125 = vsel %vm1100, %v1123, %v1124
      %v1126 = vrot.slane %v1124, 4
      %v1127 = vrot.slane %v1013, 5
      %v1128 = vsel %vm1100, %v1126, %v1127
      %v1129 = vrot.slane %v1014, 5
      %v1130 = vrot.slane %v1129, 4
      %v1131 = vrot.slane %v1015, 5
      %v1132 = vsel %vm1100, %v1130, %v1131
      %v1133 = vrot.slane %v1131, 4
      %v1134 = vrot.slane %v1016, 5
      %v1135 = vsel %vm1100, %v1133, %v1134
      %v1136 = vrot.slane %v1017, 5
      %v1137 = vrot.slane %v1136, 4
      %v1138 = vrot.slane %v1018, 5
      %v1139 = vsel %vm1100, %v1137, %v1138
      %v1140 = vrot.slane %v1138, 4
      %v1141 = vrot.slane %v1019, 5
      %v1142 = vsel %vm1100, %v1140, %v1141
      %v1143 = vrot.slane %v1020, 5
      %v1144 = vrot.slane %v1143, 4
      %v1145 = vrot.slane %v1021, 5
      %v1146 = vsel %vm1100, %v1144, %v1145
      %v1147 = vrot.slane %v1145, 4
      %v1148 = vrot.slane %v1022, 5
      %v1149 = vsel %vm1100, %v1147, %v1148
      %v1150 = vrot.slane %v1023, 5
      %v1151 = vrot.slane %v1150, 4
      %v1152 = vrot.slane %v1024, 5
      %v1153 = vsel %vm1100, %v1151, %v1152
      %v1154 = vrot.slane %v1152, 4
      %v1155 = vrot.slane %v1025, 5
      %v1156 = vsel %vm1100, %v1154, %v1155
      %v1157 = vrot.slane %v1026, 5
      %v1158 = vrot.slane %v1157, 4
      %v1159 = vrot.slane %v1027, 5
      %v1160 = vsel %vm1100, %v1158, %v1159
      %v1161 = vrot.slane %v1159, 4
      %v1162 = vrot.slane %v1028, 5
      %v1163 = vsel %vm1100, %v1161, %v1162
      %v1164 = vrot.slane %v1029, 5
      %v1165 = vrot.slane %v1164, 4
      %v1166 = vrot.slane %v1030, 5
      %v1167 = vsel %vm1100, %v1165, %v1166
      %v1168 = vrot.slane %v1166, 4
      %v1169 = vrot.slane %v1031, 5
      %v1170 = vsel %vm1100, %v1168, %v1169
      %v1171 = vrot.slane %v1032, 5
      %v1172 = vrot.slane %v1171, 4
      %v1173 = vrot.slane %v1033, 5
      %v1174 = vsel %vm1100, %v1172, %v1173
      %v1175 = vrot.slane %v1173, 4
      %v1176 = vrot.slane %v1034, 5
      %v1177 = vsel %vm1100, %v1175, %v1176
      %v1178 = vrot.slane %v1035, 5
      %v1179 = vrot.slane %v1178, 4
      %v1180 = vrot.slane %v1036, 5
      %v1181 = vsel %vm1100, %v1179, %v1180
      %v1182 = vrot.slane %v1180, 4
      %v1183 = vrot.slane %v1037, 5
      %v1184 = vsel %vm1100, %v1182, %v1183
      %v1185 = vrot.slane %v1038, 5
      %v1186 = vrot.slane %v1185, 4
      %v1187 = vrot.slane %v1039, 5
      %v1188 = vsel %vm1100, %v1186, %v1187
      %v1189 = vrot.slane %v1187, 4
      %v1190 = vrot.slane %v1040, 5
      %v1191 = vsel %vm1100, %v1189, %v1190
      %v1192 = vrot.slane %v1041, 5
      %v1193 = vrot.slane %v1192, 4
      %v1194 = vrot.slane %v1042, 5
      %v1195 = vsel %vm1100, %v1193, %v1194
      %v1196 = vrot.slane %v1194, 4
      %v1197 = vrot.slane %v1043, 5
      %v1198 = vsel %vm1100, %v1196, %v1197
      %v1199 = vrot.slane %v1044, 5
      %v1200 = vrot.slane %v1199, 4
      %v1201 = vrot.slane %v1045, 5
      %v1202 = vsel %vm1100, %v1200, %v1201
      %v1203 = vrot.slane %v1201, 4
      %v1204 = vrot.slane %v1046, 5
      %v1205 = vsel %vm1100, %v1203, %v1204
      %v1206 = vrot.slane %v1047, 5
      %v1207 = vrot.slane %v1206, 4
      %v1208 = vrot.slane %v1048, 5
      %v1209 = vsel %vm1100, %v1207, %v1208
      %v1210 = vrot.slane %v1208, 4
      %v1211 = vrot.slane %v1049, 5
      %v1212 = vsel %vm1100, %v1210, %v1211
      %v1213 = vld [vmem:[#allocation2] sm:$0xff]
      %v1214 = vld [vmem:[#allocation2 + $0x8] sm:$0xff]
      %s1215 = scalar_lea.vmem %s1, 8
      %v1216 = vld [vmem:[%s1215] sm:$0xf]
      %v1217 = vunpack.c.l.b16 %v1104
      %v1218 = vunpack.c.l.b16 %v1107
      %v1219 = vunpack.c.l.b16 %v1111
      %v1220 = vunpack.c.l.b16 %v1114
      %v1221 = vunpack.c.l.b16 %v1118
      %v1222 = vunpack.c.l.b16 %v1121
      %v1223 = vunpack.c.l.b16 %v1125
      %v1224 = vunpack.c.l.b16 %v1128
      %v1225 = vunpack.c.l.b16 %v1132
      %v1226 = vunpack.c.l.b16 %v1135
      %v1227 = vunpack.c.l.b16 %v1139
      %v1228 = vunpack.c.l.b16 %v1142
      %v1229 = vunpack.c.l.b16 %v1146
      %v1230 = vunpack.c.l.b16 %v1149
      %v1231 = vunpack.c.l.b16 %v1153
      %v1232 = vunpack.c.l.b16 %v1156
      %v1233 = vunpack.c.l.b16 %v1160
      %v1234 = vunpack.c.l.b16 %v1163
      %v1235 = vunpack.c.l.b16 %v1167
      %v1236 = vunpack.c.l.b16 %v1170
      %v1237 = vunpack.c.l.b16 %v1174
      %v1238 = vunpack.c.l.b16 %v1177
      %v1239 = vunpack.c.l.b16 %v1181
      %v1240 = vunpack.c.l.b16 %v1184
      %v1241 = vunpack.c.l.b16 %v1188
      %v1242 = vunpack.c.l.b16 %v1191
      %v1243 = vunpack.c.l.b16 %v1195
      %v1244 = vunpack.c.l.b16 %v1198
      %v1245 = vunpack.c.l.b16 %v1202
      %v1246 = vunpack.c.l.b16 %v1205
      %v1247 = vunpack.c.l.b16 %v1209
      %v1248 = vunpack.c.l.b16 %v1212
      %v1249 = vpack.c.b16 %v1218, %v1217
      %v1250 = vpack.c.b16 %v1220, %v1219
      %v1251 = vpack.c.b16 %v1222, %v1221
      %v1252 = vpack.c.b16 %v1224, %v1223
      %v1253 = vpack.c.b16 %v1226, %v1225
      %v1254 = vpack.c.b16 %v1228, %v1227
      %v1255 = vpack.c.b16 %v1230, %v1229
      %v1256 = vpack.c.b16 %v1232, %v1231
      %v1257 = vpack.c.b16 %v1234, %v1233
      %v1258 = vpack.c.b16 %v1236, %v1235
      %v1259 = vpack.c.b16 %v1238, %v1237
      %v1260 = vpack.c.b16 %v1240, %v1239
      %v1261 = vpack.c.b16 %v1242, %v1241
      %v1262 = vpack.c.b16 %v1244, %v1243
      %v1263 = vpack.c.b16 %v1246, %v1245
      %v1264 = vpack.c.b16 %v1248, %v1247
      %v1266 = vsel %vm322, %v1216, 0
      %v1269 = vsel %vm322, %v1249, 0
      %v1272 = vsel %vm322, %v1250, 0
      %v1275 = vsel %vm322, %v1251, 0
      %v1278 = vsel %vm322, %v1252, 0
      %v1281 = vsel %vm322, %v1253, 0
      %v1284 = vsel %vm322, %v1254, 0
      %v1287 = vsel %vm322, %v1255, 0
      %v1290 = vsel %vm322, %v1256, 0
      %v1293 = vsel %vm322, %v1257, 0
      %v1296 = vsel %vm322, %v1258, 0
      %v1299 = vsel %vm322, %v1259, 0
      %v1302 = vsel %vm322, %v1260, 0
      %v1305 = vsel %vm322, %v1261, 0
      %v1308 = vsel %vm322, %v1262, 0
      %v1311 = vsel %vm322, %v1263, 0
      %v1314 = vsel %vm322, %v1264, 0
      %1316 = vmatprep.subr.bf16.mxu0 0
      %1317 = vmatpush1.bf16.xpose.msra.mxu0 %v1269
      %1318 = vmatprep.subr.bf16.mxu0 0
      %1319 = vmatpush1.bf16.xpose.msra.mxu0 %v1272
      %1320 = vmatprep.subr.bf16.mxu0 0
      %1321 = vmatpush1.bf16.xpose.msra.mxu0 %v1275
      %1322 = vmatprep.subr.bf16.mxu0 0
      %1323 = vmatpush1.bf16.xpose.msra.mxu0 %v1278
      %1324 = vmatprep.subr.bf16.mxu0 0
      %1325 = vmatpush1.bf16.xpose.msra.mxu0 %v1281
      %1326 = vmatprep.subr.bf16.mxu0 0
      %1327 = vmatpush1.bf16.xpose.msra.mxu0 %v1284
      %1328 = vmatprep.subr.bf16.mxu0 0
      %1329 = vmatpush1.bf16.xpose.msra.mxu0 %v1287
      %1330 = vmatprep.subr.bf16.mxu0 0
      %1331 = vmatpush1.bf16.xpose.msra.mxu0 %v1290
      %1332 = vmatprep.subr.bf16.mxu0 0
      %1333 = vmatpush1.bf16.xpose.msra.mxu0 %v1293
      %1334 = vmatprep.subr.bf16.mxu0 0
      %1335 = vmatpush1.bf16.xpose.msra.mxu0 %v1296
      %1336 = vmatprep.subr.bf16.mxu0 0
      %1337 = vmatpush1.bf16.xpose.msra.mxu0 %v1299
      %1338 = vmatprep.subr.bf16.mxu0 0
      %1339 = vmatpush1.bf16.xpose.msra.mxu0 %v1302
      %1340 = vmatprep.subr.bf16.mxu0 0
      %1341 = vmatpush1.bf16.xpose.msra.mxu0 %v1305
      %1342 = vmatprep.subr.bf16.mxu0 0
      %1343 = vmatpush1.bf16.xpose.msra.mxu0 %v1308
      %1344 = vmatprep.subr.bf16.mxu0 0
      %1345 = vmatpush1.bf16.xpose.msra.mxu0 %v1311
      %1346 = vmatprep.subr.bf16.mxu0 0
      %1347 = vmatpush1.bf16.xpose.msra.mxu0 %v1314
      %1348 = vmatprep.mubr.bf16.mxu0 0
      %1349 = vmatmul.mubr.bf16.gmra.mrb[0].mxu0 %v1266
      %v1350 = vpop.f32.mrb[0].mxu0
      %v1351 = vadd.f32 0.0, %v1350
      %v1352 = vpop.f32.mrb[0].mxu0
      %v1353 = vadd.f32 0.0, %v1352
      %v1354 = vpop.f32.mrb[0].mxu0
      %v1355 = vpop.f32.mrb[0].mxu0
      %1356 = vdwg.mxu0
      %v1357 = vadd.f32 %v1213, %v1351
      %v1358 = vadd.f32 %v1214, %v1353
      %1359 = vst [vmem:[#allocation2] sm:$0xff] %v1357
      %1360 = vst [vmem:[#allocation2 + $0x8] sm:$0xff] %v1358
      %s1361 = sadd.s32 %s195, 1
      %s1362 = smul.u32 %s1361, 3
      %s1363 = smul.addr %s1362, 4
      %s1364 = scalar_lea.vmem %s183, %s1363
      %v1365 = vld [vmem:[%s1364] sm:$0xf]
      %v1366 = vld [vmem:[%s1364 + $0x4] sm:$0xf]
      %v1367 = vld [vmem:[%s1364 + $0xc] sm:$0xf]
      %v1368 = vld [vmem:[%s1364 + $0x10] sm:$0xf]
      %v1369 = vld [vmem:[%s1364 + $0x18] sm:$0xf]
      %v1370 = vld [vmem:[%s1364 + $0x1c] sm:$0xf]
      %v1371 = vld [vmem:[%s1364 + $0x24] sm:$0xf]
      %v1372 = vld [vmem:[%s1364 + $0x28] sm:$0xf]
      %v1373 = vld [vmem:[%s1364 + $0x30] sm:$0xf]
      %v1374 = vld [vmem:[%s1364 + $0x34] sm:$0xf]
      %v1375 = vld [vmem:[%s1364 + $0x3c] sm:$0xf]
      %v1376 = vld [vmem:[%s1364 + $0x40] sm:$0xf]
      %v1377 = vld [vmem:[%s1364 + $0x48] sm:$0xf]
      %v1378 = vld [vmem:[%s1364 + $0x4c] sm:$0xf]
      %v1379 = vld [vmem:[%s1364 + $0x54] sm:$0xf]
      %v1380 = vld [vmem:[%s1364 + $0x58] sm:$0xf]
      %v1381 = vld [vmem:[%s1364 + $0x60] sm:$0xf]
      %v1382 = vld [vmem:[%s1364 + $0x64] sm:$0xf]
      %v1383 = vld [vmem:[%s1364 + $0x6c] sm:$0xf]
      %v1384 = vld [vmem:[%s1364 + $0x70] sm:$0xf]
      %v1385 = vld [vmem:[%s1364 + $0x78] sm:$0xf]
      %v1386 = vld [vmem:[%s1364 + $0x7c] sm:$0xf]
      %v1387 = vld [vmem:[%s1364 + $0x84] sm:$0xf]
      %v1388 = vld [vmem:[%s1364 + $0x88] sm:$0xf]
      %v1389 = vld [vmem:[%s1364 + $0x90] sm:$0xf]
      %v1390 = vld [vmem:[%s1364 + $0x94] sm:$0xf]
      %v1391 = vld [vmem:[%s1364 + $0x9c] sm:$0xf]
      %v1392 = vld [vmem:[%s1364 + $0xa0] sm:$0xf]
      %v1393 = vld [vmem:[%s1364 + $0xa8] sm:$0xf]
      %v1394 = vld [vmem:[%s1364 + $0xac] sm:$0xf]
      %v1395 = vld [vmem:[%s1364 + $0xb4] sm:$0xf]
      %v1396 = vld [vmem:[%s1364 + $0xb8] sm:$0xf]
      %v1397 = vld [vmem:[#allocation2] sm:$0xff]
      %v1398 = vld [vmem:[#allocation2 + $0x8] sm:$0xff]
      %s1399 = scalar_lea.vmem %s1, 12
      %v1400 = vld [vmem:[%s1399] sm:$0xf]
      %v1433 = vunpack.c.l.b16 %v1365
      %v1434 = vunpack.c.l.b16 %v1366
      %v1435 = vunpack.c.l.b16 %v1367
      %v1436 = vunpack.c.l.b16 %v1368
      %v1437 = vunpack.c.l.b16 %v1369
      %v1438 = vunpack.c.l.b16 %v1370
      %v1439 = vunpack.c.l.b16 %v1371
      %v1440 = vunpack.c.l.b16 %v1372
      %v1441 = vunpack.c.l.b16 %v1373
      %v1442 = vunpack.c.l.b16 %v1374
      %v1443 = vunpack.c.l.b16 %v1375
      %v1444 = vunpack.c.l.b16 %v1376
      %v1445 = vunpack.c.l.b16 %v1377
      %v1446 = vunpack.c.l.b16 %v1378
      %v1447 = vunpack.c.l.b16 %v1379
      %v1448 = vunpack.c.l.b16 %v1380
      %v1449 = vunpack.c.l.b16 %v1381
      %v1450 = vunpack.c.l.b16 %v1382
      %v1451 = vunpack.c.l.b16 %v1383
      %v1452 = vunpack.c.l.b16 %v1384
      %v1453 = vunpack.c.l.b16 %v1385
      %v1454 = vunpack.c.l.b16 %v1386
      %v1455 = vunpack.c.l.b16 %v1387
      %v1456 = vunpack.c.l.b16 %v1388
      %v1457 = vunpack.c.l.b16 %v1389
      %v1458 = vunpack.c.l.b16 %v1390
      %v1459 = vunpack.c.l.b16 %v1391
      %v1460 = vunpack.c.l.b16 %v1392
      %v1461 = vunpack.c.l.b16 %v1393
      %v1462 = vunpack.c.l.b16 %v1394
      %v1463 = vunpack.c.l.b16 %v1395
      %v1464 = vunpack.c.l.b16 %v1396
      %v1465 = vpack.c.b16 %v1434, %v1433
      %v1466 = vpack.c.b16 %v1436, %v1435
      %v1467 = vpack.c.b16 %v1438, %v1437
      %v1468 = vpack.c.b16 %v1440, %v1439
      %v1469 = vpack.c.b16 %v1442, %v1441
      %v1470 = vpack.c.b16 %v1444, %v1443
      %v1471 = vpack.c.b16 %v1446, %v1445
      %v1472 = vpack.c.b16 %v1448, %v1447
      %v1473 = vpack.c.b16 %v1450, %v1449
      %v1474 = vpack.c.b16 %v1452, %v1451
      %v1475 = vpack.c.b16 %v1454, %v1453
      %v1476 = vpack.c.b16 %v1456, %v1455
      %v1477 = vpack.c.b16 %v1458, %v1457
      %v1478 = vpack.c.b16 %v1460, %v1459
      %v1479 = vpack.c.b16 %v1462, %v1461
      %v1480 = vpack.c.b16 %v1464, %v1463
      %v1482 = vsel %vm322, %v1400, 0
      %v1485 = vsel %vm322, %v1465, 0
      %v1488 = vsel %vm322, %v1466, 0
      %v1491 = vsel %vm322, %v1467, 0
      %v1494 = vsel %vm322, %v1468, 0
      %v1497 = vsel %vm322, %v1469, 0
      %v1500 = vsel %vm322, %v1470, 0
      %v1503 = vsel %vm322, %v1471, 0
      %v1506 = vsel %vm322, %v1472, 0
      %v1509 = vsel %vm322, %v1473, 0
      %v1512 = vsel %vm322, %v1474, 0
      %v1515 = vsel %vm322, %v1475, 0
      %v1518 = vsel %vm322, %v1476, 0
      %v1521 = vsel %vm322, %v1477, 0
      %v1524 = vsel %vm322, %v1478, 0
      %v1527 = vsel %vm322, %v1479, 0
      %v1530 = vsel %vm322, %v1480, 0
      %1532 = vmatprep.subr.bf16.mxu0 0
      %1533 = vmatpush1.bf16.xpose.msra.mxu0 %v1485
      %1534 = vmatprep.subr.bf16.mxu0 0
      %1535 = vmatpush1.bf16.xpose.msra.mxu0 %v1488
      %1536 = vmatprep.subr.bf16.mxu0 0
      %1537 = vmatpush1.bf16.xpose.msra.mxu0 %v1491
      %1538 = vmatprep.subr.bf16.mxu0 0
      %1539 = vmatpush1.bf16.xpose.msra.mxu0 %v1494
      %1540 = vmatprep.subr.bf16.mxu0 0
      %1541 = vmatpush1.bf16.xpose.msra.mxu0 %v1497
      %1542 = vmatprep.subr.bf16.mxu0 0
      %1543 = vmatpush1.bf16.xpose.msra.mxu0 %v1500
      %1544 = vmatprep.subr.bf16.mxu0 0
      %1545 = vmatpush1.bf16.xpose.msra.mxu0 %v1503
      %1546 = vmatprep.subr.bf16.mxu0 0
      %1547 = vmatpush1.bf16.xpose.msra.mxu0 %v1506
      %1548 = vmatprep.subr.bf16.mxu0 0
      %1549 = vmatpush1.bf16.xpose.msra.mxu0 %v1509
      %1550 = vmatprep.subr.bf16.mxu0 0
      %1551 = vmatpush1.bf16.xpose.msra.mxu0 %v1512
      %1552 = vmatprep.subr.bf16.mxu0 0
      %1553 = vmatpush1.bf16.xpose.msra.mxu0 %v1515
      %1554 = vmatprep.subr.bf16.mxu0 0
      %1555 = vmatpush1.bf16.xpose.msra.mxu0 %v1518
      %1556 = vmatprep.subr.bf16.mxu0 0
      %1557 = vmatpush1.bf16.xpose.msra.mxu0 %v1521
      %1558 = vmatprep.subr.bf16.mxu0 0
      %1559 = vmatpush1.bf16.xpose.msra.mxu0 %v1524
      %1560 = vmatprep.subr.bf16.mxu0 0
      %1561 = vmatpush1.bf16.xpose.msra.mxu0 %v1527
      %1562 = vmatprep.subr.bf16.mxu0 0
      %1563 = vmatpush1.bf16.xpose.msra.mxu0 %v1530
      %1564 = vmatprep.mubr.bf16.mxu0 0
      %1565 = vmatmul.mubr.bf16.gmra.mrb[0].mxu0 %v1482
      %v1566 = vpop.f32.mrb[0].mxu0
      %v1567 = vadd.f32 0.0, %v1566
      %v1568 = vpop.f32.mrb[0].mxu0
      %v1569 = vadd.f32 0.0, %v1568
      %v1570 = vpop.f32.mrb[0].mxu0
      %v1571 = vpop.f32.mrb[0].mxu0
      %1572 = vdwg.mxu0
      %v1573 = vadd.f32 %v1397, %v1567
      %v1574 = vadd.f32 %v1398, %v1569
      %1575 = vst [vmem:[#allocation2] sm:$0xff] %v1573
      %1576 = vst [vmem:[#allocation2 + $0x8] sm:$0xff] %v1574
      %v1577 = vld [vmem:[%s1364] sm:$0xf]
      %v1578 = vld [vmem:[%s1364 + $0x4] sm:$0xf]
      %v1579 = vld [vmem:[%s1364 + $0x8] sm:$0x1]
      %v1580 = vld [vmem:[%s1364 + $0xc] sm:$0xf]
      %v1581 = vld [vmem:[%s1364 + $0x10] sm:$0xf]
      %v1582 = vld [vmem:[%s1364 + $0x14] sm:$0x1]
      %v1583 = vld [vmem:[%s1364 + $0x18] sm:$0xf]
      %v1584 = vld [vmem:[%s1364 + $0x1c] sm:$0xf]
      %v1585 = vld [vmem:[%s1364 + $0x20] sm:$0x1]
      %v1586 = vld [vmem:[%s1364 + $0x24] sm:$0xf]
      %v1587 = vld [vmem:[%s1364 + $0x28] sm:$0xf]
      %v1588 = vld [vmem:[%s1364 + $0x2c] sm:$0x1]
      %v1589 = vld [vmem:[%s1364 + $0x30] sm:$0xf]
      %v1590 = vld [vmem:[%s1364 + $0x34] sm:$0xf]
      %v1591 = vld [vmem:[%s1364 + $0x38] sm:$0x1]
      %v1592 = vld [vmem:[%s1364 + $0x3c] sm:$0xf]
      %v1593 = vld [vmem:[%s1364 + $0x40] sm:$0xf]
      %v1594 = vld [vmem:[%s1364 + $0x44] sm:$0x1]
      %v1595 = vld [vmem:[%s1364 + $0x48] sm:$0xf]
      %v1596 = vld [vmem:[%s1364 + $0x4c] sm:$0xf]
      %v1597 = vld [vmem:[%s1364 + $0x50] sm:$0x1]
      %v1598 = vld [vmem:[%s1364 + $0x54] sm:$0xf]
      %v1599 = vld [vmem:[%s1364 + $0x58] sm:$0xf]
      %v1600 = vld [vmem:[%s1364 + $0x5c] sm:$0x1]
      %v1601 = vld [vmem:[%s1364 + $0x60] sm:$0xf]
      %v1602 = vld [vmem:[%s1364 + $0x64] sm:$0xf]
      %v1603 = vld [vmem:[%s1364 + $0x68] sm:$0x1]
      %v1604 = vld [vmem:[%s1364 + $0x6c] sm:$0xf]
      %v1605 = vld [vmem:[%s1364 + $0x70] sm:$0xf]
      %v1606 = vld [vmem:[%s1364 + $0x74] sm:$0x1]
      %v1607 = vld [vmem:[%s1364 + $0x78] sm:$0xf]
      %v1608 = vld [vmem:[%s1364 + $0x7c] sm:$0xf]
      %v1609 = vld [vmem:[%s1364 + $0x80] sm:$0x1]
      %v1610 = vld [vmem:[%s1364 + $0x84] sm:$0xf]
      %v1611 = vld [vmem:[%s1364 + $0x88] sm:$0xf]
      %v1612 = vld [vmem:[%s1364 + $0x8c] sm:$0x1]
      %v1613 = vld [vmem:[%s1364 + $0x90] sm:$0xf]
      %v1614 = vld [vmem:[%s1364 + $0x94] sm:$0xf]
      %v1615 = vld [vmem:[%s1364 + $0x98] sm:$0x1]
      %v1616 = vld [vmem:[%s1364 + $0x9c] sm:$0xf]
      %v1617 = vld [vmem:[%s1364 + $0xa0] sm:$0xf]
      %v1618 = vld [vmem:[%s1364 + $0xa4] sm:$0x1]
      %v1619 = vld [vmem:[%s1364 + $0xa8] sm:$0xf]
      %v1620 = vld [vmem:[%s1364 + $0xac] sm:$0xf]
      %v1621 = vld [vmem:[%s1364 + $0xb0] sm:$0x1]
      %v1622 = vld [vmem:[%s1364 + $0xb4] sm:$0xf]
      %v1623 = vld [vmem:[%s1364 + $0xb8] sm:$0xf]
      %v1624 = vld [vmem:[%s1364 + $0xbc] sm:$0x1]
      %v1626 = vshrl.u32 %v1577, 16
      %v1628 = vrot.slane %v1626, 4
      %v1629 = vshll.u32 %v1577, 16
      %v1631 = vrot.slane %v1629, 5
      %v1632 = vor.u32 %v1628, %v1631
      %v1633 = vrot.slane %v1632, 4
      %v1635 = vshll.u32 %v1578, 16
      %v1637 = vrot.slane %v1635, 5
      %v1638 = vsel %vm469, %v1633, %v1637
      %v1639 = vshrl.u32 %v1578, 16
      %v1641 = vrot.slane %v1639, 4
      %v1642 = vor.u32 %v1641, %v1637
      %v1643 = vrot.slane %v1642, 4
      %v1645 = vshll.u32 %v1579, 16
      %v1647 = vrot.slane %v1645, 5
      %v1648 = vsel %vm469, %v1643, %v1647
      %v1650 = vshrl.u32 %v1580, 16
      %v1652 = vrot.slane %v1650, 4
      %v1653 = vshll.u32 %v1580, 16
      %v1655 = vrot.slane %v1653, 5
      %v1656 = vor.u32 %v1652, %v1655
      %v1657 = vrot.slane %v1656, 4
      %v1659 = vshll.u32 %v1581, 16
      %v1661 = vrot.slane %v1659, 5
      %v1662 = vsel %vm469, %v1657, %v1661
      %v1663 = vshrl.u32 %v1581, 16
      %v1665 = vrot.slane %v1663, 4
      %v1666 = vor.u32 %v1665, %v1661
      %v1667 = vrot.slane %v1666, 4
      %v1669 = vshll.u32 %v1582, 16
      %v1671 = vrot.slane %v1669, 5
      %v1672 = vsel %vm469, %v1667, %v1671
      %v1674 = vshrl.u32 %v1583, 16
      %v1676 = vrot.slane %v1674, 4
      %v1677 = vshll.u32 %v1583, 16
      %v1679 = vrot.slane %v1677, 5
      %v1680 = vor.u32 %v1676, %v1679
      %v1681 = vrot.slane %v1680, 4
      %v1683 = vshll.u32 %v1584, 16
      %v1685 = vrot.slane %v1683, 5
      %v1686 = vsel %vm469, %v1681, %v1685
      %v1687 = vshrl.u32 %v1584, 16
      %v1689 = vrot.slane %v1687, 4
      %v1690 = vor.u32 %v1689, %v1685
      %v1691 = vrot.slane %v1690, 4
      %v1693 = vshll.u32 %v1585, 16
      %v1695 = vrot.slane %v1693, 5
      %v1696 = vsel %vm469, %v1691, %v1695
      %v1698 = vshrl.u32 %v1586, 16
      %v1700 = vrot.slane %v1698, 4
      %v1701 = vshll.u32 %v1586, 16
      %v1703 = vrot.slane %v1701, 5
      %v1704 = vor.u32 %v1700, %v1703
      %v1705 = vrot.slane %v1704, 4
      %v1707 = vshll.u32 %v1587, 16
      %v1709 = vrot.slane %v1707, 5
      %v1710 = vsel %vm469, %v1705, %v1709
      %v1711 = vshrl.u32 %v1587, 16
      %v1713 = vrot.slane %v1711, 4
      %v1714 = vor.u32 %v1713, %v1709
      %v1715 = vrot.slane %v1714, 4
      %v1717 = vshll.u32 %v1588, 16
      %v1719 = vrot.slane %v1717, 5
      %v1720 = vsel %vm469, %v1715, %v1719
      %v1722 = vshrl.u32 %v1589, 16
      %v1724 = vrot.slane %v1722, 4
      %v1725 = vshll.u32 %v1589, 16
      %v1727 = vrot.slane %v1725, 5
      %v1728 = vor.u32 %v1724, %v1727
      %v1729 = vrot.slane %v1728, 4
      %v1731 = vshll.u32 %v1590, 16
      %v1733 = vrot.slane %v1731, 5
      %v1734 = vsel %vm469, %v1729, %v1733
      %v1735 = vshrl.u32 %v1590, 16
      %v1737 = vrot.slane %v1735, 4
      %v1738 = vor.u32 %v1737, %v1733
      %v1739 = vrot.slane %v1738, 4
      %v1741 = vshll.u32 %v1591, 16
      %v1743 = vrot.slane %v1741, 5
      %v1744 = vsel %vm469, %v1739, %v1743
      %v1746 = vshrl.u32 %v1592, 16
      %v1748 = vrot.slane %v1746, 4
      %v1749 = vshll.u32 %v1592, 16
      %v1751 = vrot.slane %v1749, 5
      %v1752 = vor.u32 %v1748, %v1751
      %v1753 = vrot.slane %v1752, 4
      %v1755 = vshll.u32 %v1593, 16
      %v1757 = vrot.slane %v1755, 5
      %v1758 = vsel %vm469, %v1753, %v1757
      %v1759 = vshrl.u32 %v1593, 16
      %v1761 = vrot.slane %v1759, 4
      %v1762 = vor.u32 %v1761, %v1757
      %v1763 = vrot.slane %v1762, 4
      %v1765 = vshll.u32 %v1594, 16
      %v1767 = vrot.slane %v1765, 5
      %v1768 = vsel %vm469, %v1763, %v1767
      %v1770 = vshrl.u32 %v1595, 16
      %v1772 = vrot.slane %v1770, 4
      %v1773 = vshll.u32 %v1595, 16
      %v1775 = vrot.slane %v1773, 5
      %v1776 = vor.u32 %v1772, %v1775
      %v1777 = vrot.slane %v1776, 4
      %v1779 = vshll.u32 %v1596, 16
      %v1781 = vrot.slane %v1779, 5
      %v1782 = vsel %vm469, %v1777, %v1781
      %v1783 = vshrl.u32 %v1596, 16
      %v1785 = vrot.slane %v1783, 4
      %v1786 = vor.u32 %v1785, %v1781
      %v1787 = vrot.slane %v1786, 4
      %v1789 = vshll.u32 %v1597, 16
      %v1791 = vrot.slane %v1789, 5
      %v1792 = vsel %vm469, %v1787, %v1791
      %v1794 = vshrl.u32 %v1598, 16
      %v1796 = vrot.slane %v1794, 4
      %v1797 = vshll.u32 %v1598, 16
      %v1799 = vrot.slane %v1797, 5
      %v1800 = vor.u32 %v1796, %v1799
      %v1801 = vrot.slane %v1800, 4
      %v1803 = vshll.u32 %v1599, 16
      %v1805 = vrot.slane %v1803, 5
      %v1806 = vsel %vm469, %v1801, %v1805
      %v1807 = vshrl.u32 %v1599, 16
      %v1809 = vrot.slane %v1807, 4
      %v1810 = vor.u32 %v1809, %v1805
      %v1811 = vrot.slane %v1810, 4
      %v1813 = vshll.u32 %v1600, 16
      %v1815 = vrot.slane %v1813, 5
      %v1816 = vsel %vm469, %v1811, %v1815
      %v1818 = vshrl.u32 %v1601, 16
      %v1820 = vrot.slane %v1818, 4
      %v1821 = vshll.u32 %v1601, 16
      %v1823 = vrot.slane %v1821, 5
      %v1824 = vor.u32 %v1820, %v1823
      %v1825 = vrot.slane %v1824, 4
      %v1827 = vshll.u32 %v1602, 16
      %v1829 = vrot.slane %v1827, 5
      %v1830 = vsel %vm469, %v1825, %v1829
      %v1831 = vshrl.u32 %v1602, 16
      %v1833 = vrot.slane %v1831, 4
      %v1834 = vor.u32 %v1833, %v1829
      %v1835 = vrot.slane %v1834, 4
      %v1837 = vshll.u32 %v1603, 16
      %v1839 = vrot.slane %v1837, 5
      %v1840 = vsel %vm469, %v1835, %v1839
      %v1842 = vshrl.u32 %v1604, 16
      %v1844 = vrot.slane %v1842, 4
      %v1845 = vshll.u32 %v1604, 16
      %v1847 = vrot.slane %v1845, 5
      %v1848 = vor.u32 %v1844, %v1847
      %v1849 = vrot.slane %v1848, 4
      %v1851 = vshll.u32 %v1605, 16
      %v1853 = vrot.slane %v1851, 5
      %v1854 = vsel %vm469, %v1849, %v1853
      %v1855 = vshrl.u32 %v1605, 16
      %v1857 = vrot.slane %v1855, 4
      %v1858 = vor.u32 %v1857, %v1853
      %v1859 = vrot.slane %v1858, 4
      %v1861 = vshll.u32 %v1606, 16
      %v1863 = vrot.slane %v1861, 5
      %v1864 = vsel %vm469, %v1859, %v1863
      %v1866 = vshrl.u32 %v1607, 16
      %v1868 = vrot.slane %v1866, 4
      %v1869 = vshll.u32 %v1607, 16
      %v1871 = vrot.slane %v1869, 5
      %v1872 = vor.u32 %v1868, %v1871
      %v1873 = vrot.slane %v1872, 4
      %v1875 = vshll.u32 %v1608, 16
      %v1877 = vrot.slane %v1875, 5
      %v1878 = vsel %vm469, %v1873, %v1877
      %v1879 = vshrl.u32 %v1608, 16
      %v1881 = vrot.slane %v1879, 4
      %v1882 = vor.u32 %v1881, %v1877
      %v1883 = vrot.slane %v1882, 4
      %v1885 = vshll.u32 %v1609, 16
      %v1887 = vrot.slane %v1885, 5
      %v1888 = vsel %vm469, %v1883, %v1887
      %v1890 = vshrl.u32 %v1610, 16
      %v1892 = vrot.slane %v1890, 4
      %v1893 = vshll.u32 %v1610, 16
      %v1895 = vrot.slane %v1893, 5
      %v1896 = vor.u32 %v1892, %v1895
      %v1897 = vrot.slane %v1896, 4
      %v1899 = vshll.u32 %v1611, 16
      %v1901 = vrot.slane %v1899, 5
      %v1902 = vsel %vm469, %v1897, %v1901
      %v1903 = vshrl.u32 %v1611, 16
      %v1905 = vrot.slane %v1903, 4
      %v1906 = vor.u32 %v1905, %v1901
      %v1907 = vrot.slane %v1906, 4
      %v1909 = vshll.u32 %v1612, 16
      %v1911 = vrot.slane %v1909, 5
      %v1912 = vsel %vm469, %v1907, %v1911
      %v1914 = vshrl.u32 %v1613, 16
      %v1916 = vrot.slane %v1914, 4
      %v1917 = vshll.u32 %v1613, 16
      %v1919 = vrot.slane %v1917, 5
      %v1920 = vor.u32 %v1916, %v1919
      %v1921 = vrot.slane %v1920, 4
      %v1923 = vshll.u32 %v1614, 16
      %v1925 = vrot.slane %v1923, 5
      %v1926 = vsel %vm469, %v1921, %v1925
      %v1927 = vshrl.u32 %v1614, 16
      %v1929 = vrot.slane %v1927, 4
      %v1930 = vor.u32 %v1929, %v1925
      %v1931 = vrot.slane %v1930, 4
      %v1933 = vshll.u32 %v1615, 16
      %v1935 = vrot.slane %v1933, 5
      %v1936 = vsel %vm469, %v1931, %v1935
      %v1938 = vshrl.u32 %v1616, 16
      %v1940 = vrot.slane %v1938, 4
      %v1941 = vshll.u32 %v1616, 16
      %v1943 = vrot.slane %v1941, 5
      %v1944 = vor.u32 %v1940, %v1943
      %v1945 = vrot.slane %v1944, 4
      %v1947 = vshll.u32 %v1617, 16
      %v1949 = vrot.slane %v1947, 5
      %v1950 = vsel %vm469, %v1945, %v1949
      %v1951 = vshrl.u32 %v1617, 16
      %v1953 = vrot.slane %v1951, 4
      %v1954 = vor.u32 %v1953, %v1949
      %v1955 = vrot.slane %v1954, 4
      %v1957 = vshll.u32 %v1618, 16
      %v1959 = vrot.slane %v1957, 5
      %v1960 = vsel %vm469, %v1955, %v1959
      %v1962 = vshrl.u32 %v1619, 16
      %v1964 = vrot.slane %v1962, 4
      %v1965 = vshll.u32 %v1619, 16
      %v1967 = vrot.slane %v1965, 5
      %v1968 = vor.u32 %v1964, %v1967
      %v1969 = vrot.slane %v1968, 4
      %v1971 = vshll.u32 %v1620, 16
      %v1973 = vrot.slane %v1971, 5
      %v1974 = vsel %vm469, %v1969, %v1973
      %v1975 = vshrl.u32 %v1620, 16
      %v1977 = vrot.slane %v1975, 4
      %v1978 = vor.u32 %v1977, %v1973
      %v1979 = vrot.slane %v1978, 4
      %v1981 = vshll.u32 %v1621, 16
      %v1983 = vrot.slane %v1981, 5
      %v1984 = vsel %vm469, %v1979, %v1983
      %v1986 = vshrl.u32 %v1622, 16
      %v1988 = vrot.slane %v1986, 4
      %v1989 = vshll.u32 %v1622, 16
      %v1991 = vrot.slane %v1989, 5
      %v1992 = vor.u32 %v1988, %v1991
      %v1993 = vrot.slane %v1992, 4
      %v1995 = vshll.u32 %v1623, 16
      %v1997 = vrot.slane %v1995, 5
      %v1998 = vsel %vm469, %v1993, %v1997
      %v1999 = vshrl.u32 %v1623, 16
      %v2001 = vrot.slane %v1999, 4
      %v2002 = vor.u32 %v2001, %v1997
      %v2003 = vrot.slane %v2002, 4
      %v2005 = vshll.u32 %v1624, 16
      %v2007 = vrot.slane %v2005, 5
      %v2008 = vsel %vm469, %v2003, %v2007
      %v2009 = vld [vmem:[#allocation2] sm:$0xff]
      %v2010 = vld [vmem:[#allocation2 + $0x8] sm:$0xff]
      %s2011 = scalar_lea.vmem %s1, 16
      %v2012 = vld [vmem:[%s2011] sm:$0xf]
      %v2013 = vunpack.c.l.b16 %v1638
      %v2014 = vunpack.c.l.b16 %v1648
      %v2015 = vunpack.c.l.b16 %v1662
      %v2016 = vunpack.c.l.b16 %v1672
      %v2017 = vunpack.c.l.b16 %v1686
      %v2018 = vunpack.c.l.b16 %v1696
      %v2019 = vunpack.c.l.b16 %v1710
      %v2020 = vunpack.c.l.b16 %v1720
      %v2021 = vunpack.c.l.b16 %v1734
      %v2022 = vunpack.c.l.b16 %v1744
      %v2023 = vunpack.c.l.b16 %v1758
      %v2024 = vunpack.c.l.b16 %v1768
      %v2025 = vunpack.c.l.b16 %v1782
      %v2026 = vunpack.c.l.b16 %v1792
      %v2027 = vunpack.c.l.b16 %v1806
      %v2028 = vunpack.c.l.b16 %v1816
      %v2029 = vunpack.c.l.b16 %v1830
      %v2030 = vunpack.c.l.b16 %v1840
      %v2031 = vunpack.c.l.b16 %v1854
      %v2032 = vunpack.c.l.b16 %v1864
      %v2033 = vunpack.c.l.b16 %v1878
      %v2034 = vunpack.c.l.b16 %v1888
      %v2035 = vunpack.c.l.b16 %v1902
      %v2036 = vunpack.c.l.b16 %v1912
      %v2037 = vunpack.c.l.b16 %v1926
      %v2038 = vunpack.c.l.b16 %v1936
      %v2039 = vunpack.c.l.b16 %v1950
      %v2040 = vunpack.c.l.b16 %v1960
      %v2041 = vunpack.c.l.b16 %v1974
      %v2042 = vunpack.c.l.b16 %v1984
      %v2043 = vunpack.c.l.b16 %v1998
      %v2044 = vunpack.c.l.b16 %v2008
      %v2045 = vpack.c.b16 %v2014, %v2013
      %v2046 = vpack.c.b16 %v2016, %v2015
      %v2047 = vpack.c.b16 %v2018, %v2017
      %v2048 = vpack.c.b16 %v2020, %v2019
      %v2049 = vpack.c.b16 %v2022, %v2021
      %v2050 = vpack.c.b16 %v2024, %v2023
      %v2051 = vpack.c.b16 %v2026, %v2025
      %v2052 = vpack.c.b16 %v2028, %v2027
      %v2053 = vpack.c.b16 %v2030, %v2029
      %v2054 = vpack.c.b16 %v2032, %v2031
      %v2055 = vpack.c.b16 %v2034, %v2033
      %v2056 = vpack.c.b16 %v2036, %v2035
      %v2057 = vpack.c.b16 %v2038, %v2037
      %v2058 = vpack.c.b16 %v2040, %v2039
      %v2059 = vpack.c.b16 %v2042, %v2041
      %v2060 = vpack.c.b16 %v2044, %v2043
      %v2062 = vsel %vm322, %v2012, 0
      %v2065 = vsel %vm322, %v2045, 0
      %v2068 = vsel %vm322, %v2046, 0
      %v2071 = vsel %vm322, %v2047, 0
      %v2074 = vsel %vm322, %v2048, 0
      %v2077 = vsel %vm322, %v2049, 0
      %v2080 = vsel %vm322, %v2050, 0
      %v2083 = vsel %vm322, %v2051, 0
      %v2086 = vsel %vm322, %v2052, 0
      %v2089 = vsel %vm322, %v2053, 0
      %v2092 = vsel %vm322, %v2054, 0
      %v2095 = vsel %vm322, %v2055, 0
      %v2098 = vsel %vm322, %v2056, 0
      %v2101 = vsel %vm322, %v2057, 0
      %v2104 = vsel %vm322, %v2058, 0
      %v2107 = vsel %vm322, %v2059, 0
      %v2110 = vsel %vm322, %v2060, 0
      %2112 = vmatprep.subr.bf16.mxu0 0
      %2113 = vmatpush1.bf16.xpose.msra.mxu0 %v2065
      %2114 = vmatprep.subr.bf16.mxu0 0
      %2115 = vmatpush1.bf16.xpose.msra.mxu0 %v2068
      %2116 = vmatprep.subr.bf16.mxu0 0
      %2117 = vmatpush1.bf16.xpose.msra.mxu0 %v2071
      %2118 = vmatprep.subr.bf16.mxu0 0
      %2119 = vmatpush1.bf16.xpose.msra.mxu0 %v2074
      %2120 = vmatprep.subr.bf16.mxu0 0
      %2121 = vmatpush1.bf16.xpose.msra.mxu0 %v2077
      %2122 = vmatprep.subr.bf16.mxu0 0
      %2123 = vmatpush1.bf16.xpose.msra.mxu0 %v2080
      %2124 = vmatprep.subr.bf16.mxu0 0
      %2125 = vmatpush1.bf16.xpose.msra.mxu0 %v2083
      %2126 = vmatprep.subr.bf16.mxu0 0
      %2127 = vmatpush1.bf16.xpose.msra.mxu0 %v2086
      %2128 = vmatprep.subr.bf16.mxu0 0
      %2129 = vmatpush1.bf16.xpose.msra.mxu0 %v2089
      %2130 = vmatprep.subr.bf16.mxu0 0
      %2131 = vmatpush1.bf16.xpose.msra.mxu0 %v2092
      %2132 = vmatprep.subr.bf16.mxu0 0
      %2133 = vmatpush1.bf16.xpose.msra.mxu0 %v2095
      %2134 = vmatprep.subr.bf16.mxu0 0
      %2135 = vmatpush1.bf16.xpose.msra.mxu0 %v2098
      %2136 = vmatprep.subr.bf16.mxu0 0
      %2137 = vmatpush1.bf16.xpose.msra.mxu0 %v2101
      %2138 = vmatprep.subr.bf16.mxu0 0
      %2139 = vmatpush1.bf16.xpose.msra.mxu0 %v2104
      %2140 = vmatprep.subr.bf16.mxu0 0
      %2141 = vmatpush1.bf16.xpose.msra.mxu0 %v2107
      %2142 = vmatprep.subr.bf16.mxu0 0
      %2143 = vmatpush1.bf16.xpose.msra.mxu0 %v2110
      %2144 = vmatprep.mubr.bf16.mxu0 0
      %2145 = vmatmul.mubr.bf16.gmra.mrb[0].mxu0 %v2062
      %v2146 = vpop.f32.mrb[0].mxu0
      %v2147 = vadd.f32 0.0, %v2146
      %v2148 = vpop.f32.mrb[0].mxu0
      %v2149 = vadd.f32 0.0, %v2148
      %v2150 = vpop.f32.mrb[0].mxu0
      %v2151 = vpop.f32.mrb[0].mxu0
      %2152 = vdwg.mxu0
      %v2153 = vadd.f32 %v2009, %v2147
      %v2154 = vadd.f32 %v2010, %v2149
      %2155 = vst [vmem:[#allocation2] sm:$0xff] %v2153
      %2156 = vst [vmem:[#allocation2 + $0x8] sm:$0xff] %v2154
      %v2157 = vld [vmem:[%s1364] sm:$0xe]
      %v2158 = vld [vmem:[%s1364 + $0x4] sm:$0xf]
      %v2159 = vld [vmem:[%s1364 + $0x8] sm:$0x1]
      %v2160 = vld [vmem:[%s1364 + $0xc] sm:$0xe]
      %v2161 = vld [vmem:[%s1364 + $0x10] sm:$0xf]
      %v2162 = vld [vmem:[%s1364 + $0x14] sm:$0x1]
      %v2163 = vld [vmem:[%s1364 + $0x18] sm:$0xe]
      %v2164 = vld [vmem:[%s1364 + $0x1c] sm:$0xf]
      %v2165 = vld [vmem:[%s1364 + $0x20] sm:$0x1]
      %v2166 = vld [vmem:[%s1364 + $0x24] sm:$0xe]
      %v2167 = vld [vmem:[%s1364 + $0x28] sm:$0xf]
      %v2168 = vld [vmem:[%s1364 + $0x2c] sm:$0x1]
      %v2169 = vld [vmem:[%s1364 + $0x30] sm:$0xe]
      %v2170 = vld [vmem:[%s1364 + $0x34] sm:$0xf]
      %v2171 = vld [vmem:[%s1364 + $0x38] sm:$0x1]
      %v2172 = vld [vmem:[%s1364 + $0x3c] sm:$0xe]
      %v2173 = vld [vmem:[%s1364 + $0x40] sm:$0xf]
      %v2174 = vld [vmem:[%s1364 + $0x44] sm:$0x1]
      %v2175 = vld [vmem:[%s1364 + $0x48] sm:$0xe]
      %v2176 = vld [vmem:[%s1364 + $0x4c] sm:$0xf]
      %v2177 = vld [vmem:[%s1364 + $0x50] sm:$0x1]
      %v2178 = vld [vmem:[%s1364 + $0x54] sm:$0xe]
      %v2179 = vld [vmem:[%s1364 + $0x58] sm:$0xf]
      %v2180 = vld [vmem:[%s1364 + $0x5c] sm:$0x1]
      %v2181 = vld [vmem:[%s1364 + $0x60] sm:$0xe]
      %v2182 = vld [vmem:[%s1364 + $0x64] sm:$0xf]
      %v2183 = vld [vmem:[%s1364 + $0x68] sm:$0x1]
      %v2184 = vld [vmem:[%s1364 + $0x6c] sm:$0xe]
      %v2185 = vld [vmem:[%s1364 + $0x70] sm:$0xf]
      %v2186 = vld [vmem:[%s1364 + $0x74] sm:$0x1]
      %v2187 = vld [vmem:[%s1364 + $0x78] sm:$0xe]
      %v2188 = vld [vmem:[%s1364 + $0x7c] sm:$0xf]
      %v2189 = vld [vmem:[%s1364 + $0x80] sm:$0x1]
      %v2190 = vld [vmem:[%s1364 + $0x84] sm:$0xe]
      %v2191 = vld [vmem:[%s1364 + $0x88] sm:$0xf]
      %v2192 = vld [vmem:[%s1364 + $0x8c] sm:$0x1]
      %v2193 = vld [vmem:[%s1364 + $0x90] sm:$0xe]
      %v2194 = vld [vmem:[%s1364 + $0x94] sm:$0xf]
      %v2195 = vld [vmem:[%s1364 + $0x98] sm:$0x1]
      %v2196 = vld [vmem:[%s1364 + $0x9c] sm:$0xe]
      %v2197 = vld [vmem:[%s1364 + $0xa0] sm:$0xf]
      %v2198 = vld [vmem:[%s1364 + $0xa4] sm:$0x1]
      %v2199 = vld [vmem:[%s1364 + $0xa8] sm:$0xe]
      %v2200 = vld [vmem:[%s1364 + $0xac] sm:$0xf]
      %v2201 = vld [vmem:[%s1364 + $0xb0] sm:$0x1]
      %v2202 = vld [vmem:[%s1364 + $0xb4] sm:$0xe]
      %v2203 = vld [vmem:[%s1364 + $0xb8] sm:$0xf]
      %v2204 = vld [vmem:[%s1364 + $0xbc] sm:$0x1]
      %v2253 = vrot.slane %v2157, 5
      %v2254 = vrot.slane %v2253, 4
      %v2255 = vrot.slane %v2158, 5
      %v2256 = vsel %vm1100, %v2254, %v2255
      %v2257 = vrot.slane %v2255, 4
      %v2258 = vrot.slane %v2159, 5
      %v2259 = vsel %vm1100, %v2257, %v2258
      %v2260 = vrot.slane %v2160, 5
      %v2261 = vrot.slane %v2260, 4
      %v2262 = vrot.slane %v2161, 5
      %v2263 = vsel %vm1100, %v2261, %v2262
      %v2264 = vrot.slane %v2262, 4
      %v2265 = vrot.slane %v2162, 5
      %v2266 = vsel %vm1100, %v2264, %v2265
      %v2267 = vrot.slane %v2163, 5
      %v2268 = vrot.slane %v2267, 4
      %v2269 = vrot.slane %v2164, 5
      %v2270 = vsel %vm1100, %v2268, %v2269
      %v2271 = vrot.slane %v2269, 4
      %v2272 = vrot.slane %v2165, 5
      %v2273 = vsel %vm1100, %v2271, %v2272
      %v2274 = vrot.slane %v2166, 5
      %v2275 = vrot.slane %v2274, 4
      %v2276 = vrot.slane %v2167, 5
      %v2277 = vsel %vm1100, %v2275, %v2276
      %v2278 = vrot.slane %v2276, 4
      %v2279 = vrot.slane %v2168, 5
      %v2280 = vsel %vm1100, %v2278, %v2279
      %v2281 = vrot.slane %v2169, 5
      %v2282 = vrot.slane %v2281, 4
      %v2283 = vrot.slane %v2170, 5
      %v2284 = vsel %vm1100, %v2282, %v2283
      %v2285 = vrot.slane %v2283, 4
      %v2286 = vrot.slane %v2171, 5
      %v2287 = vsel %vm1100, %v2285, %v2286
      %v2288 = vrot.slane %v2172, 5
      %v2289 = vrot.slane %v2288, 4
      %v2290 = vrot.slane %v2173, 5
      %v2291 = vsel %vm1100, %v2289, %v2290
      %v2292 = vrot.slane %v2290, 4
      %v2293 = vrot.slane %v2174, 5
      %v2294 = vsel %vm1100, %v2292, %v2293
      %v2295 = vrot.slane %v2175, 5
      %v2296 = vrot.slane %v2295, 4
      %v2297 = vrot.slane %v2176, 5
      %v2298 = vsel %vm1100, %v2296, %v2297
      %v2299 = vrot.slane %v2297, 4
      %v2300 = vrot.slane %v2177, 5
      %v2301 = vsel %vm1100, %v2299, %v2300
      %v2302 = vrot.slane %v2178, 5
      %v2303 = vrot.slane %v2302, 4
      %v2304 = vrot.slane %v2179, 5
      %v2305 = vsel %vm1100, %v2303, %v2304
      %v2306 = vrot.slane %v2304, 4
      %v2307 = vrot.slane %v2180, 5
      %v2308 = vsel %vm1100, %v2306, %v2307
      %v2309 = vrot.slane %v2181, 5
      %v2310 = vrot.slane %v2309, 4
      %v2311 = vrot.slane %v2182, 5
      %v2312 = vsel %vm1100, %v2310, %v2311
      %v2313 = vrot.slane %v2311, 4
      %v2314 = vrot.slane %v2183, 5
      %v2315 = vsel %vm1100, %v2313, %v2314
      %v2316 = vrot.slane %v2184, 5
      %v2317 = vrot.slane %v2316, 4
      %v2318 = vrot.slane %v2185, 5
      %v2319 = vsel %vm1100, %v2317, %v2318
      %v2320 = vrot.slane %v2318, 4
      %v2321 = vrot.slane %v2186, 5
      %v2322 = vsel %vm1100, %v2320, %v2321
      %v2323 = vrot.slane %v2187, 5
      %v2324 = vrot.slane %v2323, 4
      %v2325 = vrot.slane %v2188, 5
      %v2326 = vsel %vm1100, %v2324, %v2325
      %v2327 = vrot.slane %v2325, 4
      %v2328 = vrot.slane %v2189, 5
      %v2329 = vsel %vm1100, %v2327, %v2328
      %v2330 = vrot.slane %v2190, 5
      %v2331 = vrot.slane %v2330, 4
      %v2332 = vrot.slane %v2191, 5
      %v2333 = vsel %vm1100, %v2331, %v2332
      %v2334 = vrot.slane %v2332, 4
      %v2335 = vrot.slane %v2192, 5
      %v2336 = vsel %vm1100, %v2334, %v2335
      %v2337 = vrot.slane %v2193, 5
      %v2338 = vrot.slane %v2337, 4
      %v2339 = vrot.slane %v2194, 5
      %v2340 = vsel %vm1100, %v2338, %v2339
      %v2341 = vrot.slane %v2339, 4
      %v2342 = vrot.slane %v2195, 5
      %v2343 = vsel %vm1100, %v2341, %v2342
      %v2344 = vrot.slane %v2196, 5
      %v2345 = vrot.slane %v2344, 4
      %v2346 = vrot.slane %v2197, 5
      %v2347 = vsel %vm1100, %v2345, %v2346
      %v2348 = vrot.slane %v2346, 4
      %v2349 = vrot.slane %v2198, 5
      %v2350 = vsel %vm1100, %v2348, %v2349
      %v2351 = vrot.slane %v2199, 5
      %v2352 = vrot.slane %v2351, 4
      %v2353 = vrot.slane %v2200, 5
      %v2354 = vsel %vm1100, %v2352, %v2353
      %v2355 = vrot.slane %v2353, 4
      %v2356 = vrot.slane %v2201, 5
      %v2357 = vsel %vm1100, %v2355, %v2356
      %v2358 = vrot.slane %v2202, 5
      %v2359 = vrot.slane %v2358, 4
      %v2360 = vrot.slane %v2203, 5
      %v2361 = vsel %vm1100, %v2359, %v2360
      %v2362 = vrot.slane %v2360, 4
      %v2363 = vrot.slane %v2204, 5
      %v2364 = vsel %vm1100, %v2362, %v2363
      %v2365 = vld [vmem:[#allocation2] sm:$0xff]
      %v2366 = vld [vmem:[#allocation2 + $0x8] sm:$0xff]
      %s2367 = scalar_lea.vmem %s1, 20
      %v2368 = vld [vmem:[%s2367] sm:$0xf]
      %v2369 = vunpack.c.l.b16 %v2256
      %v2370 = vunpack.c.l.b16 %v2259
      %v2371 = vunpack.c.l.b16 %v2263
      %v2372 = vunpack.c.l.b16 %v2266
      %v2373 = vunpack.c.l.b16 %v2270
      %v2374 = vunpack.c.l.b16 %v2273
      %v2375 = vunpack.c.l.b16 %v2277
      %v2376 = vunpack.c.l.b16 %v2280
      %v2377 = vunpack.c.l.b16 %v2284
      %v2378 = vunpack.c.l.b16 %v2287
      %v2379 = vunpack.c.l.b16 %v2291
      %v2380 = vunpack.c.l.b16 %v2294
      %v2381 = vunpack.c.l.b16 %v2298
      %v2382 = vunpack.c.l.b16 %v2301
      %v2383 = vunpack.c.l.b16 %v2305
      %v2384 = vunpack.c.l.b16 %v2308
      %v2385 = vunpack.c.l.b16 %v2312
      %v2386 = vunpack.c.l.b16 %v2315
      %v2387 = vunpack.c.l.b16 %v2319
      %v2388 = vunpack.c.l.b16 %v2322
      %v2389 = vunpack.c.l.b16 %v2326
      %v2390 = vunpack.c.l.b16 %v2329
      %v2391 = vunpack.c.l.b16 %v2333
      %v2392 = vunpack.c.l.b16 %v2336
      %v2393 = vunpack.c.l.b16 %v2340
      %v2394 = vunpack.c.l.b16 %v2343
      %v2395 = vunpack.c.l.b16 %v2347
      %v2396 = vunpack.c.l.b16 %v2350
      %v2397 = vunpack.c.l.b16 %v2354
      %v2398 = vunpack.c.l.b16 %v2357
      %v2399 = vunpack.c.l.b16 %v2361
      %v2400 = vunpack.c.l.b16 %v2364
      %v2401 = vpack.c.b16 %v2370, %v2369
      %v2402 = vpack.c.b16 %v2372, %v2371
      %v2403 = vpack.c.b16 %v2374, %v2373
      %v2404 = vpack.c.b16 %v2376, %v2375
      %v2405 = vpack.c.b16 %v2378, %v2377
      %v2406 = vpack.c.b16 %v2380, %v2379
      %v2407 = vpack.c.b16 %v2382, %v2381
      %v2408 = vpack.c.b16 %v2384, %v2383
      %v2409 = vpack.c.b16 %v2386, %v2385
      %v2410 = vpack.c.b16 %v2388, %v2387
      %v2411 = vpack.c.b16 %v2390, %v2389
      %v2412 = vpack.c.b16 %v2392, %v2391
      %v2413 = vpack.c.b16 %v2394, %v2393
      %v2414 = vpack.c.b16 %v2396, %v2395
      %v2415 = vpack.c.b16 %v2398, %v2397
      %v2416 = vpack.c.b16 %v2400, %v2399
      %v2418 = vsel %vm322, %v2368, 0
      %v2421 = vsel %vm322, %v2401, 0
      %v2424 = vsel %vm322, %v2402, 0
      %v2427 = vsel %vm322, %v2403, 0
      %v2430 = vsel %vm322, %v2404, 0
      %v2433 = vsel %vm322, %v2405, 0
      %v2436 = vsel %vm322, %v2406, 0
      %v2439 = vsel %vm322, %v2407, 0
      %v2442 = vsel %vm322, %v2408, 0
      %v2445 = vsel %vm322, %v2409, 0
      %v2448 = vsel %vm322, %v2410, 0
      %v2451 = vsel %vm322, %v2411, 0
      %v2454 = vsel %vm322, %v2412, 0
      %v2457 = vsel %vm322, %v2413, 0
      %v2460 = vsel %vm322, %v2414, 0
      %v2463 = vsel %vm322, %v2415, 0
      %v2466 = vsel %vm322, %v2416, 0
      %2468 = vmatprep.subr.bf16.mxu0 0
      %2469 = vmatpush1.bf16.xpose.msra.mxu0 %v2421
      %2470 = vmatprep.subr.bf16.mxu0 0
      %2471 = vmatpush1.bf16.xpose.msra.mxu0 %v2424
      %2472 = vmatprep.subr.bf16.mxu0 0
      %2473 = vmatpush1.bf16.xpose.msra.mxu0 %v2427
      %2474 = vmatprep.subr.bf16.mxu0 0
      %2475 = vmatpush1.bf16.xpose.msra.mxu0 %v2430
      %2476 = vmatprep.subr.bf16.mxu0 0
      %2477 = vmatpush1.bf16.xpose.msra.mxu0 %v2433
      %2478 = vmatprep.subr.bf16.mxu0 0
      %2479 = vmatpush1.bf16.xpose.msra.mxu0 %v2436
      %2480 = vmatprep.subr.bf16.mxu0 0
      %2481 = vmatpush1.bf16.xpose.msra.mxu0 %v2439
      %2482 = vmatprep.subr.bf16.mxu0 0
      %2483 = vmatpush1.bf16.xpose.msra.mxu0 %v2442
      %2484 = vmatprep.subr.bf16.mxu0 0
      %2485 = vmatpush1.bf16.xpose.msra.mxu0 %v2445
      %2486 = vmatprep.subr.bf16.mxu0 0
      %2487 = vmatpush1.bf16.xpose.msra.mxu0 %v2448
      %2488 = vmatprep.subr.bf16.mxu0 0
      %2489 = vmatpush1.bf16.xpose.msra.mxu0 %v2451
      %2490 = vmatprep.subr.bf16.mxu0 0
      %2491 = vmatpush1.bf16.xpose.msra.mxu0 %v2454
      %2492 = vmatprep.subr.bf16.mxu0 0
      %2493 = vmatpush1.bf16.xpose.msra.mxu0 %v2457
      %2494 = vmatprep.subr.bf16.mxu0 0
      %2495 = vmatpush1.bf16.xpose.msra.mxu0 %v2460
      %2496 = vmatprep.subr.bf16.mxu0 0
      %2497 = vmatpush1.bf16.xpose.msra.mxu0 %v2463
      %2498 = vmatprep.subr.bf16.mxu0 0
      %2499 = vmatpush1.bf16.xpose.msra.mxu0 %v2466
      %2500 = vmatprep.mubr.bf16.mxu0 0
      %2501 = vmatmul.mubr.bf16.gmra.mrb[0].mxu0 %v2418
      %v2502 = vpop.f32.mrb[0].mxu0
      %v2503 = vadd.f32 0.0, %v2502
      %v2504 = vpop.f32.mrb[0].mxu0
      %v2505 = vadd.f32 0.0, %v2504
      %v2506 = vpop.f32.mrb[0].mxu0
      %v2507 = vpop.f32.mrb[0].mxu0
      %2508 = vdwg.mxu0
      %v2509 = vadd.f32 %v2365, %v2503
      %v2510 = vadd.f32 %v2366, %v2505
      %2511 = vst [vmem:[#allocation2] sm:$0xff] %v2509
      %2512 = vst [vmem:[#allocation2 + $0x8] sm:$0xff] %v2510
      %s2513 = sadd.s32 %s195, 2
      %s2514 = smul.u32 %s2513, 3
      %s2515 = smul.addr %s2514, 4
      %s2516 = scalar_lea.vmem %s183, %s2515
      %v2517 = vld [vmem:[%s2516] sm:$0xf]
      %v2518 = vld [vmem:[%s2516 + $0x4] sm:$0xf]
      %v2519 = vld [vmem:[%s2516 + $0xc] sm:$0xf]
      %v2520 = vld [vmem:[%s2516 + $0x10] sm:$0xf]
      %v2521 = vld [vmem:[%s2516 + $0x18] sm:$0xf]
      %v2522 = vld [vmem:[%s2516 + $0x1c] sm:$0xf]
      %v2523 = vld [vmem:[%s2516 + $0x24] sm:$0xf]
      %v2524 = vld [vmem:[%s2516 + $0x28] sm:$0xf]
      %v2525 = vld [vmem:[%s2516 + $0x30] sm:$0xf]
      %v2526 = vld [vmem:[%s2516 + $0x34] sm:$0xf]
      %v2527 = vld [vmem:[%s2516 + $0x3c] sm:$0xf]
      %v2528 = vld [vmem:[%s2516 + $0x40] sm:$0xf]
      %v2529 = vld [vmem:[%s2516 + $0x48] sm:$0xf]
      %v2530 = vld [vmem:[%s2516 + $0x4c] sm:$0xf]
      %v2531 = vld [vmem:[%s2516 + $0x54] sm:$0xf]
      %v2532 = vld [vmem:[%s2516 + $0x58] sm:$0xf]
      %v2533 = vld [vmem:[%s2516 + $0x60] sm:$0xf]
      %v2534 = vld [vmem:[%s2516 + $0x64] sm:$0xf]
      %v2535 = vld [vmem:[%s2516 + $0x6c] sm:$0xf]
      %v2536 = vld [vmem:[%s2516 + $0x70] sm:$0xf]
      %v2537 = vld [vmem:[%s2516 + $0x78] sm:$0xf]
      %v2538 = vld [vmem:[%s2516 + $0x7c] sm:$0xf]
      %v2539 = vld [vmem:[%s2516 + $0x84] sm:$0xf]
      %v2540 = vld [vmem:[%s2516 + $0x88] sm:$0xf]
      %v2541 = vld [vmem:[%s2516 + $0x90] sm:$0xf]
      %v2542 = vld [vmem:[%s2516 + $0x94] sm:$0xf]
      %v2543 = vld [vmem:[%s2516 + $0x9c] sm:$0xf]
      %v2544 = vld [vmem:[%s2516 + $0xa0] sm:$0xf]
      %v2545 = vld [vmem:[%s2516 + $0xa8] sm:$0xf]
      %v2546 = vld [vmem:[%s2516 + $0xac] sm:$0xf]
      %v2547 = vld [vmem:[%s2516 + $0xb4] sm:$0xf]
      %v2548 = vld [vmem:[%s2516 + $0xb8] sm:$0xf]
      %v2549 = vld [vmem:[#allocation2] sm:$0xff]
      %v2550 = vld [vmem:[#allocation2 + $0x8] sm:$0xff]
      %s2551 = scalar_lea.vmem %s1, 24
      %v2552 = vld [vmem:[%s2551] sm:$0xf]
      %v2585 = vunpack.c.l.b16 %v2517
      %v2586 = vunpack.c.l.b16 %v2518
      %v2587 = vunpack.c.l.b16 %v2519
      %v2588 = vunpack.c.l.b16 %v2520
      %v2589 = vunpack.c.l.b16 %v2521
      %v2590 = vunpack.c.l.b16 %v2522
      %v2591 = vunpack.c.l.b16 %v2523
      %v2592 = vunpack.c.l.b16 %v2524
      %v2593 = vunpack.c.l.b16 %v2525
      %v2594 = vunpack.c.l.b16 %v2526
      %v2595 = vunpack.c.l.b16 %v2527
      %v2596 = vunpack.c.l.b16 %v2528
      %v2597 = vunpack.c.l.b16 %v2529
      %v2598 = vunpack.c.l.b16 %v2530
      %v2599 = vunpack.c.l.b16 %v2531
      %v2600 = vunpack.c.l.b16 %v2532
      %v2601 = vunpack.c.l.b16 %v2533
      %v2602 = vunpack.c.l.b16 %v2534
      %v2603 = vunpack.c.l.b16 %v2535
      %v2604 = vunpack.c.l.b16 %v2536
      %v2605 = vunpack.c.l.b16 %v2537
      %v2606 = vunpack.c.l.b16 %v2538
      %v2607 = vunpack.c.l.b16 %v2539
      %v2608 = vunpack.c.l.b16 %v2540
      %v2609 = vunpack.c.l.b16 %v2541
      %v2610 = vunpack.c.l.b16 %v2542
      %v2611 = vunpack.c.l.b16 %v2543
      %v2612 = vunpack.c.l.b16 %v2544
      %v2613 = vunpack.c.l.b16 %v2545
      %v2614 = vunpack.c.l.b16 %v2546
      %v2615 = vunpack.c.l.b16 %v2547
      %v2616 = vunpack.c.l.b16 %v2548
      %v2617 = vpack.c.b16 %v2586, %v2585
      %v2618 = vpack.c.b16 %v2588, %v2587
      %v2619 = vpack.c.b16 %v2590, %v2589
      %v2620 = vpack.c.b16 %v2592, %v2591
      %v2621 = vpack.c.b16 %v2594, %v2593
      %v2622 = vpack.c.b16 %v2596, %v2595
      %v2623 = vpack.c.b16 %v2598, %v2597
      %v2624 = vpack.c.b16 %v2600, %v2599
      %v2625 = vpack.c.b16 %v2602, %v2601
      %v2626 = vpack.c.b16 %v2604, %v2603
      %v2627 = vpack.c.b16 %v2606, %v2605
      %v2628 = vpack.c.b16 %v2608, %v2607
      %v2629 = vpack.c.b16 %v2610, %v2609
      %v2630 = vpack.c.b16 %v2612, %v2611
      %v2631 = vpack.c.b16 %v2614, %v2613
      %v2632 = vpack.c.b16 %v2616, %v2615
      %v2634 = vsel %vm322, %v2552, 0
      %v2637 = vsel %vm322, %v2617, 0
      %v2640 = vsel %vm322, %v2618, 0
      %v2643 = vsel %vm322, %v2619, 0
      %v2646 = vsel %vm322, %v2620, 0
      %v2649 = vsel %vm322, %v2621, 0
      %v2652 = vsel %vm322, %v2622, 0
      %v2655 = vsel %vm322, %v2623, 0
      %v2658 = vsel %vm322, %v2624, 0
      %v2661 = vsel %vm322, %v2625, 0
      %v2664 = vsel %vm322, %v2626, 0
      %v2667 = vsel %vm322, %v2627, 0
      %v2670 = vsel %vm322, %v2628, 0
      %v2673 = vsel %vm322, %v2629, 0
      %v2676 = vsel %vm322, %v2630, 0
      %v2679 = vsel %vm322, %v2631, 0
      %v2682 = vsel %vm322, %v2632, 0
      %2684 = vmatprep.subr.bf16.mxu0 0
      %2685 = vmatpush1.bf16.xpose.msra.mxu0 %v2637
      %2686 = vmatprep.subr.bf16.mxu0 0
      %2687 = vmatpush1.bf16.xpose.msra.mxu0 %v2640
      %2688 = vmatprep.subr.bf16.mxu0 0
      %2689 = vmatpush1.bf16.xpose.msra.mxu0 %v2643
      %2690 = vmatprep.subr.bf16.mxu0 0
      %2691 = vmatpush1.bf16.xpose.msra.mxu0 %v2646
      %2692 = vmatprep.subr.bf16.mxu0 0
      %2693 = vmatpush1.bf16.xpose.msra.mxu0 %v2649
      %2694 = vmatprep.subr.bf16.mxu0 0
      %2695 = vmatpush1.bf16.xpose.msra.mxu0 %v2652
      %2696 = vmatprep.subr.bf16.mxu0 0
      %2697 = vmatpush1.bf16.xpose.msra.mxu0 %v2655
      %2698 = vmatprep.subr.bf16.mxu0 0
      %2699 = vmatpush1.bf16.xpose.msra.mxu0 %v2658
      %2700 = vmatprep.subr.bf16.mxu0 0
      %2701 = vmatpush1.bf16.xpose.msra.mxu0 %v2661
      %2702 = vmatprep.subr.bf16.mxu0 0
      %2703 = vmatpush1.bf16.xpose.msra.mxu0 %v2664
      %2704 = vmatprep.subr.bf16.mxu0 0
      %2705 = vmatpush1.bf16.xpose.msra.mxu0 %v2667
      %2706 = vmatprep.subr.bf16.mxu0 0
      %2707 = vmatpush1.bf16.xpose.msra.mxu0 %v2670
      %2708 = vmatprep.subr.bf16.mxu0 0
      %2709 = vmatpush1.bf16.xpose.msra.mxu0 %v2673
      %2710 = vmatprep.subr.bf16.mxu0 0
      %2711 = vmatpush1.bf16.xpose.msra.mxu0 %v2676
      %2712 = vmatprep.subr.bf16.mxu0 0
      %2713 = vmatpush1.bf16.xpose.msra.mxu0 %v2679
      %2714 = vmatprep.subr.bf16.mxu0 0
      %2715 = vmatpush1.bf16.xpose.msra.mxu0 %v2682
      %2716 = vmatprep.mubr.bf16.mxu0 0
      %2717 = vmatmul.mubr.bf16.gmra.mrb[0].mxu0 %v2634
      %v2718 = vpop.f32.mrb[0].mxu0
      %v2719 = vadd.f32 0.0, %v2718
      %v2720 = vpop.f32.mrb[0].mxu0
      %v2721 = vadd.f32 0.0, %v2720
      %v2722 = vpop.f32.mrb[0].mxu0
      %v2723 = vpop.f32.mrb[0].mxu0
      %2724 = vdwg.mxu0
      %v2725 = vadd.f32 %v2549, %v2719
      %v2726 = vadd.f32 %v2550, %v2721
      %2727 = vst [vmem:[#allocation2] sm:$0xff] %v2725
      %2728 = vst [vmem:[#allocation2 + $0x8] sm:$0xff] %v2726
      %v2729 = vld [vmem:[%s2516] sm:$0xf]
      %v2730 = vld [vmem:[%s2516 + $0x4] sm:$0xf]
      %v2731 = vld [vmem:[%s2516 + $0x8] sm:$0x1]
      %v2732 = vld [vmem:[%s2516 + $0xc] sm:$0xf]
      %v2733 = vld [vmem:[%s2516 + $0x10] sm:$0xf]
      %v2734 = vld [vmem:[%s2516 + $0x14] sm:$0x1]
      %v2735 = vld [vmem:[%s2516 + $0x18] sm:$0xf]
      %v2736 = vld [vmem:[%s2516 + $0x1c] sm:$0xf]
      %v2737 = vld [vmem:[%s2516 + $0x20] sm:$0x1]
      %v2738 = vld [vmem:[%s2516 + $0x24] sm:$0xf]
      %v2739 = vld [vmem:[%s2516 + $0x28] sm:$0xf]
      %v2740 = vld [vmem:[%s2516 + $0x2c] sm:$0x1]
      %v2741 = vld [vmem:[%s2516 + $0x30] sm:$0xf]
      %v2742 = vld [vmem:[%s2516 + $0x34] sm:$0xf]
      %v2743 = vld [vmem:[%s2516 + $0x38] sm:$0x1]
      %v2744 = vld [vmem:[%s2516 + $0x3c] sm:$0xf]
      %v2745 = vld [vmem:[%s2516 + $0x40] sm:$0xf]
      %v2746 = vld [vmem:[%s2516 + $0x44] sm:$0x1]
      %v2747 = vld [vmem:[%s2516 + $0x48] sm:$0xf]
      %v2748 = vld [vmem:[%s2516 + $0x4c] sm:$0xf]
      %v2749 = vld [vmem:[%s2516 + $0x50] sm:$0x1]
      %v2750 = vld [vmem:[%s2516 + $0x54] sm:$0xf]
      %v2751 = vld [vmem:[%s2516 + $0x58] sm:$0xf]
      %v2752 = vld [vmem:[%s2516 + $0x5c] sm:$0x1]
      %v2753 = vld [vmem:[%s2516 + $0x60] sm:$0xf]
      %v2754 = vld [vmem:[%s2516 + $0x64] sm:$0xf]
      %v2755 = vld [vmem:[%s2516 + $0x68] sm:$0x1]
      %v2756 = vld [vmem:[%s2516 + $0x6c] sm:$0xf]
      %v2757 = vld [vmem:[%s2516 + $0x70] sm:$0xf]
      %v2758 = vld [vmem:[%s2516 + $0x74] sm:$0x1]
      %v2759 = vld [vmem:[%s2516 + $0x78] sm:$0xf]
      %v2760 = vld [vmem:[%s2516 + $0x7c] sm:$0xf]
      %v2761 = vld [vmem:[%s2516 + $0x80] sm:$0x1]
      %v2762 = vld [vmem:[%s2516 + $0x84] sm:$0xf]
      %v2763 = vld [vmem:[%s2516 + $0x88] sm:$0xf]
      %v2764 = vld [vmem:[%s2516 + $0x8c] sm:$0x1]
      %v2765 = vld [vmem:[%s2516 + $0x90] sm:$0xf]
      %v2766 = vld [vmem:[%s2516 + $0x94] sm:$0xf]
      %v2767 = vld [vmem:[%s2516 + $0x98] sm:$0x1]
      %v2768 = vld [vmem:[%s2516 + $0x9c] sm:$0xf]
      %v2769 = vld [vmem:[%s2516 + $0xa0] sm:$0xf]
      %v2770 = vld [vmem:[%s2516 + $0xa4] sm:$0x1]
      %v2771 = vld [vmem:[%s2516 + $0xa8] sm:$0xf]
      %v2772 = vld [vmem:[%s2516 + $0xac] sm:$0xf]
      %v2773 = vld [vmem:[%s2516 + $0xb0] sm:$0x1]
      %v2774 = vld [vmem:[%s2516 + $0xb4] sm:$0xf]
      %v2775 = vld [vmem:[%s2516 + $0xb8] sm:$0xf]
      %v2776 = vld [vmem:[%s2516 + $0xbc] sm:$0x1]
      %v2778 = vshrl.u32 %v2729, 16
      %v2780 = vrot.slane %v2778, 4
      %v2781 = vshll.u32 %v2729, 16
      %v2783 = vrot.slane %v2781, 5
      %v2784 = vor.u32 %v2780, %v2783
      %v2785 = vrot.slane %v2784, 4
      %v2787 = vshll.u32 %v2730, 16
      %v2789 = vrot.slane %v2787, 5
      %v2790 = vsel %vm469, %v2785, %v2789
      %v2791 = vshrl.u32 %v2730, 16
      %v2793 = vrot.slane %v2791, 4
      %v2794 = vor.u32 %v2793, %v2789
      %v2795 = vrot.slane %v2794, 4
      %v2797 = vshll.u32 %v2731, 16
      %v2799 = vrot.slane %v2797, 5
      %v2800 = vsel %vm469, %v2795, %v2799
      %v2802 = vshrl.u32 %v2732, 16
      %v2804 = vrot.slane %v2802, 4
      %v2805 = vshll.u32 %v2732, 16
      %v2807 = vrot.slane %v2805, 5
      %v2808 = vor.u32 %v2804, %v2807
      %v2809 = vrot.slane %v2808, 4
      %v2811 = vshll.u32 %v2733, 16
      %v2813 = vrot.slane %v2811, 5
      %v2814 = vsel %vm469, %v2809, %v2813
      %v2815 = vshrl.u32 %v2733, 16
      %v2817 = vrot.slane %v2815, 4
      %v2818 = vor.u32 %v2817, %v2813
      %v2819 = vrot.slane %v2818, 4
      %v2821 = vshll.u32 %v2734, 16
      %v2823 = vrot.slane %v2821, 5
      %v2824 = vsel %vm469, %v2819, %v2823
      %v2826 = vshrl.u32 %v2735, 16
      %v2828 = vrot.slane %v2826, 4
      %v2829 = vshll.u32 %v2735, 16
      %v2831 = vrot.slane %v2829, 5
      %v2832 = vor.u32 %v2828, %v2831
      %v2833 = vrot.slane %v2832, 4
      %v2835 = vshll.u32 %v2736, 16
      %v2837 = vrot.slane %v2835, 5
      %v2838 = vsel %vm469, %v2833, %v2837
      %v2839 = vshrl.u32 %v2736, 16
      %v2841 = vrot.slane %v2839, 4
      %v2842 = vor.u32 %v2841, %v2837
      %v2843 = vrot.slane %v2842, 4
      %v2845 = vshll.u32 %v2737, 16
      %v2847 = vrot.slane %v2845, 5
      %v2848 = vsel %vm469, %v2843, %v2847
      %v2850 = vshrl.u32 %v2738, 16
      %v2852 = vrot.slane %v2850, 4
      %v2853 = vshll.u32 %v2738, 16
      %v2855 = vrot.slane %v2853, 5
      %v2856 = vor.u32 %v2852, %v2855
      %v2857 = vrot.slane %v2856, 4
      %v2859 = vshll.u32 %v2739, 16
      %v2861 = vrot.slane %v2859, 5
      %v2862 = vsel %vm469, %v2857, %v2861
      %v2863 = vshrl.u32 %v2739, 16
      %v2865 = vrot.slane %v2863, 4
      %v2866 = vor.u32 %v2865, %v2861
      %v2867 = vrot.slane %v2866, 4
      %v2869 = vshll.u32 %v2740, 16
      %v2871 = vrot.slane %v2869, 5
      %v2872 = vsel %vm469, %v2867, %v2871
      %v2874 = vshrl.u32 %v2741, 16
      %v2876 = vrot.slane %v2874, 4
      %v2877 = vshll.u32 %v2741, 16
      %v2879 = vrot.slane %v2877, 5
      %v2880 = vor.u32 %v2876, %v2879
      %v2881 = vrot.slane %v2880, 4
      %v2883 = vshll.u32 %v2742, 16
      %v2885 = vrot.slane %v2883, 5
      %v2886 = vsel %vm469, %v2881, %v2885
      %v2887 = vshrl.u32 %v2742, 16
      %v2889 = vrot.slane %v2887, 4
      %v2890 = vor.u32 %v2889, %v2885
      %v2891 = vrot.slane %v2890, 4
      %v2893 = vshll.u32 %v2743, 16
      %v2895 = vrot.slane %v2893, 5
      %v2896 = vsel %vm469, %v2891, %v2895
      %v2898 = vshrl.u32 %v2744, 16
      %v2900 = vrot.slane %v2898, 4
      %v2901 = vshll.u32 %v2744, 16
      %v2903 = vrot.slane %v2901, 5
      %v2904 = vor.u32 %v2900, %v2903
      %v2905 = vrot.slane %v2904, 4
      %v2907 = vshll.u32 %v2745, 16
      %v2909 = vrot.slane %v2907, 5
      %v2910 = vsel %vm469, %v2905, %v2909
      %v2911 = vshrl.u32 %v2745, 16
      %v2913 = vrot.slane %v2911, 4
      %v2914 = vor.u32 %v2913, %v2909
      %v2915 = vrot.slane %v2914, 4
      %v2917 = vshll.u32 %v2746, 16
      %v2919 = vrot.slane %v2917, 5
      %v2920 = vsel %vm469, %v2915, %v2919
      %v2922 = vshrl.u32 %v2747, 16
      %v2924 = vrot.slane %v2922, 4
      %v2925 = vshll.u32 %v2747, 16
      %v2927 = vrot.slane %v2925, 5
      %v2928 = vor.u32 %v2924, %v2927
      %v2929 = vrot.slane %v2928, 4
      %v2931 = vshll.u32 %v2748, 16
      %v2933 = vrot.slane %v2931, 5
      %v2934 = vsel %vm469, %v2929, %v2933
      %v2935 = vshrl.u32 %v2748, 16
      %v2937 = vrot.slane %v2935, 4
      %v2938 = vor.u32 %v2937, %v2933
      %v2939 = vrot.slane %v2938, 4
      %v2941 = vshll.u32 %v2749, 16
      %v2943 = vrot.slane %v2941, 5
      %v2944 = vsel %vm469, %v2939, %v2943
      %v2946 = vshrl.u32 %v2750, 16
      %v2948 = vrot.slane %v2946, 4
      %v2949 = vshll.u32 %v2750, 16
      %v2951 = vrot.slane %v2949, 5
      %v2952 = vor.u32 %v2948, %v2951
      %v2953 = vrot.slane %v2952, 4
      %v2955 = vshll.u32 %v2751, 16
      %v2957 = vrot.slane %v2955, 5
      %v2958 = vsel %vm469, %v2953, %v2957
      %v2959 = vshrl.u32 %v2751, 16
      %v2961 = vrot.slane %v2959, 4
      %v2962 = vor.u32 %v2961, %v2957
      %v2963 = vrot.slane %v2962, 4
      %v2965 = vshll.u32 %v2752, 16
      %v2967 = vrot.slane %v2965, 5
      %v2968 = vsel %vm469, %v2963, %v2967
      %v2970 = vshrl.u32 %v2753, 16
      %v2972 = vrot.slane %v2970, 4
      %v2973 = vshll.u32 %v2753, 16
      %v2975 = vrot.slane %v2973, 5
      %v2976 = vor.u32 %v2972, %v2975
      %v2977 = vrot.slane %v2976, 4
      %v2979 = vshll.u32 %v2754, 16
      %v2981 = vrot.slane %v2979, 5
      %v2982 = vsel %vm469, %v2977, %v2981
      %v2983 = vshrl.u32 %v2754, 16
      %v2985 = vrot.slane %v2983, 4
      %v2986 = vor.u32 %v2985, %v2981
      %v2987 = vrot.slane %v2986, 4
      %v2989 = vshll.u32 %v2755, 16
      %v2991 = vrot.slane %v2989, 5
      %v2992 = vsel %vm469, %v2987, %v2991
      %v2994 = vshrl.u32 %v2756, 16
      %v2996 = vrot.slane %v2994, 4
      %v2997 = vshll.u32 %v2756, 16
      %v2999 = vrot.slane %v2997, 5
      %v3000 = vor.u32 %v2996, %v2999
      %v3001 = vrot.slane %v3000, 4
      %v3003 = vshll.u32 %v2757, 16
      %v3005 = vrot.slane %v3003, 5
      %v3006 = vsel %vm469, %v3001, %v3005
      %v3007 = vshrl.u32 %v2757, 16
      %v3009 = vrot.slane %v3007, 4
      %v3010 = vor.u32 %v3009, %v3005
      %v3011 = vrot.slane %v3010, 4
      %v3013 = vshll.u32 %v2758, 16
      %v3015 = vrot.slane %v3013, 5
      %v3016 = vsel %vm469, %v3011, %v3015
      %v3018 = vshrl.u32 %v2759, 16
      %v3020 = vrot.slane %v3018, 4
      %v3021 = vshll.u32 %v2759, 16
      %v3023 = vrot.slane %v3021, 5
      %v3024 = vor.u32 %v3020, %v3023
      %v3025 = vrot.slane %v3024, 4
      %v3027 = vshll.u32 %v2760, 16
      %v3029 = vrot.slane %v3027, 5
      %v3030 = vsel %vm469, %v3025, %v3029
      %v3031 = vshrl.u32 %v2760, 16
      %v3033 = vrot.slane %v3031, 4
      %v3034 = vor.u32 %v3033, %v3029
      %v3035 = vrot.slane %v3034, 4
      %v3037 = vshll.u32 %v2761, 16
      %v3039 = vrot.slane %v3037, 5
      %v3040 = vsel %vm469, %v3035, %v3039
      %v3042 = vshrl.u32 %v2762, 16
      %v3044 = vrot.slane %v3042, 4
      %v3045 = vshll.u32 %v2762, 16
      %v3047 = vrot.slane %v3045, 5
      %v3048 = vor.u32 %v3044, %v3047
      %v3049 = vrot.slane %v3048, 4
      %v3051 = vshll.u32 %v2763, 16
      %v3053 = vrot.slane %v3051, 5
      %v3054 = vsel %vm469, %v3049, %v3053
      %v3055 = vshrl.u32 %v2763, 16
      %v3057 = vrot.slane %v3055, 4
      %v3058 = vor.u32 %v3057, %v3053
      %v3059 = vrot.slane %v3058, 4
      %v3061 = vshll.u32 %v2764, 16
      %v3063 = vrot.slane %v3061, 5
      %v3064 = vsel %vm469, %v3059, %v3063
      %v3066 = vshrl.u32 %v2765, 16
      %v3068 = vrot.slane %v3066, 4
      %v3069 = vshll.u32 %v2765, 16
      %v3071 = vrot.slane %v3069, 5
      %v3072 = vor.u32 %v3068, %v3071
      %v3073 = vrot.slane %v3072, 4
      %v3075 = vshll.u32 %v2766, 16
      %v3077 = vrot.slane %v3075, 5
      %v3078 = vsel %vm469, %v3073, %v3077
      %v3079 = vshrl.u32 %v2766, 16
      %v3081 = vrot.slane %v3079, 4
      %v3082 = vor.u32 %v3081, %v3077
      %v3083 = vrot.slane %v3082, 4
      %v3085 = vshll.u32 %v2767, 16
      %v3087 = vrot.slane %v3085, 5
      %v3088 = vsel %vm469, %v3083, %v3087
      %v3090 = vshrl.u32 %v2768, 16
      %v3092 = vrot.slane %v3090, 4
      %v3093 = vshll.u32 %v2768, 16
      %v3095 = vrot.slane %v3093, 5
      %v3096 = vor.u32 %v3092, %v3095
      %v3097 = vrot.slane %v3096, 4
      %v3099 = vshll.u32 %v2769, 16
      %v3101 = vrot.slane %v3099, 5
      %v3102 = vsel %vm469, %v3097, %v3101
      %v3103 = vshrl.u32 %v2769, 16
      %v3105 = vrot.slane %v3103, 4
      %v3106 = vor.u32 %v3105, %v3101
      %v3107 = vrot.slane %v3106, 4
      %v3109 = vshll.u32 %v2770, 16
      %v3111 = vrot.slane %v3109, 5
      %v3112 = vsel %vm469, %v3107, %v3111
      %v3114 = vshrl.u32 %v2771, 16
      %v3116 = vrot.slane %v3114, 4
      %v3117 = vshll.u32 %v2771, 16
      %v3119 = vrot.slane %v3117, 5
      %v3120 = vor.u32 %v3116, %v3119
      %v3121 = vrot.slane %v3120, 4
      %v3123 = vshll.u32 %v2772, 16
      %v3125 = vrot.slane %v3123, 5
      %v3126 = vsel %vm469, %v3121, %v3125
      %v3127 = vshrl.u32 %v2772, 16
      %v3129 = vrot.slane %v3127, 4
      %v3130 = vor.u32 %v3129, %v3125
      %v3131 = vrot.slane %v3130, 4
      %v3133 = vshll.u32 %v2773, 16
      %v3135 = vrot.slane %v3133, 5
      %v3136 = vsel %vm469, %v3131, %v3135
      %v3138 = vshrl.u32 %v2774, 16
      %v3140 = vrot.slane %v3138, 4
      %v3141 = vshll.u32 %v2774, 16
      %v3143 = vrot.slane %v3141, 5
      %v3144 = vor.u32 %v3140, %v3143
      %v3145 = vrot.slane %v3144, 4
      %v3147 = vshll.u32 %v2775, 16
      %v3149 = vrot.slane %v3147, 5
      %v3150 = vsel %vm469, %v3145, %v3149
      %v3151 = vshrl.u32 %v2775, 16
      %v3153 = vrot.slane %v3151, 4
      %v3154 = vor.u32 %v3153, %v3149
      %v3155 = vrot.slane %v3154, 4
      %v3157 = vshll.u32 %v2776, 16
      %v3159 = vrot.slane %v3157, 5
      %v3160 = vsel %vm469, %v3155, %v3159
      %v3161 = vld [vmem:[#allocation2] sm:$0xff]
      %v3162 = vld [vmem:[#allocation2 + $0x8] sm:$0xff]
      %s3163 = scalar_lea.vmem %s1, 28
      %v3164 = vld [vmem:[%s3163] sm:$0xf]
      %v3165 = vunpack.c.l.b16 %v2790
      %v3166 = vunpack.c.l.b16 %v2800
      %v3167 = vunpack.c.l.b16 %v2814
      %v3168 = vunpack.c.l.b16 %v2824
      %v3169 = vunpack.c.l.b16 %v2838
      %v3170 = vunpack.c.l.b16 %v2848
      %v3171 = vunpack.c.l.b16 %v2862
      %v3172 = vunpack.c.l.b16 %v2872
      %v3173 = vunpack.c.l.b16 %v2886
      %v3174 = vunpack.c.l.b16 %v2896
      %v3175 = vunpack.c.l.b16 %v2910
      %v3176 = vunpack.c.l.b16 %v2920
      %v3177 = vunpack.c.l.b16 %v2934
      %v3178 = vunpack.c.l.b16 %v2944
      %v3179 = vunpack.c.l.b16 %v2958
      %v3180 = vunpack.c.l.b16 %v2968
      %v3181 = vunpack.c.l.b16 %v2982
      %v3182 = vunpack.c.l.b16 %v2992
      %v3183 = vunpack.c.l.b16 %v3006
      %v3184 = vunpack.c.l.b16 %v3016
      %v3185 = vunpack.c.l.b16 %v3030
      %v3186 = vunpack.c.l.b16 %v3040
      %v3187 = vunpack.c.l.b16 %v3054
      %v3188 = vunpack.c.l.b16 %v3064
      %v3189 = vunpack.c.l.b16 %v3078
      %v3190 = vunpack.c.l.b16 %v3088
      %v3191 = vunpack.c.l.b16 %v3102
      %v3192 = vunpack.c.l.b16 %v3112
      %v3193 = vunpack.c.l.b16 %v3126
      %v3194 = vunpack.c.l.b16 %v3136
      %v3195 = vunpack.c.l.b16 %v3150
      %v3196 = vunpack.c.l.b16 %v3160
      %v3197 = vpack.c.b16 %v3166, %v3165
      %v3198 = vpack.c.b16 %v3168, %v3167
      %v3199 = vpack.c.b16 %v3170, %v3169
      %v3200 = vpack.c.b16 %v3172, %v3171
      %v3201 = vpack.c.b16 %v3174, %v3173
      %v3202 = vpack.c.b16 %v3176, %v3175
      %v3203 = vpack.c.b16 %v3178, %v3177
      %v3204 = vpack.c.b16 %v3180, %v3179
      %v3205 = vpack.c.b16 %v3182, %v3181
      %v3206 = vpack.c.b16 %v3184, %v3183
      %v3207 = vpack.c.b16 %v3186, %v3185
      %v3208 = vpack.c.b16 %v3188, %v3187
      %v3209 = vpack.c.b16 %v3190, %v3189
      %v3210 = vpack.c.b16 %v3192, %v3191
      %v3211 = vpack.c.b16 %v3194, %v3193
      %v3212 = vpack.c.b16 %v3196, %v3195
      %v3214 = vsel %vm322, %v3164, 0
      %v3217 = vsel %vm322, %v3197, 0
      %v3220 = vsel %vm322, %v3198, 0
      %v3223 = vsel %vm322, %v3199, 0
      %v3226 = vsel %vm322, %v3200, 0
      %v3229 = vsel %vm322, %v3201, 0
      %v3232 = vsel %vm322, %v3202, 0
      %v3235 = vsel %vm322, %v3203, 0
      %v3238 = vsel %vm322, %v3204, 0
      %v3241 = vsel %vm322, %v3205, 0
      %v3244 = vsel %vm322, %v3206, 0
      %v3247 = vsel %vm322, %v3207, 0
      %v3250 = vsel %vm322, %v3208, 0
      %v3253 = vsel %vm322, %v3209, 0
      %v3256 = vsel %vm322, %v3210, 0
      %v3259 = vsel %vm322, %v3211, 0
      %v3262 = vsel %vm322, %v3212, 0
      %3264 = vmatprep.subr.bf16.mxu0 0
      %3265 = vmatpush1.bf16.xpose.msra.mxu0 %v3217
      %3266 = vmatprep.subr.bf16.mxu0 0
      %3267 = vmatpush1.bf16.xpose.msra.mxu0 %v3220
      %3268 = vmatprep.subr.bf16.mxu0 0
      %3269 = vmatpush1.bf16.xpose.msra.mxu0 %v3223
      %3270 = vmatprep.subr.bf16.mxu0 0
      %3271 = vmatpush1.bf16.xpose.msra.mxu0 %v3226
      %3272 = vmatprep.subr.bf16.mxu0 0
      %3273 = vmatpush1.bf16.xpose.msra.mxu0 %v3229
      %3274 = vmatprep.subr.bf16.mxu0 0
      %3275 = vmatpush1.bf16.xpose.msra.mxu0 %v3232
      %3276 = vmatprep.subr.bf16.mxu0 0
      %3277 = vmatpush1.bf16.xpose.msra.mxu0 %v3235
      %3278 = vmatprep.subr.bf16.mxu0 0
      %3279 = vmatpush1.bf16.xpose.msra.mxu0 %v3238
      %3280 = vmatprep.subr.bf16.mxu0 0
      %3281 = vmatpush1.bf16.xpose.msra.mxu0 %v3241
      %3282 = vmatprep.subr.bf16.mxu0 0
      %3283 = vmatpush1.bf16.xpose.msra.mxu0 %v3244
      %3284 = vmatprep.subr.bf16.mxu0 0
      %3285 = vmatpush1.bf16.xpose.msra.mxu0 %v3247
      %3286 = vmatprep.subr.bf16.mxu0 0
      %3287 = vmatpush1.bf16.xpose.msra.mxu0 %v3250
      %3288 = vmatprep.subr.bf16.mxu0 0
      %3289 = vmatpush1.bf16.xpose.msra.mxu0 %v3253
      %3290 = vmatprep.subr.bf16.mxu0 0
      %3291 = vmatpush1.bf16.xpose.msra.mxu0 %v3256
      %3292 = vmatprep.subr.bf16.mxu0 0
      %3293 = vmatpush1.bf16.xpose.msra.mxu0 %v3259
      %3294 = vmatprep.subr.bf16.mxu0 0
      %3295 = vmatpush1.bf16.xpose.msra.mxu0 %v3262
      %3296 = vmatprep.mubr.bf16.mxu0 0
      %3297 = vmatmul.mubr.bf16.gmra.mrb[0].mxu0 %v3214
      %v3298 = vpop.f32.mrb[0].mxu0
      %v3299 = vadd.f32 0.0, %v3298
      %v3300 = vpop.f32.mrb[0].mxu0
      %v3301 = vadd.f32 0.0, %v3300
      %v3302 = vpop.f32.mrb[0].mxu0
      %v3303 = vpop.f32.mrb[0].mxu0
      %3304 = vdwg.mxu0
      %v3305 = vadd.f32 %v3161, %v3299
      %v3306 = vadd.f32 %v3162, %v3301
      %3307 = vst [vmem:[#allocation2] sm:$0xff] %v3305
      %3308 = vst [vmem:[#allocation2 + $0x8] sm:$0xff] %v3306
      %v3309 = vld [vmem:[%s2516] sm:$0xe]
      %v3310 = vld [vmem:[%s2516 + $0x4] sm:$0xf]
      %v3311 = vld [vmem:[%s2516 + $0x8] sm:$0x1]
      %v3312 = vld [vmem:[%s2516 + $0xc] sm:$0xe]
      %v3313 = vld [vmem:[%s2516 + $0x10] sm:$0xf]
      %v3314 = vld [vmem:[%s2516 + $0x14] sm:$0x1]
      %v3315 = vld [vmem:[%s2516 + $0x18] sm:$0xe]
      %v3316 = vld [vmem:[%s2516 + $0x1c] sm:$0xf]
      %v3317 = vld [vmem:[%s2516 + $0x20] sm:$0x1]
      %v3318 = vld [vmem:[%s2516 + $0x24] sm:$0xe]
      %v3319 = vld [vmem:[%s2516 + $0x28] sm:$0xf]
      %v3320 = vld [vmem:[%s2516 + $0x2c] sm:$0x1]
      %v3321 = vld [vmem:[%s2516 + $0x30] sm:$0xe]
      %v3322 = vld [vmem:[%s2516 + $0x34] sm:$0xf]
      %v3323 = vld [vmem:[%s2516 + $0x38] sm:$0x1]
      %v3324 = vld [vmem:[%s2516 + $0x3c] sm:$0xe]
      %v3325 = vld [vmem:[%s2516 + $0x40] sm:$0xf]
      %v3326 = vld [vmem:[%s2516 + $0x44] sm:$0x1]
      %v3327 = vld [vmem:[%s2516 + $0x48] sm:$0xe]
      %v3328 = vld [vmem:[%s2516 + $0x4c] sm:$0xf]
      %v3329 = vld [vmem:[%s2516 + $0x50] sm:$0x1]
      %v3330 = vld [vmem:[%s2516 + $0x54] sm:$0xe]
      %v3331 = vld [vmem:[%s2516 + $0x58] sm:$0xf]
      %v3332 = vld [vmem:[%s2516 + $0x5c] sm:$0x1]
      %v3333 = vld [vmem:[%s2516 + $0x60] sm:$0xe]
      %v3334 = vld [vmem:[%s2516 + $0x64] sm:$0xf]
      %v3335 = vld [vmem:[%s2516 + $0x68] sm:$0x1]
      %v3336 = vld [vmem:[%s2516 + $0x6c] sm:$0xe]
      %v3337 = vld [vmem:[%s2516 + $0x70] sm:$0xf]
      %v3338 = vld [vmem:[%s2516 + $0x74] sm:$0x1]
      %v3339 = vld [vmem:[%s2516 + $0x78] sm:$0xe]
      %v3340 = vld [vmem:[%s2516 + $0x7c] sm:$0xf]
      %v3341 = vld [vmem:[%s2516 + $0x80] sm:$0x1]
      %v3342 = vld [vmem:[%s2516 + $0x84] sm:$0xe]
      %v3343 = vld [vmem:[%s2516 + $0x88] sm:$0xf]
      %v3344 = vld [vmem:[%s2516 + $0x8c] sm:$0x1]
      %v3345 = vld [vmem:[%s2516 + $0x90] sm:$0xe]
      %v3346 = vld [vmem:[%s2516 + $0x94] sm:$0xf]
      %v3347 = vld [vmem:[%s2516 + $0x98] sm:$0x1]
      %v3348 = vld [vmem:[%s2516 + $0x9c] sm:$0xe]
      %v3349 = vld [vmem:[%s2516 + $0xa0] sm:$0xf]
      %v3350 = vld [vmem:[%s2516 + $0xa4] sm:$0x1]
      %v3351 = vld [vmem:[%s2516 + $0xa8] sm:$0xe]
      %v3352 = vld [vmem:[%s2516 + $0xac] sm:$0xf]
      %v3353 = vld [vmem:[%s2516 + $0xb0] sm:$0x1]
      %v3354 = vld [vmem:[%s2516 + $0xb4] sm:$0xe]
      %v3355 = vld [vmem:[%s2516 + $0xb8] sm:$0xf]
      %v3356 = vld [vmem:[%s2516 + $0xbc] sm:$0x1]
      %v3405 = vrot.slane %v3309, 5
      %v3406 = vrot.slane %v3405, 4
      %v3407 = vrot.slane %v3310, 5
      %v3408 = vsel %vm1100, %v3406, %v3407
      %v3409 = vrot.slane %v3407, 4
      %v3410 = vrot.slane %v3311, 5
      %v3411 = vsel %vm1100, %v3409, %v3410
      %v3412 = vrot.slane %v3312, 5
      %v3413 = vrot.slane %v3412, 4
      %v3414 = vrot.slane %v3313, 5
      %v3415 = vsel %vm1100, %v3413, %v3414
      %v3416 = vrot.slane %v3414, 4
      %v3417 = vrot.slane %v3314, 5
      %v3418 = vsel %vm1100, %v3416, %v3417
      %v3419 = vrot.slane %v3315, 5
      %v3420 = vrot.slane %v3419, 4
      %v3421 = vrot.slane %v3316, 5
      %v3422 = vsel %vm1100, %v3420, %v3421
      %v3423 = vrot.slane %v3421, 4
      %v3424 = vrot.slane %v3317, 5
      %v3425 = vsel %vm1100, %v3423, %v3424
      %v3426 = vrot.slane %v3318, 5
      %v3427 = vrot.slane %v3426, 4
      %v3428 = vrot.slane %v3319, 5
      %v3429 = vsel %vm1100, %v3427, %v3428
      %v3430 = vrot.slane %v3428, 4
      %v3431 = vrot.slane %v3320, 5
      %v3432 = vsel %vm1100, %v3430, %v3431
      %v3433 = vrot.slane %v3321, 5
      %v3434 = vrot.slane %v3433, 4
      %v3435 = vrot.slane %v3322, 5
      %v3436 = vsel %vm1100, %v3434, %v3435
      %v3437 = vrot.slane %v3435, 4
      %v3438 = vrot.slane %v3323, 5
      %v3439 = vsel %vm1100, %v3437, %v3438
      %v3440 = vrot.slane %v3324, 5
      %v3441 = vrot.slane %v3440, 4
      %v3442 = vrot.slane %v3325, 5
      %v3443 = vsel %vm1100, %v3441, %v3442
      %v3444 = vrot.slane %v3442, 4
      %v3445 = vrot.slane %v3326, 5
      %v3446 = vsel %vm1100, %v3444, %v3445
      %v3447 = vrot.slane %v3327, 5
      %v3448 = vrot.slane %v3447, 4
      %v3449 = vrot.slane %v3328, 5
      %v3450 = vsel %vm1100, %v3448, %v3449
      %v3451 = vrot.slane %v3449, 4
      %v3452 = vrot.slane %v3329, 5
      %v3453 = vsel %vm1100, %v3451, %v3452
      %v3454 = vrot.slane %v3330, 5
      %v3455 = vrot.slane %v3454, 4
      %v3456 = vrot.slane %v3331, 5
      %v3457 = vsel %vm1100, %v3455, %v3456
      %v3458 = vrot.slane %v3456, 4
      %v3459 = vrot.slane %v3332, 5
      %v3460 = vsel %vm1100, %v3458, %v3459
      %v3461 = vrot.slane %v3333, 5
      %v3462 = vrot.slane %v3461, 4
      %v3463 = vrot.slane %v3334, 5
      %v3464 = vsel %vm1100, %v3462, %v3463
      %v3465 = vrot.slane %v3463, 4
      %v3466 = vrot.slane %v3335, 5
      %v3467 = vsel %vm1100, %v3465, %v3466
      %v3468 = vrot.slane %v3336, 5
      %v3469 = vrot.slane %v3468, 4
      %v3470 = vrot.slane %v3337, 5
      %v3471 = vsel %vm1100, %v3469, %v3470
      %v3472 = vrot.slane %v3470, 4
      %v3473 = vrot.slane %v3338, 5
      %v3474 = vsel %vm1100, %v3472, %v3473
      %v3475 = vrot.slane %v3339, 5
      %v3476 = vrot.slane %v3475, 4
      %v3477 = vrot.slane %v3340, 5
      %v3478 = vsel %vm1100, %v3476, %v3477
      %v3479 = vrot.slane %v3477, 4
      %v3480 = vrot.slane %v3341, 5
      %v3481 = vsel %vm1100, %v3479, %v3480
      %v3482 = vrot.slane %v3342, 5
      %v3483 = vrot.slane %v3482, 4
      %v3484 = vrot.slane %v3343, 5
      %v3485 = vsel %vm1100, %v3483, %v3484
      %v3486 = vrot.slane %v3484, 4
      %v3487 = vrot.slane %v3344, 5
      %v3488 = vsel %vm1100, %v3486, %v3487
      %v3489 = vrot.slane %v3345, 5
      %v3490 = vrot.slane %v3489, 4
      %v3491 = vrot.slane %v3346, 5
      %v3492 = vsel %vm1100, %v3490, %v3491
      %v3493 = vrot.slane %v3491, 4
      %v3494 = vrot.slane %v3347, 5
      %v3495 = vsel %vm1100, %v3493, %v3494
      %v3496 = vrot.slane %v3348, 5
      %v3497 = vrot.slane %v3496, 4
      %v3498 = vrot.slane %v3349, 5
      %v3499 = vsel %vm1100, %v3497, %v3498
      %v3500 = vrot.slane %v3498, 4
      %v3501 = vrot.slane %v3350, 5
      %v3502 = vsel %vm1100, %v3500, %v3501
      %v3503 = vrot.slane %v3351, 5
      %v3504 = vrot.slane %v3503, 4
      %v3505 = vrot.slane %v3352, 5
      %v3506 = vsel %vm1100, %v3504, %v3505
      %v3507 = vrot.slane %v3505, 4
      %v3508 = vrot.slane %v3353, 5
      %v3509 = vsel %vm1100, %v3507, %v3508
      %v3510 = vrot.slane %v3354, 5
      %v3511 = vrot.slane %v3510, 4
      %v3512 = vrot.slane %v3355, 5
      %v3513 = vsel %vm1100, %v3511, %v3512
      %v3514 = vrot.slane %v3512, 4
      %v3515 = vrot.slane %v3356, 5
      %v3516 = vsel %vm1100, %v3514, %v3515
      %v3517 = vld [vmem:[#allocation2] sm:$0xff]
      %v3518 = vld [vmem:[#allocation2 + $0x8] sm:$0xff]
      %s3519 = scalar_lea.vmem %s1, 32
      %v3520 = vld [vmem:[%s3519] sm:$0xf]
      %v3521 = vunpack.c.l.b16 %v3408
      %v3522 = vunpack.c.l.b16 %v3411
      %v3523 = vunpack.c.l.b16 %v3415
      %v3524 = vunpack.c.l.b16 %v3418
      %v3525 = vunpack.c.l.b16 %v3422
      %v3526 = vunpack.c.l.b16 %v3425
      %v3527 = vunpack.c.l.b16 %v3429
      %v3528 = vunpack.c.l.b16 %v3432
      %v3529 = vunpack.c.l.b16 %v3436
      %v3530 = vunpack.c.l.b16 %v3439
      %v3531 = vunpack.c.l.b16 %v3443
      %v3532 = vunpack.c.l.b16 %v3446
      %v3533 = vunpack.c.l.b16 %v3450
      %v3534 = vunpack.c.l.b16 %v3453
      %v3535 = vunpack.c.l.b16 %v3457
      %v3536 = vunpack.c.l.b16 %v3460
      %v3537 = vunpack.c.l.b16 %v3464
      %v3538 = vunpack.c.l.b16 %v3467
      %v3539 = vunpack.c.l.b16 %v3471
      %v3540 = vunpack.c.l.b16 %v3474
      %v3541 = vunpack.c.l.b16 %v3478
      %v3542 = vunpack.c.l.b16 %v3481
      %v3543 = vunpack.c.l.b16 %v3485
      %v3544 = vunpack.c.l.b16 %v3488
      %v3545 = vunpack.c.l.b16 %v3492
      %v3546 = vunpack.c.l.b16 %v3495
      %v3547 = vunpack.c.l.b16 %v3499
      %v3548 = vunpack.c.l.b16 %v3502
      %v3549 = vunpack.c.l.b16 %v3506
      %v3550 = vunpack.c.l.b16 %v3509
      %v3551 = vunpack.c.l.b16 %v3513
      %v3552 = vunpack.c.l.b16 %v3516
      %v3553 = vpack.c.b16 %v3522, %v3521
      %v3554 = vpack.c.b16 %v3524, %v3523
      %v3555 = vpack.c.b16 %v3526, %v3525
      %v3556 = vpack.c.b16 %v3528, %v3527
      %v3557 = vpack.c.b16 %v3530, %v3529
      %v3558 = vpack.c.b16 %v3532, %v3531
      %v3559 = vpack.c.b16 %v3534, %v3533
      %v3560 = vpack.c.b16 %v3536, %v3535
      %v3561 = vpack.c.b16 %v3538, %v3537
      %v3562 = vpack.c.b16 %v3540, %v3539
      %v3563 = vpack.c.b16 %v3542, %v3541
      %v3564 = vpack.c.b16 %v3544, %v3543
      %v3565 = vpack.c.b16 %v3546, %v3545
      %v3566 = vpack.c.b16 %v3548, %v3547
      %v3567 = vpack.c.b16 %v3550, %v3549
      %v3568 = vpack.c.b16 %v3552, %v3551
      %v3570 = vsel %vm322, %v3520, 0
      %v3573 = vsel %vm322, %v3553, 0
      %v3576 = vsel %vm322, %v3554, 0
      %v3579 = vsel %vm322, %v3555, 0
      %v3582 = vsel %vm322, %v3556, 0
      %v3585 = vsel %vm322, %v3557, 0
      %v3588 = vsel %vm322, %v3558, 0
      %v3591 = vsel %vm322, %v3559, 0
      %v3594 = vsel %vm322, %v3560, 0
      %v3597 = vsel %vm322, %v3561, 0
      %v3600 = vsel %vm322, %v3562, 0
      %v3603 = vsel %vm322, %v3563, 0
      %v3606 = vsel %vm322, %v3564, 0
      %v3609 = vsel %vm322, %v3565, 0
      %v3612 = vsel %vm322, %v3566, 0
      %v3615 = vsel %vm322, %v3567, 0
      %v3618 = vsel %vm322, %v3568, 0
      %3620 = vmatprep.subr.bf16.mxu0 0
      %3621 = vmatpush1.bf16.xpose.msra.mxu0 %v3573
      %3622 = vmatprep.subr.bf16.mxu0 0
      %3623 = vmatpush1.bf16.xpose.msra.mxu0 %v3576
      %3624 = vmatprep.subr.bf16.mxu0 0
      %3625 = vmatpush1.bf16.xpose.msra.mxu0 %v3579
      %3626 = vmatprep.subr.bf16.mxu0 0
      %3627 = vmatpush1.bf16.xpose.msra.mxu0 %v3582
      %3628 = vmatprep.subr.bf16.mxu0 0
      %3629 = vmatpush1.bf16.xpose.msra.mxu0 %v3585
      %3630 = vmatprep.subr.bf16.mxu0 0
      %3631 = vmatpush1.bf16.xpose.msra.mxu0 %v3588
      %3632 = vmatprep.subr.bf16.mxu0 0
      %3633 = vmatpush1.bf16.xpose.msra.mxu0 %v3591
      %3634 = vmatprep.subr.bf16.mxu0 0
      %3635 = vmatpush1.bf16.xpose.msra.mxu0 %v3594
      %3636 = vmatprep.subr.bf16.mxu0 0
      %3637 = vmatpush1.bf16.xpose.msra.mxu0 %v3597
      %3638 = vmatprep.subr.bf16.mxu0 0
      %3639 = vmatpush1.bf16.xpose.msra.mxu0 %v3600
      %3640 = vmatprep.subr.bf16.mxu0 0
      %3641 = vmatpush1.bf16.xpose.msra.mxu0 %v3603
      %3642 = vmatprep.subr.bf16.mxu0 0
      %3643 = vmatpush1.bf16.xpose.msra.mxu0 %v3606
      %3644 = vmatprep.subr.bf16.mxu0 0
      %3645 = vmatpush1.bf16.xpose.msra.mxu0 %v3609
      %3646 = vmatprep.subr.bf16.mxu0 0
      %3647 = vmatpush1.bf16.xpose.msra.mxu0 %v3612
      %3648 = vmatprep.subr.bf16.mxu0 0
      %3649 = vmatpush1.bf16.xpose.msra.mxu0 %v3615
      %3650 = vmatprep.subr.bf16.mxu0 0
      %3651 = vmatpush1.bf16.xpose.msra.mxu0 %v3618
      %3652 = vmatprep.mubr.bf16.mxu0 0
      %3653 = vmatmul.mubr.bf16.gmra.mrb[0].mxu0 %v3570
      %v3654 = vpop.f32.mrb[0].mxu0
      %v3655 = vadd.f32 0.0, %v3654
      %v3656 = vpop.f32.mrb[0].mxu0
      %v3657 = vadd.f32 0.0, %v3656
      %v3658 = vpop.f32.mrb[0].mxu0
      %v3659 = vpop.f32.mrb[0].mxu0
      %3660 = vdwg.mxu0
      %v3661 = vadd.f32 %v3517, %v3655
      %v3662 = vadd.f32 %v3518, %v3657
      %3663 = vst [vmem:[#allocation2] sm:$0xff] %v3661
      %3664 = vst [vmem:[#allocation2 + $0x8] sm:$0xff] %v3662
      %v3665 = vld [vmem:[#allocation2] sm:$0xff]
      %v3666 = vld [vmem:[#allocation2 + $0x8] sm:$0xff]
      %v3667 = vmin.f32 %v3665, 20.0
      %v3668 = vmin.f32 %v3666, 20.0
      %v3669 = vmul.f32 %v3667, 1.442695
      %v3670 = vpow.pop %v3669
      %v3671 = vmul.f32 %v3668, 1.442695
      %v3672 = vpow.pop %v3671
      %v3673 = vadd.f32 %v3670, 2.0
      %v3674 = vadd.f32 %v3672, 2.0
      %v3675 = vmul.f32 %v3670, %v3673
      %v3676 = vmul.f32 %v3672, %v3674
      %v3677 = vmul.f32 %v3665, %v3675
      %v3678 = vmul.f32 %v3666, %v3676
      %v3679 = vadd.f32 %v3675, 2.0
      %v3680 = vadd.f32 %v3676, 2.0
      %v3681 = vrcp.pop %v3679
      %v3682 = vrcp.pop %v3680
      %v3683 = vmul.f32 %v3677, %v3681
      %v3684 = vmul.f32 %v3678, %v3682
      %v3685 = vpack.c.bf16 %v3683, %v3683
      %v3686 = vpack.c.bf16 %v3684, %v3684
      %v3689 = vunpack.c.l.b16 %v3685
      %v3690 = vunpack.c.l.b16 %v3686
      %v3691 = vpack.c.b16 %v3690, %v3689
      %3693 = vst [vmem:[%s192] sm:$0xff] %v3691
      %s3694 = smul.u32 2, %s19
      %p3695 = scmp.lt.s32.totalorder %s18, 1
      %s3696 = scalar_select %p3695, %s18, 1
      %p3697 = scmp.lt.s32.totalorder %s3694, 1
      %s3698 = scalar_select %p3697, %s3694, 1
      %s3699 = smul.addr %s3696, 2
      %s3700 = sadd.s32 %s3698, %s3699
      %s3701 = smul.addr %s3700, 4
      %s3702 = scalar_lea.vmem %s3, %s3701
      // Predicated region
      $region33: #{basic_conv2_forward.1} parent=31 // pred_check
        %p3703 = pneg %p114
      $region34: #{basic_conv2_forward.1} parent=31 // pred_check_branch
        %3705 = sbr.rel (%p3703) target = $region36
      $region35: #{basic_conv2_forward.1} parent=31 // pred_region
        %s3706 = smul.u32 2, %s19
      $region36: #{basic_conv2_forward.1} parent=31 // pred_fallthru
        _
    $region32: #{basic_conv2_forward.1} parent=5 // pred_fallthru
      _
    %p3707 = scmp.le.s32.totalorder 2, %s9
    // Predicated region
    $region37: #{basic_conv2_forward.1} parent=5 // pred_check
      %p3708 = pneg %p3707
    $region38: #{basic_conv2_forward.1} parent=5 // pred_check_branch
      %3710 = sbr.rel (%p3708) target = $region40
    $region39: #{basic_conv2_forward.1} parent=5 // pred_region
      %s3711 = ssub.s32 %s9, 2
      // Predicated region
      $region41: #{basic_conv2_forward.1} parent=39 // pred_check
        %p3712 = pneg %p120
      $region42: #{basic_conv2_forward.1} parent=39 // pred_check_branch
        %3714 = sbr.rel (%p3712) target = $region44
      $region43: #{basic_conv2_forward.1} parent=39 // pred_region
        %s3715 = smul.u32 2, %s21
        %p3716 = scmp.lt.s32.totalorder %s20, 1
        %s3717 = scalar_select %p3716, %s20, 1
        %p3718 = scmp.lt.s32.totalorder %s3715, 1
        %s3719 = scalar_select %p3718, %s3715, 1
        %s3720 = smul.addr %s3717, 2
        %s3721 = sadd.s32 %s3719, %s3720
        %s3722 = smul.addr %s3721, 4
        %s3723 = scalar_lea.vmem %s3, %s3722
      $region44: #{basic_conv2_forward.1} parent=39 // pred_fallthru
        _
    $region40: #{basic_conv2_forward.1} parent=5 // pred_fallthru
      _
  $region6: #{basic_conv2_forward.1} parent=0 // loop_footer
    %s13 = sadd.s32 1, %s9
  $region7: #{basic_conv2_forward.1} parent=0 // loop_footer_branch
    %8 = sbr.rel target = $region3
  $region8: #{basic_conv2_forward.1} parent=0 // loop_exit
    _

</llo_original>
